<compile_context>
chip_gen: v7x
topology: tpu7x:2x2x1
jax: 0.10.0
libtpu: 0.0.40
codegen_flags: <defaults>
</compile_context>

<pallas_src>
import jax
import jax.numpy as jnp
from jax import lax
from jax.experimental import pallas as pl
from jax.experimental.pallas import tpu as pltpu

EPS = 1e-5  # PyTorch BatchNorm2d default


def basic_block_forward(x_nchw, params, stride):
    # TODO(synk): identity-shortcut path (stride==1 and Cin==Cout) is not
    # exercised here; this implements the projection shortcut required by the
    # chosen (stride=2, Cin!=Cout) configuration.
    N, Cin, H, W = x_nchw.shape
    Cmid = params["w1"].shape[-1]
    Cout = params["w2"].shape[-1]
    Wo = (W + 2 - 3) // stride + 1          # conv1 stride is (1, stride)
    HWo = H * Wo
    Hp, Wop = H + 2, Wo + 2

    # ----------------- plain-JAX glue (layout only, no heavy math) ---------
    x = jnp.transpose(x_nchw, (0, 2, 3, 1)).astype(jnp.float32)     # NHWC
    xpad = jnp.pad(x, ((0, 0), (1, 1), (1, 1), (0, 0)))
    span = stride * (Wo - 1) + 1
    # (N, 3*Hp, Wo, Cin): row kw*Hp + r holds xpad[:, r, kw::stride, :], so
    # each (kh, kw) tap in-kernel is a contiguous outer-dim slice.
    xcols = jnp.concatenate(
        [xpad[:, :, kw:kw + span:stride, :] for kw in range(3)], axis=1)
    # shortcut: 1x1 conv with stride (1, stride) only sees these columns
    xs = x[:, :, ::stride, :][:, :, :Wo, :].reshape(N, HWo, Cin)

    # weights in bf16 for the MXU (accumulation stays f32)
    w1 = params["w1"].reshape(9, Cin, Cmid).astype(jnp.bfloat16)
    w2 = params["w2"].reshape(9, Cmid, Cout).astype(jnp.bfloat16)
    ws = params["ws"].astype(jnp.bfloat16)

    grid = (N,)
    cparams = pltpu.CompilerParams(
        dimension_semantics=("parallel",),      # shards over 2 TCs on v7x
        vmem_limit_bytes=32 * 1024 * 1024)      # well within v5e/v6e/v7x VMEM

    # ---------------- kernel 1: conv1 + shortcut conv + BN partials --------
    def conv1_shortcut_kernel(xc_ref, xs_ref, w1_ref, ws_ref,
                              y1_ref, sc_ref, st1_ref, sts_ref):
        acc = jnp.zeros((HWo, Cmid), jnp.float32)
        for kh in range(3):
            for kw in range(3):
                base = kw * Hp + kh
                slab = xc_ref[0, base:base + H, :, :].reshape(HWo, Cin)
                acc = acc + jnp.dot(slab.astype(jnp.bfloat16),
                                    w1_ref[kh * 3 + kw],
                                    preferred_element_type=jnp.float32)
        y1_ref[0] = acc
        st1_ref[0, 0:1, :] = jnp.sum(acc, axis=0, keepdims=True)
        st1_ref[0, 1:2, :] = jnp.sum(acc * acc, axis=0, keepdims=True)

        s = jnp.dot(xs_ref[0].astype(jnp.bfloat16), ws_ref[...],
                    preferred_element_type=jnp.float32)
        sc_ref[0] = s
        sts_ref[0, 0:1, :] = jnp.sum(s, axis=0, keepdims=True)
        sts_ref[0, 1:2, :] = jnp.sum(s * s, axis=0, keepdims=True)

    y1c, sc, st1, sts = pl.pallas_call(
        conv1_shortcut_kernel,
        out_shape=(jax.ShapeDtypeStruct((N, HWo, Cmid), jnp.float32),
                   jax.ShapeDtypeStruct((N, HWo, Cout), jnp.float32),
                   jax.ShapeDtypeStruct((N, 2, Cmid), jnp.float32),
                   jax.ShapeDtypeStruct((N, 2, Cout), jnp.float32)),
        grid=grid,
        in_specs=[
            pl.BlockSpec((1, 3 * Hp, Wo, Cin), lambda n: (n, 0, 0, 0)),
            pl.BlockSpec((1, HWo, Cin), lambda n: (n, 0, 0)),
            pl.BlockSpec((9, Cin, Cmid), lambda n: (0, 0, 0)),   # resident
            pl.BlockSpec((Cin, Cout), lambda n: (0, 0)),         # resident
        ],
        out_specs=(
            pl.BlockSpec((1, HWo, Cmid), lambda n: (n, 0, 0)),
            pl.BlockSpec((1, HWo, Cout), lambda n: (n, 0, 0)),
            pl.BlockSpec((1, 2, Cmid), lambda n: (n, 0, 0)),
            pl.BlockSpec((1, 2, Cout), lambda n: (n, 0, 0)),
        ),
        compiler_params=cparams,
        cost_estimate=pl.CostEstimate(
            flops=int(2 * N * HWo * (9 * Cin * Cmid + Cin * Cout)),
            transcendentals=0,
            bytes_accessed=int(4 * (xcols.size + xs.size)
                               + 2 * (w1.size + ws.size)
                               + 4 * N * (HWo + 2) * (Cmid + Cout))),
    )(xcols, xs, w1, ws)

    # fold global batch stats + gamma/beta into per-channel scale/shift
    count = float(N * HWo)

    def bn_coeffs(stats, gamma, beta):
        tot = jnp.sum(stats, axis=0)                   # (2, C)
        mu = tot[0] / count
        var = tot[1] / count - mu * mu                 # biased variance
        scale = gamma * lax.rsqrt(var + EPS)
        shift = beta - mu * scale
        return scale.reshape(1, -1), shift.reshape(1, -1)

    a1, b1 = bn_coeffs(st1, params["g1"], params["be1"])
    a_s, b_s = bn_coeffs(sts, params["gs"], params["bes"])

    # -------- kernel 2: BN1 + ReLU + conv2 (fused, VMEM-resident) ----------
    def conv2_kernel(y1_ref, a1_ref, b1_ref, w2_ref, y2_ref, st2_ref, buf_ref):
        act = jnp.maximum(y1_ref[0] * a1_ref[...] + b1_ref[...], 0.0)
        buf_ref[...] = jnp.zeros_like(buf_ref)               # zero halo
        buf_ref[1:H + 1, 1:Wo + 1, :] = act.reshape(H, Wo, Cmid)
        acc = jnp.zeros((HWo, Cout), jnp.float32)
        for kh in range(3):
            for kw in range(3):
                slab = buf_ref[kh:kh + H, kw:kw + Wo, :].reshape(HWo, Cmid)
                acc = acc + jnp.dot(slab.astype(jnp.bfloat16),
                                    w2_ref[kh * 3 + kw],
                                    preferred_element_type=jnp.float32)
        y2_ref[0] = acc
        st2_ref[0, 0:1, :] = jnp.sum(acc, axis=0, keepdims=True)
        st2_ref[0, 1:2, :] = jnp.sum(acc * acc, axis=0, keepdims=True)

    y2c, st2 = pl.pallas_call(
        conv2_kernel,
        out_shape=(jax.ShapeDtypeStruct((N, HWo, Cout), jnp.float32),
                   jax.ShapeDtypeStruct((N, 2, Cout), jnp.float32)),
        grid=grid,
        in_specs=[
            pl.BlockSpec((1, HWo, Cmid), lambda n: (n, 0, 0)),
            pl.BlockSpec((1, Cmid), lambda n: (0, 0)),
            pl.BlockSpec((1, Cmid), lambda n: (0, 0)),
            pl.BlockSpec((9, Cmid, Cout), lambda n: (0, 0, 0)),  # resident
        ],
        out_specs=(
            pl.BlockSpec((1, HWo, Cout), lambda n: (n, 0, 0)),
            pl.BlockSpec((1, 2, Cout), lambda n: (n, 0, 0)),
        ),
        scratch_shapes=[pltpu.VMEM((Hp, Wop, Cmid), jnp.float32)],
        compiler_params=cparams,
        cost_estimate=pl.CostEstimate(
            flops=int(2 * N * HWo * 9 * Cmid * Cout),
            transcendentals=0,
            bytes_accessed=int(4 * N * HWo * (Cmid + Cout)
                               + 2 * w2.size + 4 * N * 2 * Cout)),
    )(y1c, a1, b1, w2)

    a2, b2 = bn_coeffs(st2, params["g2"], params["be2"])

    # ---------- kernel 3: BN2 + shortcut-BN + residual add + ReLU ----------
    def residual_relu_kernel(y2_ref, sc_ref, a2_ref, b2_ref,
                             as_ref, bs_ref, o_ref):
        r = (y2_ref[0] * a2_ref[...] + b2_ref[...]
             + sc_ref[0] * as_ref[...] + bs_ref[...])
        o_ref[0] = jnp.maximum(r, 0.0)

    out_flat = pl.pallas_call(
        residual_relu_kernel,
        out_shape=jax.ShapeDtypeStruct((N, HWo, Cout), jnp.float32),
        grid=grid,
        in_specs=[
            pl.BlockSpec((1, HWo, Cout), lambda n: (n, 0, 0)),
            pl.BlockSpec((1, HWo, Cout), lambda n: (n, 0, 0)),
            pl.BlockSpec((1, Cout), lambda n: (0, 0)),
            pl.BlockSpec((1, Cout), lambda n: (0, 0)),
            pl.BlockSpec((1, Cout), lambda n: (0, 0)),
            pl.BlockSpec((1, Cout), lambda n: (0, 0)),
        ],
        out_specs=pl.BlockSpec((1, HWo, Cout), lambda n: (n, 0, 0)),
        compiler_params=cparams,
        cost_estimate=pl.CostEstimate(
            flops=int(6 * N * HWo * Cout),
            transcendentals=0,
            bytes_accessed=int(4 * 3 * N * HWo * Cout)),
    )(y2c, sc, a2, b2, a_s, b_s)

    out = out_flat.reshape(N, H, Wo, Cout)
    return jnp.transpose(out, (0, 3, 1, 2))               # NHWC -> NCHW


# ------------------------- reference + setup -------------------------------
def ref_forward(x_nchw, p, stride):
    """Pure-JAX f32 reference (lax conv, with conv biases) for validation."""
    x = jnp.transpose(x_nchw, (0, 2, 3, 1)).astype(jnp.float32)
    dn = ('NHWC', 'HWIO', 'NHWC')

    def bn(y, g, b):
        mu = y.mean(axis=(0, 1, 2), keepdims=True)
        var = ((y - mu) ** 2).mean(axis=(0, 1, 2), keepdims=True)
        return (y - mu) * lax.rsqrt(var + EPS) * g + b

    y = lax.conv_general_dilated(x, p['w1'], (1, stride), ((1, 1), (1, 1)),
                                 dimension_numbers=dn) + p['b1']
    y = jnp.maximum(bn(y, p['g1'], p['be1']), 0.0)
    y = lax.conv_general_dilated(y, p['w2'], (1, 1), ((1, 1), (1, 1)),
                                 dimension_numbers=dn) + p['b2']
    y = bn(y, p['g2'], p['be2'])
    ws = p['ws'].reshape(1, 1, *p['ws'].shape)
    s = lax.conv_general_dilated(x, ws, (1, stride), 'VALID',
                                 dimension_numbers=dn) + p['bs']
    s = bn(s, p['gs'], p['bes'])
    out = jnp.maximum(y + s, 0.0)
    return jnp.transpose(out, (0, 3, 1, 2))


def init_params(key, cin, cout):
    ks = jax.random.split(key, 12)
    nrm = lambda k, shape, s=0.1: s * jax.random.normal(k, shape, jnp.float32)
    return dict(
        w1=nrm(ks[0], (3, 3, cin, cout)),  b1=nrm(ks[1], (cout,)),
        g1=1.0 + nrm(ks[2], (cout,)),      be1=nrm(ks[3], (cout,)),
        w2=nrm(ks[4], (3, 3, cout, cout)), b2=nrm(ks[5], (cout,)),
        g2=1.0 + nrm(ks[6], (cout,)),      be2=nrm(ks[7], (cout,)),
        ws=nrm(ks[8], (cin, cout)),        bs=nrm(ks[9], (cout,)),
        gs=1.0 + nrm(ks[10], (cout,)),     bes=nrm(ks[11], (cout,)),
    )


if __name__ == "__main__":
    key = jax.random.PRNGKey(0)
    kx, kp = jax.random.split(key)

    N, Cin, H, W = 2, 4, 16, 16
    Cout, stride = 8, 2                     # projection shortcut is required
    x = jax.random.normal(kx, (N, Cin, H, W), jnp.float32)   # NCHW like PyTorch
    params = init_params(kp, Cin, Cout)

    fwd = jax.jit(basic_block_forward, static_argnames=("stride",))
    out = jax.block_until_ready(fwd(x, params, stride=stride))

    Wo = (W + 2 - 3) // stride + 1
    assert out.shape == (N, Cout, H, Wo), out.shape

    ref = ref_forward(x, params, stride)
    max_err = float(jnp.max(jnp.abs(out - ref)))
    # bf16 MXU operands vs. an all-f32 reference -> bf16-appropriate tolerance
    assert jnp.allclose(out, ref, rtol=5e-2, atol=5e-2), max_err

    print("KERNEL_OK")
</pallas_src>

<mosaic_0001>
module attributes {stable_mosaic.version = 11 : i64} {
  func.func @conv1_shortcut_kernel(%arg0: i32, %arg1: memref<1x54x8x4xf32, #tpu.memory_space<vmem>>, %arg2: memref<1x128x4xf32, #tpu.memory_space<vmem>>, %arg3: memref<9x4x8xbf16, #tpu.memory_space<vmem>>, %arg4: memref<4x8xbf16, #tpu.memory_space<vmem>>, %arg5: memref<1x128x8xf32, #tpu.memory_space<vmem>>, %arg6: memref<1x128x8xf32, #tpu.memory_space<vmem>>, %arg7: memref<1x2x8xf32, #tpu.memory_space<vmem>>, %arg8: memref<1x2x8xf32, #tpu.memory_space<vmem>>) attributes {dimension_semantics = [#tpu.dimension_semantics<parallel>], iteration_bounds = array<i64: 2>, scalar_prefetch = 0 : i64, scratch_operands = 0 : i64, tpu.core_type = #tpu.core_type<tc>, window_params = [{transform_indices = @transform_0, window_bounds = array<i64: 1, 54, 8, 4>}, {transform_indices = @transform_1, window_bounds = array<i64: 1, 128, 4>}, {pipeline_mode = #tpu.pipeline_mode<synchronous>, transform_indices = @transform_2, window_bounds = array<i64: 9, 4, 8>}, {pipeline_mode = #tpu.pipeline_mode<synchronous>, transform_indices = @transform_3, window_bounds = array<i64: 4, 8>}, {transform_indices = @transform_4, window_bounds = array<i64: 1, 128, 8>}, {transform_indices = @transform_5, window_bounds = array<i64: 1, 128, 8>}, {transform_indices = @transform_6, window_bounds = array<i64: 1, 2, 8>}, {transform_indices = @transform_7, window_bounds = array<i64: 1, 2, 8>}]} {
    %cst = arith.constant 0.000000e+00 : f32
    %0 = vector.broadcast %cst : f32 to vector<128x8xf32>
    %c0 = arith.constant 0 : index
    %c0_0 = arith.constant 0 : index
    %c0_1 = arith.constant 0 : index
    %c0_2 = arith.constant 0 : index
    %1 = vector.load %arg1[%c0, %c0_0, %c0_1, %c0_2] : memref<1x54x8x4xf32, #tpu.memory_space<vmem>>, vector<1x16x8x4xf32>
    %2 = vector.shape_cast %1 : vector<1x16x8x4xf32> to vector<16x8x4xf32>
    %3 = vector.shape_cast %2 : vector<16x8x4xf32> to vector<128x4xf32>
    %4 = arith.truncf %3 : vector<128x4xf32> to vector<128x4xbf16>
    %c0_3 = arith.constant 0 : index
    %c0_4 = arith.constant 0 : index
    %c0_5 = arith.constant 0 : index
    %5 = vector.load %arg3[%c0_3, %c0_4, %c0_5] : memref<9x4x8xbf16, #tpu.memory_space<vmem>>, vector<1x4x8xbf16>
    %6 = vector.shape_cast %5 : vector<1x4x8xbf16> to vector<4x8xbf16>
    %cst_6 = arith.constant dense<0.000000e+00> : vector<128x8xf32>
    %7 = tpu.matmul %4, %6, %cst_6 {dimension_numbers = #tpu.dot_dimension_numbers<[1], [0], [0], [1], [0, 0, 1, 1], [], []>} : vector<128x4xbf16>, vector<4x8xbf16>, vector<128x8xf32> -> vector<128x8xf32>
    %8 = arith.addf %0, %7 : vector<128x8xf32>
    %c0_7 = arith.constant 0 : index
    %c18 = arith.constant 18 : index
    %c0_8 = arith.constant 0 : index
    %c0_9 = arith.constant 0 : index
    %9 = vector.load %arg1[%c0_7, %c18, %c0_8, %c0_9] : memref<1x54x8x4xf32, #tpu.memory_space<vmem>>, vector<1x16x8x4xf32>
    %10 = vector.shape_cast %9 : vector<1x16x8x4xf32> to vector<16x8x4xf32>
    %11 = vector.shape_cast %10 : vector<16x8x4xf32> to vector<128x4xf32>
    %12 = arith.truncf %11 : vector<128x4xf32> to vector<128x4xbf16>
    %c1 = arith.constant 1 : index
    %c0_10 = arith.constant 0 : index
    %c0_11 = arith.constant 0 : index
    %13 = vector.load %arg3[%c1, %c0_10, %c0_11] : memref<9x4x8xbf16, #tpu.memory_space<vmem>>, vector<1x4x8xbf16>
    %14 = vector.shape_cast %13 : vector<1x4x8xbf16> to vector<4x8xbf16>
    %cst_12 = arith.constant dense<0.000000e+00> : vector<128x8xf32>
    %15 = tpu.matmul %12, %14, %cst_12 {dimension_numbers = #tpu.dot_dimension_numbers<[1], [0], [0], [1], [0, 0, 1, 1], [], []>} : vector<128x4xbf16>, vector<4x8xbf16>, vector<128x8xf32> -> vector<128x8xf32>
    %16 = arith.addf %8, %15 : vector<128x8xf32>
    %c0_13 = arith.constant 0 : index
    %c36 = arith.constant 36 : index
    %c0_14 = arith.constant 0 : index
    %c0_15 = arith.constant 0 : index
    %17 = vector.load %arg1[%c0_13, %c36, %c0_14, %c0_15] : memref<1x54x8x4xf32, #tpu.memory_space<vmem>>, vector<1x16x8x4xf32>
    %18 = vector.shape_cast %17 : vector<1x16x8x4xf32> to vector<16x8x4xf32>
    %19 = vector.shape_cast %18 : vector<16x8x4xf32> to vector<128x4xf32>
    %20 = arith.truncf %19 : vector<128x4xf32> to vector<128x4xbf16>
    %c2 = arith.constant 2 : index
    %c0_16 = arith.constant 0 : index
    %c0_17 = arith.constant 0 : index
    %21 = vector.load %arg3[%c2, %c0_16, %c0_17] : memref<9x4x8xbf16, #tpu.memory_space<vmem>>, vector<1x4x8xbf16>
    %22 = vector.shape_cast %21 : vector<1x4x8xbf16> to vector<4x8xbf16>
    %cst_18 = arith.constant dense<0.000000e+00> : vector<128x8xf32>
    %23 = tpu.matmul %20, %22, %cst_18 {dimension_numbers = #tpu.dot_dimension_numbers<[1], [0], [0], [1], [0, 0, 1, 1], [], []>} : vector<128x4xbf16>, vector<4x8xbf16>, vector<128x8xf32> -> vector<128x8xf32>
    %24 = arith.addf %16, %23 : vector<128x8xf32>
    %c0_19 = arith.constant 0 : index
    %c1_20 = arith.constant 1 : index
    %c0_21 = arith.constant 0 : index
    %c0_22 = arith.constant 0 : index
    %25 = vector.load %arg1[%c0_19, %c1_20, %c0_21, %c0_22] : memref<1x54x8x4xf32, #tpu.memory_space<vmem>>, vector<1x16x8x4xf32>
    %26 = vector.shape_cast %25 : vector<1x16x8x4xf32> to vector<16x8x4xf32>
    %27 = vector.shape_cast %26 : vector<16x8x4xf32> to vector<128x4xf32>
    %28 = arith.truncf %27 : vector<128x4xf32> to vector<128x4xbf16>
    %c3 = arith.constant 3 : index
    %c0_23 = arith.constant 0 : index
    %c0_24 = arith.constant 0 : index
    %29 = vector.load %arg3[%c3, %c0_23, %c0_24] : memref<9x4x8xbf16, #tpu.memory_space<vmem>>, vector<1x4x8xbf16>
    %30 = vector.shape_cast %29 : vector<1x4x8xbf16> to vector<4x8xbf16>
    %cst_25 = arith.constant dense<0.000000e+00> : vector<128x8xf32>
    %31 = tpu.matmul %28, %30, %cst_25 {dimension_numbers = #tpu.dot_dimension_numbers<[1], [0], [0], [1], [0, 0, 1, 1], [], []>} : vector<128x4xbf16>, vector<4x8xbf16>, vector<128x8xf32> -> vector<128x8xf32>
    %32 = arith.addf %24, %31 : vector<128x8xf32>
    %c0_26 = arith.constant 0 : index
    %c19 = arith.constant 19 : index
    %c0_27 = arith.constant 0 : index
    %c0_28 = arith.constant 0 : index
    %33 = vector.load %arg1[%c0_26, %c19, %c0_27, %c0_28] : memref<1x54x8x4xf32, #tpu.memory_space<vmem>>, vector<1x16x8x4xf32>
    %34 = vector.shape_cast %33 : vector<1x16x8x4xf32> to vector<16x8x4xf32>
    %35 = vector.shape_cast %34 : vector<16x8x4xf32> to vector<128x4xf32>
    %36 = arith.truncf %35 : vector<128x4xf32> to vector<128x4xbf16>
    %c4 = arith.constant 4 : index
    %c0_29 = arith.constant 0 : index
    %c0_30 = arith.constant 0 : index
    %37 = vector.load %arg3[%c4, %c0_29, %c0_30] : memref<9x4x8xbf16, #tpu.memory_space<vmem>>, vector<1x4x8xbf16>
    %38 = vector.shape_cast %37 : vector<1x4x8xbf16> to vector<4x8xbf16>
    %cst_31 = arith.constant dense<0.000000e+00> : vector<128x8xf32>
    %39 = tpu.matmul %36, %38, %cst_31 {dimension_numbers = #tpu.dot_dimension_numbers<[1], [0], [0], [1], [0, 0, 1, 1], [], []>} : vector<128x4xbf16>, vector<4x8xbf16>, vector<128x8xf32> -> vector<128x8xf32>
    %40 = arith.addf %32, %39 : vector<128x8xf32>
    %c0_32 = arith.constant 0 : index
    %c37 = arith.constant 37 : index
    %c0_33 = arith.constant 0 : index
    %c0_34 = arith.constant 0 : index
    %41 = vector.load %arg1[%c0_32, %c37, %c0_33, %c0_34] : memref<1x54x8x4xf32, #tpu.memory_space<vmem>>, vector<1x16x8x4xf32>
    %42 = vector.shape_cast %41 : vector<1x16x8x4xf32> to vector<16x8x4xf32>
    %43 = vector.shape_cast %42 : vector<16x8x4xf32> to vector<128x4xf32>
    %44 = arith.truncf %43 : vector<128x4xf32> to vector<128x4xbf16>
    %c5 = arith.constant 5 : index
    %c0_35 = arith.constant 0 : index
    %c0_36 = arith.constant 0 : index
    %45 = vector.load %arg3[%c5, %c0_35, %c0_36] : memref<9x4x8xbf16, #tpu.memory_space<vmem>>, vector<1x4x8xbf16>
    %46 = vector.shape_cast %45 : vector<1x4x8xbf16> to vector<4x8xbf16>
    %cst_37 = arith.constant dense<0.000000e+00> : vector<128x8xf32>
    %47 = tpu.matmul %44, %46, %cst_37 {dimension_numbers = #tpu.dot_dimension_numbers<[1], [0], [0], [1], [0, 0, 1, 1], [], []>} : vector<128x4xbf16>, vector<4x8xbf16>, vector<128x8xf32> -> vector<128x8xf32>
    %48 = arith.addf %40, %47 : vector<128x8xf32>
    %c0_38 = arith.constant 0 : index
    %c2_39 = arith.constant 2 : index
    %c0_40 = arith.constant 0 : index
    %c0_41 = arith.constant 0 : index
    %49 = vector.load %arg1[%c0_38, %c2_39, %c0_40, %c0_41] : memref<1x54x8x4xf32, #tpu.memory_space<vmem>>, vector<1x16x8x4xf32>
    %50 = vector.shape_cast %49 : vector<1x16x8x4xf32> to vector<16x8x4xf32>
    %51 = vector.shape_cast %50 : vector<16x8x4xf32> to vector<128x4xf32>
    %52 = arith.truncf %51 : vector<128x4xf32> to vector<128x4xbf16>
    %c6 = arith.constant 6 : index
    %c0_42 = arith.constant 0 : index
    %c0_43 = arith.constant 0 : index
    %53 = vector.load %arg3[%c6, %c0_42, %c0_43] : memref<9x4x8xbf16, #tpu.memory_space<vmem>>, vector<1x4x8xbf16>
    %54 = vector.shape_cast %53 : vector<1x4x8xbf16> to vector<4x8xbf16>
    %cst_44 = arith.constant dense<0.000000e+00> : vector<128x8xf32>
    %55 = tpu.matmul %52, %54, %cst_44 {dimension_numbers = #tpu.dot_dimension_numbers<[1], [0], [0], [1], [0, 0, 1, 1], [], []>} : vector<128x4xbf16>, vector<4x8xbf16>, vector<128x8xf32> -> vector<128x8xf32>
    %56 = arith.addf %48, %55 : vector<128x8xf32>
    %c0_45 = arith.constant 0 : index
    %c20 = arith.constant 20 : index
    %c0_46 = arith.constant 0 : index
    %c0_47 = arith.constant 0 : index
    %57 = vector.load %arg1[%c0_45, %c20, %c0_46, %c0_47] : memref<1x54x8x4xf32, #tpu.memory_space<vmem>>, vector<1x16x8x4xf32>
    %58 = vector.shape_cast %57 : vector<1x16x8x4xf32> to vector<16x8x4xf32>
    %59 = vector.shape_cast %58 : vector<16x8x4xf32> to vector<128x4xf32>
    %60 = arith.truncf %59 : vector<128x4xf32> to vector<128x4xbf16>
    %c7 = arith.constant 7 : index
    %c0_48 = arith.constant 0 : index
    %c0_49 = arith.constant 0 : index
    %61 = vector.load %arg3[%c7, %c0_48, %c0_49] : memref<9x4x8xbf16, #tpu.memory_space<vmem>>, vector<1x4x8xbf16>
    %62 = vector.shape_cast %61 : vector<1x4x8xbf16> to vector<4x8xbf16>
    %cst_50 = arith.constant dense<0.000000e+00> : vector<128x8xf32>
    %63 = tpu.matmul %60, %62, %cst_50 {dimension_numbers = #tpu.dot_dimension_numbers<[1], [0], [0], [1], [0, 0, 1, 1], [], []>} : vector<128x4xbf16>, vector<4x8xbf16>, vector<128x8xf32> -> vector<128x8xf32>
    %64 = arith.addf %56, %63 : vector<128x8xf32>
    %c0_51 = arith.constant 0 : index
    %c38 = arith.constant 38 : index
    %c0_52 = arith.constant 0 : index
    %c0_53 = arith.constant 0 : index
    %65 = vector.load %arg1[%c0_51, %c38, %c0_52, %c0_53] : memref<1x54x8x4xf32, #tpu.memory_space<vmem>>, vector<1x16x8x4xf32>
    %66 = vector.shape_cast %65 : vector<1x16x8x4xf32> to vector<16x8x4xf32>
    %67 = vector.shape_cast %66 : vector<16x8x4xf32> to vector<128x4xf32>
    %68 = arith.truncf %67 : vector<128x4xf32> to vector<128x4xbf16>
    %c8 = arith.constant 8 : index
    %c0_54 = arith.constant 0 : index
    %c0_55 = arith.constant 0 : index
    %69 = vector.load %arg3[%c8, %c0_54, %c0_55] : memref<9x4x8xbf16, #tpu.memory_space<vmem>>, vector<1x4x8xbf16>
    %70 = vector.shape_cast %69 : vector<1x4x8xbf16> to vector<4x8xbf16>
    %cst_56 = arith.constant dense<0.000000e+00> : vector<128x8xf32>
    %71 = tpu.matmul %68, %70, %cst_56 {dimension_numbers = #tpu.dot_dimension_numbers<[1], [0], [0], [1], [0, 0, 1, 1], [], []>} : vector<128x4xbf16>, vector<4x8xbf16>, vector<128x8xf32> -> vector<128x8xf32>
    %72 = arith.addf %64, %71 : vector<128x8xf32>
    %c0_57 = arith.constant 0 : index
    %c0_58 = arith.constant 0 : index
    %c0_59 = arith.constant 0 : index
    %73 = vector.load %arg5[%c0_57, %c0_58, %c0_59] : memref<1x128x8xf32, #tpu.memory_space<vmem>>, vector<1x128x8xf32>
    %74 = vector.shape_cast %73 : vector<1x128x8xf32> to vector<128x8xf32>
    %75 = vector.shape_cast %72 : vector<128x8xf32> to vector<1x128x8xf32>
    tpu.vector_store %arg5[%c0_57, %c0_58, %c0_59], %75 {strides = array<i32>} : memref<1x128x8xf32, #tpu.memory_space<vmem>>, vector<1x128x8xf32>,
    %cst_60 = arith.constant dense<0.000000e+00> : vector<8xf32>
    %76 = vector.multi_reduction <add>, %72, %cst_60 [0] : vector<128x8xf32> to vector<8xf32>
    %77 = vector.shape_cast %76 : vector<8xf32> to vector<1x8xf32>
    %c0_61 = arith.constant 0 : index
    %c0_62 = arith.constant 0 : index
    %c0_63 = arith.constant 0 : index
    %78 = vector.load %arg7[%c0_61, %c0_62, %c0_63] : memref<1x2x8xf32, #tpu.memory_space<vmem>>, vector<1x1x8xf32>
    %79 = vector.shape_cast %78 : vector<1x1x8xf32> to vector<1x8xf32>
    %80 = vector.shape_cast %77 : vector<1x8xf32> to vector<1x1x8xf32>
    tpu.vector_store %arg7[%c0_61, %c0_62, %c0_63], %80 {strides = array<i32>} : memref<1x2x8xf32, #tpu.memory_space<vmem>>, vector<1x1x8xf32>,
    %81 = arith.mulf %72, %72 : vector<128x8xf32>
    %cst_64 = arith.constant dense<0.000000e+00> : vector<8xf32>
    %82 = vector.multi_reduction <add>, %81, %cst_64 [0] : vector<128x8xf32> to vector<8xf32>
    %83 = vector.shape_cast %82 : vector<8xf32> to vector<1x8xf32>
    %c0_65 = arith.constant 0 : index
    %c1_66 = arith.constant 1 : index
    %c0_67 = arith.constant 0 : index
    %84 = vector.load %arg7[%c0_65, %c1_66, %c0_67] : memref<1x2x8xf32, #tpu.memory_space<vmem>>, vector<1x1x8xf32>
    %85 = vector.shape_cast %84 : vector<1x1x8xf32> to vector<1x8xf32>
    %86 = vector.shape_cast %83 : vector<1x8xf32> to vector<1x1x8xf32>
    tpu.vector_store %arg7[%c0_65, %c1_66, %c0_67], %86 {strides = array<i32>} : memref<1x2x8xf32, #tpu.memory_space<vmem>>, vector<1x1x8xf32>,
    %c0_68 = arith.constant 0 : index
    %c0_69 = arith.constant 0 : index
    %c0_70 = arith.constant 0 : index
    %87 = vector.load %arg2[%c0_68, %c0_69, %c0_70] : memref<1x128x4xf32, #tpu.memory_space<vmem>>, vector<1x128x4xf32>
    %88 = vector.shape_cast %87 : vector<1x128x4xf32> to vector<128x4xf32>
    %89 = arith.truncf %88 : vector<128x4xf32> to vector<128x4xbf16>
    %c0_71 = arith.constant 0 : index
    %c0_72 = arith.constant 0 : index
    %90 = vector.load %arg4[%c0_71, %c0_72] : memref<4x8xbf16, #tpu.memory_space<vmem>>, vector<4x8xbf16>
    %cst_73 = arith.constant dense<0.000000e+00> : vector<128x8xf32>
    %91 = tpu.matmul %89, %90, %cst_73 {dimension_numbers = #tpu.dot_dimension_numbers<[1], [0], [0], [1], [0, 0, 1, 1], [], []>} : vector<128x4xbf16>, vector<4x8xbf16>, vector<128x8xf32> -> vector<128x8xf32>
    %c0_74 = arith.constant 0 : index
    %c0_75 = arith.constant 0 : index
    %c0_76 = arith.constant 0 : index
    %92 = vector.load %arg6[%c0_74, %c0_75, %c0_76] : memref<1x128x8xf32, #tpu.memory_space<vmem>>, vector<1x128x8xf32>
    %93 = vector.shape_cast %92 : vector<1x128x8xf32> to vector<128x8xf32>
    %94 = vector.shape_cast %91 : vector<128x8xf32> to vector<1x128x8xf32>
    tpu.vector_store %arg6[%c0_74, %c0_75, %c0_76], %94 {strides = array<i32>} : memref<1x128x8xf32, #tpu.memory_space<vmem>>, vector<1x128x8xf32>,
    %cst_77 = arith.constant dense<0.000000e+00> : vector<8xf32>
    %95 = vector.multi_reduction <add>, %91, %cst_77 [0] : vector<128x8xf32> to vector<8xf32>
    %96 = vector.shape_cast %95 : vector<8xf32> to vector<1x8xf32>
    %c0_78 = arith.constant 0 : index
    %c0_79 = arith.constant 0 : index
    %c0_80 = arith.constant 0 : index
    %97 = vector.load %arg8[%c0_78, %c0_79, %c0_80] : memref<1x2x8xf32, #tpu.memory_space<vmem>>, vector<1x1x8xf32>
    %98 = vector.shape_cast %97 : vector<1x1x8xf32> to vector<1x8xf32>
    %99 = vector.shape_cast %96 : vector<1x8xf32> to vector<1x1x8xf32>
    tpu.vector_store %arg8[%c0_78, %c0_79, %c0_80], %99 {strides = array<i32>} : memref<1x2x8xf32, #tpu.memory_space<vmem>>, vector<1x1x8xf32>,
    %100 = arith.mulf %91, %91 : vector<128x8xf32>
    %cst_81 = arith.constant dense<0.000000e+00> : vector<8xf32>
    %101 = vector.multi_reduction <add>, %100, %cst_81 [0] : vector<128x8xf32> to vector<8xf32>
    %102 = vector.shape_cast %101 : vector<8xf32> to vector<1x8xf32>
    %c0_82 = arith.constant 0 : index
    %c1_83 = arith.constant 1 : index
    %c0_84 = arith.constant 0 : index
    %103 = vector.load %arg8[%c0_82, %c1_83, %c0_84] : memref<1x2x8xf32, #tpu.memory_space<vmem>>, vector<1x1x8xf32>
    %104 = vector.shape_cast %103 : vector<1x1x8xf32> to vector<1x8xf32>
    %105 = vector.shape_cast %102 : vector<1x8xf32> to vector<1x1x8xf32>
    tpu.vector_store %arg8[%c0_82, %c1_83, %c0_84], %105 {strides = array<i32>} : memref<1x2x8xf32, #tpu.memory_space<vmem>>, vector<1x1x8xf32>,
    return
  }
  func.func @transform_0(%arg0: i32) -> (i32, i32, i32, i32) {
    %c0_i32 = arith.constant 0 : i32
    %c0_i32_0 = arith.constant 0 : i32
    %c0_i32_1 = arith.constant 0 : i32
    %c0_i32_2 = arith.constant 0 : i32
    return %arg0, %c0_i32, %c0_i32_0, %c0_i32_1 : i32, i32, i32, i32
  }
  func.func @transform_1(%arg0: i32) -> (i32, i32, i32) {
    %c0_i32 = arith.constant 0 : i32
    %c0_i32_0 = arith.constant 0 : i32
    %c0_i32_1 = arith.constant 0 : i32
    return %arg0, %c0_i32, %c0_i32_0 : i32, i32, i32
  }
  func.func @transform_2(%arg0: i32) -> (i32, i32, i32) {
    %c0_i32 = arith.constant 0 : i32
    %c0_i32_0 = arith.constant 0 : i32
    %c0_i32_1 = arith.constant 0 : i32
    %c0_i32_2 = arith.constant 0 : i32
    return %c0_i32, %c0_i32_0, %c0_i32_1 : i32, i32, i32
  }
  func.func @transform_3(%arg0: i32) -> (i32, i32) {
    %c0_i32 = arith.constant 0 : i32
    %c0_i32_0 = arith.constant 0 : i32
    %c0_i32_1 = arith.constant 0 : i32
    return %c0_i32, %c0_i32_0 : i32, i32
  }
  func.func @transform_4(%arg0: i32) -> (i32, i32, i32) {
    %c0_i32 = arith.constant 0 : i32
    %c0_i32_0 = arith.constant 0 : i32
    %c0_i32_1 = arith.constant 0 : i32
    return %arg0, %c0_i32, %c0_i32_0 : i32, i32, i32
  }
  func.func @transform_5(%arg0: i32) -> (i32, i32, i32) {
    %c0_i32 = arith.constant 0 : i32
    %c0_i32_0 = arith.constant 0 : i32
    %c0_i32_1 = arith.constant 0 : i32
    return %arg0, %c0_i32, %c0_i32_0 : i32, i32, i32
  }
  func.func @transform_6(%arg0: i32) -> (i32, i32, i32) {
    %c0_i32 = arith.constant 0 : i32
    %c0_i32_0 = arith.constant 0 : i32
    %c0_i32_1 = arith.constant 0 : i32
    return %arg0, %c0_i32, %c0_i32_0 : i32, i32, i32
  }
  func.func @transform_7(%arg0: i32) -> (i32, i32, i32) {
    %c0_i32 = arith.constant 0 : i32
    %c0_i32_0 = arith.constant 0 : i32
    %c0_i32_1 = arith.constant 0 : i32
    return %arg0, %c0_i32, %c0_i32_0 : i32, i32, i32
  }
}

module attributes {stable_mosaic.version = 11 : i64} {
  func.func @conv2_kernel(%arg0: i32, %arg1: memref<1x128x8xf32, #tpu.memory_space<vmem>>, %arg2: memref<1x8xf32, #tpu.memory_space<vmem>>, %arg3: memref<1x8xf32, #tpu.memory_space<vmem>>, %arg4: memref<9x8x8xbf16, #tpu.memory_space<vmem>>, %arg5: memref<1x128x8xf32, #tpu.memory_space<vmem>>, %arg6: memref<1x2x8xf32, #tpu.memory_space<vmem>>, %arg7: memref<18x10x8xf32, #tpu.memory_space<vmem>>) attributes {dimension_semantics = [#tpu.dimension_semantics<parallel>], iteration_bounds = array<i64: 2>, scalar_prefetch = 0 : i64, scratch_operands = 1 : i64, tpu.core_type = #tpu.core_type<tc>, window_params = [{transform_indices = @transform_0, window_bounds = array<i64: 1, 128, 8>}, {pipeline_mode = #tpu.pipeline_mode<synchronous>, transform_indices = @transform_1, window_bounds = array<i64: 1, 8>}, {pipeline_mode = #tpu.pipeline_mode<synchronous>, transform_indices = @transform_2, window_bounds = array<i64: 1, 8>}, {pipeline_mode = #tpu.pipeline_mode<synchronous>, transform_indices = @transform_3, window_bounds = array<i64: 9, 8, 8>}, {transform_indices = @transform_4, window_bounds = array<i64: 1, 128, 8>}, {transform_indices = @transform_5, window_bounds = array<i64: 1, 2, 8>}]} {
    %c0 = arith.constant 0 : index
    %c0_0 = arith.constant 0 : index
    %c0_1 = arith.constant 0 : index
    %0 = vector.load %arg1[%c0, %c0_0, %c0_1] : memref<1x128x8xf32, #tpu.memory_space<vmem>>, vector<1x128x8xf32>
    %1 = vector.shape_cast %0 : vector<1x128x8xf32> to vector<128x8xf32>
    %c0_2 = arith.constant 0 : index
    %c0_3 = arith.constant 0 : index
    %2 = vector.load %arg2[%c0_2, %c0_3] : memref<1x8xf32, #tpu.memory_space<vmem>>, vector<1x8xf32>
    %3 = vector.broadcast %2 : vector<1x8xf32> to vector<128x8xf32>
    %4 = arith.mulf %1, %3 : vector<128x8xf32>
    %c0_4 = arith.constant 0 : index
    %c0_5 = arith.constant 0 : index
    %5 = vector.load %arg3[%c0_4, %c0_5] : memref<1x8xf32, #tpu.memory_space<vmem>>, vector<1x8xf32>
    %6 = vector.broadcast %5 : vector<1x8xf32> to vector<128x8xf32>
    %7 = arith.addf %4, %6 : vector<128x8xf32>
    %cst = arith.constant 0.000000e+00 : f32
    %8 = vector.broadcast %cst : f32 to vector<128x8xf32>
    %9 = arith.maximumf %7, %8 : vector<128x8xf32>
    %cst_6 = arith.constant 0.000000e+00 : f32
    %10 = vector.broadcast %cst_6 : f32 to vector<18x10x8xf32>
    %c0_7 = arith.constant 0 : index
    %c0_8 = arith.constant 0 : index
    %c0_9 = arith.constant 0 : index
    %11 = vector.load %arg7[%c0_7, %c0_8, %c0_9] : memref<18x10x8xf32, #tpu.memory_space<vmem>>, vector<18x10x8xf32>
    tpu.vector_store %arg7[%c0_7, %c0_8, %c0_9], %10 {strides = array<i32>} : memref<18x10x8xf32, #tpu.memory_space<vmem>>, vector<18x10x8xf32>,
    %12 = vector.shape_cast %9 : vector<128x8xf32> to vector<16x8x8xf32>
    %c1 = arith.constant 1 : index
    %c1_10 = arith.constant 1 : index
    %c0_11 = arith.constant 0 : index
    %13 = vector.load %arg7[%c1, %c1_10, %c0_11] : memref<18x10x8xf32, #tpu.memory_space<vmem>>, vector<16x8x8xf32>
    tpu.vector_store %arg7[%c1, %c1_10, %c0_11], %12 {strides = array<i32>} : memref<18x10x8xf32, #tpu.memory_space<vmem>>, vector<16x8x8xf32>,
    %cst_12 = arith.constant 0.000000e+00 : f32
    %14 = vector.broadcast %cst_12 : f32 to vector<128x8xf32>
    %c0_13 = arith.constant 0 : index
    %c0_14 = arith.constant 0 : index
    %c0_15 = arith.constant 0 : index
    %15 = vector.load %arg7[%c0_13, %c0_14, %c0_15] : memref<18x10x8xf32, #tpu.memory_space<vmem>>, vector<16x8x8xf32>
    %16 = vector.shape_cast %15 : vector<16x8x8xf32> to vector<128x8xf32>
    %17 = arith.truncf %16 : vector<128x8xf32> to vector<128x8xbf16>
    %c0_16 = arith.constant 0 : index
    %c0_17 = arith.constant 0 : index
    %c0_18 = arith.constant 0 : index
    %18 = vector.load %arg4[%c0_16, %c0_17, %c0_18] : memref<9x8x8xbf16, #tpu.memory_space<vmem>>, vector<1x8x8xbf16>
    %19 = vector.shape_cast %18 : vector<1x8x8xbf16> to vector<8x8xbf16>
    %cst_19 = arith.constant dense<0.000000e+00> : vector<128x8xf32>
    %20 = tpu.matmul %17, %19, %cst_19 {dimension_numbers = #tpu.dot_dimension_numbers<[1], [0], [0], [1], [0, 0, 1, 1], [], []>} : vector<128x8xbf16>, vector<8x8xbf16>, vector<128x8xf32> -> vector<128x8xf32>
    %21 = arith.addf %14, %20 : vector<128x8xf32>
    %c0_20 = arith.constant 0 : index
    %c1_21 = arith.constant 1 : index
    %c0_22 = arith.constant 0 : index
    %22 = vector.load %arg7[%c0_20, %c1_21, %c0_22] : memref<18x10x8xf32, #tpu.memory_space<vmem>>, vector<16x8x8xf32>
    %23 = vector.shape_cast %22 : vector<16x8x8xf32> to vector<128x8xf32>
    %24 = arith.truncf %23 : vector<128x8xf32> to vector<128x8xbf16>
    %c1_23 = arith.constant 1 : index
    %c0_24 = arith.constant 0 : index
    %c0_25 = arith.constant 0 : index
    %25 = vector.load %arg4[%c1_23, %c0_24, %c0_25] : memref<9x8x8xbf16, #tpu.memory_space<vmem>>, vector<1x8x8xbf16>
    %26 = vector.shape_cast %25 : vector<1x8x8xbf16> to vector<8x8xbf16>
    %cst_26 = arith.constant dense<0.000000e+00> : vector<128x8xf32>
    %27 = tpu.matmul %24, %26, %cst_26 {dimension_numbers = #tpu.dot_dimension_numbers<[1], [0], [0], [1], [0, 0, 1, 1], [], []>} : vector<128x8xbf16>, vector<8x8xbf16>, vector<128x8xf32> -> vector<128x8xf32>
    %28 = arith.addf %21, %27 : vector<128x8xf32>
    %c0_27 = arith.constant 0 : index
    %c2 = arith.constant 2 : index
    %c0_28 = arith.constant 0 : index
    %29 = vector.load %arg7[%c0_27, %c2, %c0_28] : memref<18x10x8xf32, #tpu.memory_space<vmem>>, vector<16x8x8xf32>
    %30 = vector.shape_cast %29 : vector<16x8x8xf32> to vector<128x8xf32>
    %31 = arith.truncf %30 : vector<128x8xf32> to vector<128x8xbf16>
    %c2_29 = arith.constant 2 : index
    %c0_30 = arith.constant 0 : index
    %c0_31 = arith.constant 0 : index
    %32 = vector.load %arg4[%c2_29, %c0_30, %c0_31] : memref<9x8x8xbf16, #tpu.memory_space<vmem>>, vector<1x8x8xbf16>
    %33 = vector.shape_cast %32 : vector<1x8x8xbf16> to vector<8x8xbf16>
    %cst_32 = arith.constant dense<0.000000e+00> : vector<128x8xf32>
    %34 = tpu.matmul %31, %33, %cst_32 {dimension_numbers = #tpu.dot_dimension_numbers<[1], [0], [0], [1], [0, 0, 1, 1], [], []>} : vector<128x8xbf16>, vector<8x8xbf16>, vector<128x8xf32> -> vector<128x8xf32>
    %35 = arith.addf %28, %34 : vector<128x8xf32>
    %c1_33 = arith.constant 1 : index
    %c0_34 = arith.constant 0 : index
    %c0_35 = arith.constant 0 : index
    %36 = vector.load %arg7[%c1_33, %c0_34, %c0_35] : memref<18x10x8xf32, #tpu.memory_space<vmem>>, vector<16x8x8xf32>
    %37 = vector.shape_cast %36 : vector<16x8x8xf32> to vector<128x8xf32>
    %38 = arith.truncf %37 : vector<128x8xf32> to vector<128x8xbf16>
    %c3 = arith.constant 3 : index
    %c0_36 = arith.constant 0 : index
    %c0_37 = arith.constant 0 : index
    %39 = vector.load %arg4[%c3, %c0_36, %c0_37] : memref<9x8x8xbf16, #tpu.memory_space<vmem>>, vector<1x8x8xbf16>
    %40 = vector.shape_cast %39 : vector<1x8x8xbf16> to vector<8x8xbf16>
    %cst_38 = arith.constant dense<0.000000e+00> : vector<128x8xf32>
    %41 = tpu.matmul %38, %40, %cst_38 {dimension_numbers = #tpu.dot_dimension_numbers<[1], [0], [0], [1], [0, 0, 1, 1], [], []>} : vector<128x8xbf16>, vector<8x8xbf16>, vector<128x8xf32> -> vector<128x8xf32>
    %42 = arith.addf %35, %41 : vector<128x8xf32>
    %c1_39 = arith.constant 1 : index
    %c1_40 = arith.constant 1 : index
    %c0_41 = arith.constant 0 : index
    %43 = vector.load %arg7[%c1_39, %c1_40, %c0_41] : memref<18x10x8xf32, #tpu.memory_space<vmem>>, vector<16x8x8xf32>
    %44 = vector.shape_cast %43 : vector<16x8x8xf32> to vector<128x8xf32>
    %45 = arith.truncf %44 : vector<128x8xf32> to vector<128x8xbf16>
    %c4 = arith.constant 4 : index
    %c0_42 = arith.constant 0 : index
    %c0_43 = arith.constant 0 : index
    %46 = vector.load %arg4[%c4, %c0_42, %c0_43] : memref<9x8x8xbf16, #tpu.memory_space<vmem>>, vector<1x8x8xbf16>
    %47 = vector.shape_cast %46 : vector<1x8x8xbf16> to vector<8x8xbf16>
    %cst_44 = arith.constant dense<0.000000e+00> : vector<128x8xf32>
    %48 = tpu.matmul %45, %47, %cst_44 {dimension_numbers = #tpu.dot_dimension_numbers<[1], [0], [0], [1], [0, 0, 1, 1], [], []>} : vector<128x8xbf16>, vector<8x8xbf16>, vector<128x8xf32> -> vector<128x8xf32>
    %49 = arith.addf %42, %48 : vector<128x8xf32>
    %c1_45 = arith.constant 1 : index
    %c2_46 = arith.constant 2 : index
    %c0_47 = arith.constant 0 : index
    %50 = vector.load %arg7[%c1_45, %c2_46, %c0_47] : memref<18x10x8xf32, #tpu.memory_space<vmem>>, vector<16x8x8xf32>
    %51 = vector.shape_cast %50 : vector<16x8x8xf32> to vector<128x8xf32>
    %52 = arith.truncf %51 : vector<128x8xf32> to vector<128x8xbf16>
    %c5 = arith.constant 5 : index
    %c0_48 = arith.constant 0 : index
    %c0_49 = arith.constant 0 : index
    %53 = vector.load %arg4[%c5, %c0_48, %c0_49] : memref<9x8x8xbf16, #tpu.memory_space<vmem>>, vector<1x8x8xbf16>
    %54 = vector.shape_cast %53 : vector<1x8x8xbf16> to vector<8x8xbf16>
    %cst_50 = arith.constant dense<0.000000e+00> : vector<128x8xf32>
    %55 = tpu.matmul %52, %54, %cst_50 {dimension_numbers = #tpu.dot_dimension_numbers<[1], [0], [0], [1], [0, 0, 1, 1], [], []>} : vector<128x8xbf16>, vector<8x8xbf16>, vector<128x8xf32> -> vector<128x8xf32>
    %56 = arith.addf %49, %55 : vector<128x8xf32>
    %c2_51 = arith.constant 2 : index
    %c0_52 = arith.constant 0 : index
    %c0_53 = arith.constant 0 : index
    %57 = vector.load %arg7[%c2_51, %c0_52, %c0_53] : memref<18x10x8xf32, #tpu.memory_space<vmem>>, vector<16x8x8xf32>
    %58 = vector.shape_cast %57 : vector<16x8x8xf32> to vector<128x8xf32>
    %59 = arith.truncf %58 : vector<128x8xf32> to vector<128x8xbf16>
    %c6 = arith.constant 6 : index
    %c0_54 = arith.constant 0 : index
    %c0_55 = arith.constant 0 : index
    %60 = vector.load %arg4[%c6, %c0_54, %c0_55] : memref<9x8x8xbf16, #tpu.memory_space<vmem>>, vector<1x8x8xbf16>
    %61 = vector.shape_cast %60 : vector<1x8x8xbf16> to vector<8x8xbf16>
    %cst_56 = arith.constant dense<0.000000e+00> : vector<128x8xf32>
    %62 = tpu.matmul %59, %61, %cst_56 {dimension_numbers = #tpu.dot_dimension_numbers<[1], [0], [0], [1], [0, 0, 1, 1], [], []>} : vector<128x8xbf16>, vector<8x8xbf16>, vector<128x8xf32> -> vector<128x8xf32>
    %63 = arith.addf %56, %62 : vector<128x8xf32>
    %c2_57 = arith.constant 2 : index
    %c1_58 = arith.constant 1 : index
    %c0_59 = arith.constant 0 : index
    %64 = vector.load %arg7[%c2_57, %c1_58, %c0_59] : memref<18x10x8xf32, #tpu.memory_space<vmem>>, vector<16x8x8xf32>
    %65 = vector.shape_cast %64 : vector<16x8x8xf32> to vector<128x8xf32>
    %66 = arith.truncf %65 : vector<128x8xf32> to vector<128x8xbf16>
    %c7 = arith.constant 7 : index
    %c0_60 = arith.constant 0 : index
    %c0_61 = arith.constant 0 : index
    %67 = vector.load %arg4[%c7, %c0_60, %c0_61] : memref<9x8x8xbf16, #tpu.memory_space<vmem>>, vector<1x8x8xbf16>
    %68 = vector.shape_cast %67 : vector<1x8x8xbf16> to vector<8x8xbf16>
    %cst_62 = arith.constant dense<0.000000e+00> : vector<128x8xf32>
    %69 = tpu.matmul %66, %68, %cst_62 {dimension_numbers = #tpu.dot_dimension_numbers<[1], [0], [0], [1], [0, 0, 1, 1], [], []>} : vector<128x8xbf16>, vector<8x8xbf16>, vector<128x8xf32> -> vector<128x8xf32>
    %70 = arith.addf %63, %69 : vector<128x8xf32>
    %c2_63 = arith.constant 2 : index
    %c2_64 = arith.constant 2 : index
    %c0_65 = arith.constant 0 : index
    %71 = vector.load %arg7[%c2_63, %c2_64, %c0_65] : memref<18x10x8xf32, #tpu.memory_space<vmem>>, vector<16x8x8xf32>
    %72 = vector.shape_cast %71 : vector<16x8x8xf32> to vector<128x8xf32>
    %73 = arith.truncf %72 : vector<128x8xf32> to vector<128x8xbf16>
    %c8 = arith.constant 8 : index
    %c0_66 = arith.constant 0 : index
    %c0_67 = arith.constant 0 : index
    %74 = vector.load %arg4[%c8, %c0_66, %c0_67] : memref<9x8x8xbf16, #tpu.memory_space<vmem>>, vector<1x8x8xbf16>
    %75 = vector.shape_cast %74 : vector<1x8x8xbf16> to vector<8x8xbf16>
    %cst_68 = arith.constant dense<0.000000e+00> : vector<128x8xf32>
    %76 = tpu.matmul %73, %75, %cst_68 {dimension_numbers = #tpu.dot_dimension_numbers<[1], [0], [0], [1], [0, 0, 1, 1], [], []>} : vector<128x8xbf16>, vector<8x8xbf16>, vector<128x8xf32> -> vector<128x8xf32>
    %77 = arith.addf %70, %76 : vector<128x8xf32>
    %c0_69 = arith.constant 0 : index
    %c0_70 = arith.constant 0 : index
    %c0_71 = arith.constant 0 : index
    %78 = vector.load %arg5[%c0_69, %c0_70, %c0_71] : memref<1x128x8xf32, #tpu.memory_space<vmem>>, vector<1x128x8xf32>
    %79 = vector.shape_cast %78 : vector<1x128x8xf32> to vector<128x8xf32>
    %80 = vector.shape_cast %77 : vector<128x8xf32> to vector<1x128x8xf32>
    tpu.vector_store %arg5[%c0_69, %c0_70, %c0_71], %80 {strides = array<i32>} : memref<1x128x8xf32, #tpu.memory_space<vmem>>, vector<1x128x8xf32>,
    %cst_72 = arith.constant dense<0.000000e+00> : vector<8xf32>
    %81 = vector.multi_reduction <add>, %77, %cst_72 [0] : vector<128x8xf32> to vector<8xf32>
    %82 = vector.shape_cast %81 : vector<8xf32> to vector<1x8xf32>
    %c0_73 = arith.constant 0 : index
    %c0_74 = arith.constant 0 : index
    %c0_75 = arith.constant 0 : index
    %83 = vector.load %arg6[%c0_73, %c0_74, %c0_75] : memref<1x2x8xf32, #tpu.memory_space<vmem>>, vector<1x1x8xf32>
    %84 = vector.shape_cast %83 : vector<1x1x8xf32> to vector<1x8xf32>
    %85 = vector.shape_cast %82 : vector<1x8xf32> to vector<1x1x8xf32>
    tpu.vector_store %arg6[%c0_73, %c0_74, %c0_75], %85 {strides = array<i32>} : memref<1x2x8xf32, #tpu.memory_space<vmem>>, vector<1x1x8xf32>,
    %86 = arith.mulf %77, %77 : vector<128x8xf32>
    %cst_76 = arith.constant dense<0.000000e+00> : vector<8xf32>
    %87 = vector.multi_reduction <add>, %86, %cst_76 [0] : vector<128x8xf32> to vector<8xf32>
    %88 = vector.shape_cast %87 : vector<8xf32> to vector<1x8xf32>
    %c0_77 = arith.constant 0 : index
    %c1_78 = arith.constant 1 : index
    %c0_79 = arith.constant 0 : index
    %89 = vector.load %arg6[%c0_77, %c1_78, %c0_79] : memref<1x2x8xf32, #tpu.memory_space<vmem>>, vector<1x1x8xf32>
    %90 = vector.shape_cast %89 : vector<1x1x8xf32> to vector<1x8xf32>
    %91 = vector.shape_cast %88 : vector<1x8xf32> to vector<1x1x8xf32>
    tpu.vector_store %arg6[%c0_77, %c1_78, %c0_79], %91 {strides = array<i32>} : memref<1x2x8xf32, #tpu.memory_space<vmem>>, vector<1x1x8xf32>,
    return
  }
  func.func @transform_0(%arg0: i32) -> (i32, i32, i32) {
    %c0_i32 = arith.constant 0 : i32
    %c0_i32_0 = arith.constant 0 : i32
    %c0_i32_1 = arith.constant 0 : i32
    return %arg0, %c0_i32, %c0_i32_0 : i32, i32, i32
  }
  func.func @transform_1(%arg0: i32) -> (i32, i32) {
    %c0_i32 = arith.constant 0 : i32
    %c0_i32_0 = arith.constant 0 : i32
    %c0_i32_1 = arith.constant 0 : i32
    return %c0_i32, %c0_i32_0 : i32, i32
  }
  func.func @transform_2(%arg0: i32) -> (i32, i32) {
    %c0_i32 = arith.constant 0 : i32
    %c0_i32_0 = arith.constant 0 : i32
    %c0_i32_1 = arith.constant 0 : i32
    return %c0_i32, %c0_i32_0 : i32, i32
  }
  func.func @transform_3(%arg0: i32) -> (i32, i32, i32) {
    %c0_i32 = arith.constant 0 : i32
    %c0_i32_0 = arith.constant 0 : i32
    %c0_i32_1 = arith.constant 0 : i32
    %c0_i32_2 = arith.constant 0 : i32
    return %c0_i32, %c0_i32_0, %c0_i32_1 : i32, i32, i32
  }
  func.func @transform_4(%arg0: i32) -> (i32, i32, i32) {
    %c0_i32 = arith.constant 0 : i32
    %c0_i32_0 = arith.constant 0 : i32
    %c0_i32_1 = arith.constant 0 : i32
    return %arg0, %c0_i32, %c0_i32_0 : i32, i32, i32
  }
  func.func @transform_5(%arg0: i32) -> (i32, i32, i32) {
    %c0_i32 = arith.constant 0 : i32
    %c0_i32_0 = arith.constant 0 : i32
    %c0_i32_1 = arith.constant 0 : i32
    return %arg0, %c0_i32, %c0_i32_0 : i32, i32, i32
  }
}

module attributes {stable_mosaic.version = 11 : i64} {
  func.func @residual_relu_kernel(%arg0: i32, %arg1: memref<1x128x8xf32, #tpu.memory_space<vmem>>, %arg2: memref<1x128x8xf32, #tpu.memory_space<vmem>>, %arg3: memref<1x8xf32, #tpu.memory_space<vmem>>, %arg4: memref<1x8xf32, #tpu.memory_space<vmem>>, %arg5: memref<1x8xf32, #tpu.memory_space<vmem>>, %arg6: memref<1x8xf32, #tpu.memory_space<vmem>>, %arg7: memref<1x128x8xf32, #tpu.memory_space<vmem>>) attributes {dimension_semantics = [#tpu.dimension_semantics<parallel>], iteration_bounds = array<i64: 2>, scalar_prefetch = 0 : i64, scratch_operands = 0 : i64, tpu.core_type = #tpu.core_type<tc>, window_params = [{transform_indices = @transform_0, window_bounds = array<i64: 1, 128, 8>}, {transform_indices = @transform_1, window_bounds = array<i64: 1, 128, 8>}, {pipeline_mode = #tpu.pipeline_mode<synchronous>, transform_indices = @transform_2, window_bounds = array<i64: 1, 8>}, {pipeline_mode = #tpu.pipeline_mode<synchronous>, transform_indices = @transform_3, window_bounds = array<i64: 1, 8>}, {pipeline_mode = #tpu.pipeline_mode<synchronous>, transform_indices = @transform_4, window_bounds = array<i64: 1, 8>}, {pipeline_mode = #tpu.pipeline_mode<synchronous>, transform_indices = @transform_5, window_bounds = array<i64: 1, 8>}, {transform_indices = @transform_6, window_bounds = array<i64: 1, 128, 8>}]} {
    %c0 = arith.constant 0 : index
    %c0_0 = arith.constant 0 : index
    %c0_1 = arith.constant 0 : index
    %0 = vector.load %arg1[%c0, %c0_0, %c0_1] : memref<1x128x8xf32, #tpu.memory_space<vmem>>, vector<1x128x8xf32>
    %1 = vector.shape_cast %0 : vector<1x128x8xf32> to vector<128x8xf32>
    %c0_2 = arith.constant 0 : index
    %c0_3 = arith.constant 0 : index
    %2 = vector.load %arg3[%c0_2, %c0_3] : memref<1x8xf32, #tpu.memory_space<vmem>>, vector<1x8xf32>
    %3 = vector.broadcast %2 : vector<1x8xf32> to vector<128x8xf32>
    %4 = arith.mulf %1, %3 : vector<128x8xf32>
    %c0_4 = arith.constant 0 : index
    %c0_5 = arith.constant 0 : index
    %5 = vector.load %arg4[%c0_4, %c0_5] : memref<1x8xf32, #tpu.memory_space<vmem>>, vector<1x8xf32>
    %6 = vector.broadcast %5 : vector<1x8xf32> to vector<128x8xf32>
    %7 = arith.addf %4, %6 : vector<128x8xf32>
    %c0_6 = arith.constant 0 : index
    %c0_7 = arith.constant 0 : index
    %c0_8 = arith.constant 0 : index
    %8 = vector.load %arg2[%c0_6, %c0_7, %c0_8] : memref<1x128x8xf32, #tpu.memory_space<vmem>>, vector<1x128x8xf32>
    %9 = vector.shape_cast %8 : vector<1x128x8xf32> to vector<128x8xf32>
    %c0_9 = arith.constant 0 : index
    %c0_10 = arith.constant 0 : index
    %10 = vector.load %arg5[%c0_9, %c0_10] : memref<1x8xf32, #tpu.memory_space<vmem>>, vector<1x8xf32>
    %11 = vector.broadcast %10 : vector<1x8xf32> to vector<128x8xf32>
    %12 = arith.mulf %9, %11 : vector<128x8xf32>
    %13 = arith.addf %7, %12 : vector<128x8xf32>
    %c0_11 = arith.constant 0 : index
    %c0_12 = arith.constant 0 : index
    %14 = vector.load %arg6[%c0_11, %c0_12] : memref<1x8xf32, #tpu.memory_space<vmem>>, vector<1x8xf32>
    %15 = vector.broadcast %14 : vector<1x8xf32> to vector<128x8xf32>
    %16 = arith.addf %13, %15 : vector<128x8xf32>
    %cst = arith.constant 0.000000e+00 : f32
    %17 = vector.broadcast %cst : f32 to vector<128x8xf32>
    %18 = arith.maximumf %16, %17 : vector<128x8xf32>
    %c0_13 = arith.constant 0 : index
    %c0_14 = arith.constant 0 : index
    %c0_15 = arith.constant 0 : index
    %19 = vector.load %arg7[%c0_13, %c0_14, %c0_15] : memref<1x128x8xf32, #tpu.memory_space<vmem>>, vector<1x128x8xf32>
    %20 = vector.shape_cast %19 : vector<1x128x8xf32> to vector<128x8xf32>
    %21 = vector.shape_cast %18 : vector<128x8xf32> to vector<1x128x8xf32>
    tpu.vector_store %arg7[%c0_13, %c0_14, %c0_15], %21 {strides = array<i32>} : memref<1x128x8xf32, #tpu.memory_space<vmem>>, vector<1x128x8xf32>,
    return
  }
  func.func @transform_0(%arg0: i32) -> (i32, i32, i32) {
    %c0_i32 = arith.constant 0 : i32
    %c0_i32_0 = arith.constant 0 : i32
    %c0_i32_1 = arith.constant 0 : i32
    return %arg0, %c0_i32, %c0_i32_0 : i32, i32, i32
  }
  func.func @transform_1(%arg0: i32) -> (i32, i32, i32) {
    %c0_i32 = arith.constant 0 : i32
    %c0_i32_0 = arith.constant 0 : i32
    %c0_i32_1 = arith.constant 0 : i32
    return %arg0, %c0_i32, %c0_i32_0 : i32, i32, i32
  }
  func.func @transform_2(%arg0: i32) -> (i32, i32) {
    %c0_i32 = arith.constant 0 : i32
    %c0_i32_0 = arith.constant 0 : i32
    %c0_i32_1 = arith.constant 0 : i32
    return %c0_i32, %c0_i32_0 : i32, i32
  }
  func.func @transform_3(%arg0: i32) -> (i32, i32) {
    %c0_i32 = arith.constant 0 : i32
    %c0_i32_0 = arith.constant 0 : i32
    %c0_i32_1 = arith.constant 0 : i32
    return %c0_i32, %c0_i32_0 : i32, i32
  }
  func.func @transform_4(%arg0: i32) -> (i32, i32) {
    %c0_i32 = arith.constant 0 : i32
    %c0_i32_0 = arith.constant 0 : i32
    %c0_i32_1 = arith.constant 0 : i32
    return %c0_i32, %c0_i32_0 : i32, i32
  }
  func.func @transform_5(%arg0: i32) -> (i32, i32) {
    %c0_i32 = arith.constant 0 : i32
    %c0_i32_0 = arith.constant 0 : i32
    %c0_i32_1 = arith.constant 0 : i32
    return %c0_i32, %c0_i32_0 : i32, i32
  }
  func.func @transform_6(%arg0: i32) -> (i32, i32, i32) {
    %c0_i32 = arith.constant 0 : i32
    %c0_i32_0 = arith.constant 0 : i32
    %c0_i32_1 = arith.constant 0 : i32
    return %arg0, %c0_i32, %c0_i32_0 : i32, i32, i32
  }
}

</mosaic_0001>

<llo_original>
// kernel: basic_block_forward.5
$region0: #{basic_block_forward.5}
  #allocation0 [shape = 'u32[]', space=smem, size = 0x4, offset = 0x4, fixed_abs, tag = 'smem constant byte address 0x4 - core index']
  #allocation1 [shape = 'u32[144,128]{1,0:T(1,128)}', space=vmem, size = 0x12000, scoped, tag = 'internal scratch']
  %s0 = inlined_call_operand.vmem [shape: f32[2,128,8], index: 0, kind: input, shape index: {}]
  %s1 = inlined_call_operand.vmem [shape: f32[2,128,8], index: 1, kind: input, shape index: {}]
  %s2 = inlined_call_operand.vmem [shape: f32[1,8], index: 2, kind: input, shape index: {}]
  %s3 = inlined_call_operand.vmem [shape: f32[1,8], index: 3, kind: input, shape index: {}]
  %s4 = inlined_call_operand.vmem [shape: f32[1,8], index: 4, kind: input, shape index: {}]
  %s5 = inlined_call_operand.vmem [shape: f32[1,8], index: 5, kind: input, shape index: {}]
  %s6 = inlined_call_operand.vmem [shape: f32[2,128,8], index: 6, kind: output, shape index: {}]
  %s7 = sld [smem:[#allocation0]]
  $region57: #{basic_block_forward.5} parent=0
    _
  %s9 = ssub.s32 1, %s7
  %s10 = scalar_select 0, %s9, %s7
  loop: start=0, step=1, limit=4
  $region2: #{basic_block_forward.5} parent=0 // loop_pre_header
    _
  $region3: #{basic_block_forward.5} parent=0 // loop_header
    %s12 = sphi 0, %s16
    %p13 = scmp.ge.s32.totalorder %s12, 4
    %s22 = sphi 0, %s24
    %s25 = sphi 0, %s22
    %s26 = sphi 0, %s25
    %s42 = sphi 0, %s26
    %s48 = sphi 0, %s50
    %s51 = sphi 0, %s48
    %s52 = sphi 0, %s51
    %s68 = sphi 0, %s52
    %s72 = sphi 0, %s72
    %s74 = sphi 0, %s72
    %s75 = sphi 0, %s74
    %s89 = sphi 0, %s75
    %s93 = sphi 0, %s93
    %s95 = sphi 0, %s93
    %s96 = sphi 0, %s95
    %s110 = sphi 0, %s96
    %s114 = sphi 0, %s114
    %s116 = sphi 0, %s114
    %s117 = sphi 0, %s116
    %s131 = sphi 0, %s117
    %s135 = sphi 0, %s135
    %s137 = sphi 0, %s135
    %s138 = sphi 0, %s137
    %s152 = sphi 0, %s138
    %s158 = sphi 0, %s160
    %s161 = sphi 0, %s158
    %s162 = sphi 0, %s161
    %s178 = sphi 0, %s162
  $region4: #{basic_block_forward.5} parent=0 // loop_header_branch
    %15 = sbr.rel (%p13) target = $region8
  $region5: #{basic_block_forward.5} parent=0 // loop_body
    %s17 = ssub.s32 %s12, 1
    %s18 = ssub.s32 %s12, 2
    %s19 = sadd.s32 %s12, 1
    %s20 = ssub.s32 %s12, %s19
    %p21 = scmp.eq.s32.totalorder %s20, 0
    %s23 = sadd.s32 %s22, 1
    %s24 = scalar_select %p21, %s22, %s23
    %p27 = pneg %p21
    %p28 = scmp.eq.s32.totalorder %s12, 1
    %p29 = por %p27, %p28
    %p30 = scmp.ne.s32.totalorder %s22, %s25
    %p31 = scmp.eq.s32.totalorder %s12, 0
    %p32 = por %p30, %p31
    %p33 = scmp.ne.s32.totalorder %s22, %s25
    %p34 = scmp.eq.s32.totalorder %s17, 1
    %p35 = por %p33, %p34
    %p36 = scmp.ne.s32.totalorder %s25, %s26
    %p37 = scmp.eq.s32.totalorder %s17, 0
    %p38 = por %p36, %p37
    %p39 = scmp.ne.s32.totalorder %s25, %s26
    %p40 = scmp.eq.s32.totalorder %s18, 1
    %p41 = por %p39, %p40
    %p43 = scmp.ne.s32.totalorder %s26, %s42
    %p44 = scmp.eq.s32.totalorder %s18, 0
    %p45 = por %p43, %p44
    %s46 = ssub.s32 %s12, %s19
    %p47 = scmp.eq.s32.totalorder %s46, 0
    %s49 = sadd.s32 %s48, 1
    %s50 = scalar_select %p47, %s48, %s49
    %p53 = pneg %p47
    %p54 = scmp.eq.s32.totalorder %s12, 1
    %p55 = por %p53, %p54
    %p56 = scmp.ne.s32.totalorder %s48, %s51
    %p57 = scmp.eq.s32.totalorder %s12, 0
    %p58 = por %p56, %p57
    %p59 = scmp.ne.s32.totalorder %s48, %s51
    %p60 = scmp.eq.s32.totalorder %s17, 1
    %p61 = por %p59, %p60
    %p62 = scmp.ne.s32.totalorder %s51, %s52
    %p63 = scmp.eq.s32.totalorder %s17, 0
    %p64 = por %p62, %p63
    %p65 = scmp.ne.s32.totalorder %s51, %s52
    %p66 = scmp.eq.s32.totalorder %s18, 1
    %p67 = por %p65, %p66
    %p69 = scmp.ne.s32.totalorder %s52, %s68
    %p70 = scmp.eq.s32.totalorder %s18, 0
    %p71 = por %p69, %p70
    %s73 = sadd.s32 %s72, 1
    %p76 = scmp.eq.s32.totalorder %s12, 1
    %p77 = scmp.ne.s32.totalorder %s72, %s74
    %p78 = scmp.eq.s32.totalorder %s12, 0
    %p79 = por %p77, %p78
    %p80 = scmp.ne.s32.totalorder %s72, %s74
    %p81 = scmp.eq.s32.totalorder %s17, 1
    %p82 = por %p80, %p81
    %p83 = scmp.ne.s32.totalorder %s74, %s75
    %p84 = scmp.eq.s32.totalorder %s17, 0
    %p85 = por %p83, %p84
    %p86 = scmp.ne.s32.totalorder %s74, %s75
    %p87 = scmp.eq.s32.totalorder %s18, 1
    %p88 = por %p86, %p87
    %p90 = scmp.ne.s32.totalorder %s75, %s89
    %p91 = scmp.eq.s32.totalorder %s18, 0
    %p92 = por %p90, %p91
    %s94 = sadd.s32 %s93, 1
    %p97 = scmp.eq.s32.totalorder %s12, 1
    %p98 = scmp.ne.s32.totalorder %s93, %s95
    %p99 = scmp.eq.s32.totalorder %s12, 0
    %p100 = por %p98, %p99
    %p101 = scmp.ne.s32.totalorder %s93, %s95
    %p102 = scmp.eq.s32.totalorder %s17, 1
    %p103 = por %p101, %p102
    %p104 = scmp.ne.s32.totalorder %s95, %s96
    %p105 = scmp.eq.s32.totalorder %s17, 0
    %p106 = por %p104, %p105
    %p107 = scmp.ne.s32.totalorder %s95, %s96
    %p108 = scmp.eq.s32.totalorder %s18, 1
    %p109 = por %p107, %p108
    %p111 = scmp.ne.s32.totalorder %s96, %s110
    %p112 = scmp.eq.s32.totalorder %s18, 0
    %p113 = por %p111, %p112
    %s115 = sadd.s32 %s114, 1
    %p118 = scmp.eq.s32.totalorder %s12, 1
    %p119 = scmp.ne.s32.totalorder %s114, %s116
    %p120 = scmp.eq.s32.totalorder %s12, 0
    %p121 = por %p119, %p120
    %p122 = scmp.ne.s32.totalorder %s114, %s116
    %p123 = scmp.eq.s32.totalorder %s17, 1
    %p124 = por %p122, %p123
    %p125 = scmp.ne.s32.totalorder %s116, %s117
    %p126 = scmp.eq.s32.totalorder %s17, 0
    %p127 = por %p125, %p126
    %p128 = scmp.ne.s32.totalorder %s116, %s117
    %p129 = scmp.eq.s32.totalorder %s18, 1
    %p130 = por %p128, %p129
    %p132 = scmp.ne.s32.totalorder %s117, %s131
    %p133 = scmp.eq.s32.totalorder %s18, 0
    %p134 = por %p132, %p133
    %s136 = sadd.s32 %s135, 1
    %p139 = scmp.eq.s32.totalorder %s12, 1
    %p140 = scmp.ne.s32.totalorder %s135, %s137
    %p141 = scmp.eq.s32.totalorder %s12, 0
    %p142 = por %p140, %p141
    %p143 = scmp.ne.s32.totalorder %s135, %s137
    %p144 = scmp.eq.s32.totalorder %s17, 1
    %p145 = por %p143, %p144
    %p146 = scmp.ne.s32.totalorder %s137, %s138
    %p147 = scmp.eq.s32.totalorder %s17, 0
    %p148 = por %p146, %p147
    %p149 = scmp.ne.s32.totalorder %s137, %s138
    %p150 = scmp.eq.s32.totalorder %s18, 1
    %p151 = por %p149, %p150
    %p153 = scmp.ne.s32.totalorder %s138, %s152
    %p154 = scmp.eq.s32.totalorder %s18, 0
    %p155 = por %p153, %p154
    %s156 = ssub.s32 %s12, %s19
    %p157 = scmp.eq.s32.totalorder %s156, 0
    %s159 = sadd.s32 %s158, 1
    %s160 = scalar_select %p157, %s158, %s159
    %p163 = pneg %p157
    %p164 = scmp.eq.s32.totalorder %s12, 1
    %p165 = por %p163, %p164
    %p166 = scmp.ne.s32.totalorder %s158, %s161
    %p167 = scmp.eq.s32.totalorder %s12, 0
    %p168 = por %p166, %p167
    %p169 = scmp.ne.s32.totalorder %s158, %s161
    %p170 = scmp.eq.s32.totalorder %s17, 1
    %p171 = por %p169, %p170
    %p172 = scmp.ne.s32.totalorder %s161, %s162
    %p173 = scmp.eq.s32.totalorder %s17, 0
    %p174 = por %p172, %p173
    %p175 = scmp.ne.s32.totalorder %s161, %s162
    %p176 = scmp.eq.s32.totalorder %s18, 1
    %p177 = por %p175, %p176
    %p179 = scmp.ne.s32.totalorder %s162, %s178
    %p180 = scmp.eq.s32.totalorder %s18, 0
    %p181 = por %p179, %p180
    %p182 = scmp.le.s32.totalorder 1, %s12
    %p183 = scmp.lt.s32.totalorder %s12, 3
    %p184 = pnand %p182, %p183
    %p185 = pneg %p184
    // Predicated region
    $region9: #{basic_block_forward.5} parent=5 // pred_check
      _
    $region10: #{basic_block_forward.5} parent=5 // pred_check_branch
      %187 = sbr.rel (%p184) target = $region12
    $region11: #{basic_block_forward.5} parent=5 // pred_region
      %s188 = ssub.s32 %s12, 1
      // Predicated region
      $region13: #{basic_block_forward.5} parent=11 // pred_check
        %p189 = pneg %p85
      $region14: #{basic_block_forward.5} parent=11 // pred_check_branch
        %191 = sbr.rel (%p189) target = $region16
      $region15: #{basic_block_forward.5} parent=11 // pred_region
        _
      $region16: #{basic_block_forward.5} parent=11 // pred_fallthru
        _
      // Predicated region
      $region17: #{basic_block_forward.5} parent=11 // pred_check
        %p192 = pneg %p106
      $region18: #{basic_block_forward.5} parent=11 // pred_check_branch
        %194 = sbr.rel (%p192) target = $region20
      $region19: #{basic_block_forward.5} parent=11 // pred_region
        _
      $region20: #{basic_block_forward.5} parent=11 // pred_fallthru
        _
      // Predicated region
      $region21: #{basic_block_forward.5} parent=11 // pred_check
        %p195 = pneg %p127
      $region22: #{basic_block_forward.5} parent=11 // pred_check_branch
        %197 = sbr.rel (%p195) target = $region24
      $region23: #{basic_block_forward.5} parent=11 // pred_region
        _
      $region24: #{basic_block_forward.5} parent=11 // pred_fallthru
        _
      // Predicated region
      $region25: #{basic_block_forward.5} parent=11 // pred_check
        %p198 = pneg %p148
      $region26: #{basic_block_forward.5} parent=11 // pred_check_branch
        %200 = sbr.rel (%p198) target = $region28
      $region27: #{basic_block_forward.5} parent=11 // pred_region
        _
      $region28: #{basic_block_forward.5} parent=11 // pred_fallthru
        _
    $region12: #{basic_block_forward.5} parent=5 // pred_fallthru
      _
    %p201 = scmp.lt.s32.totalorder %s12, 2
    // Predicated region
    $region29: #{basic_block_forward.5} parent=5 // pred_check
      %p202 = pneg %p201
    $region30: #{basic_block_forward.5} parent=5 // pred_check_branch
      %204 = sbr.rel (%p202) target = $region32
    $region31: #{basic_block_forward.5} parent=5 // pred_region
      // Predicated region
      $region33: #{basic_block_forward.5} parent=31 // pred_check
        %p205 = pneg %p32
      $region34: #{basic_block_forward.5} parent=31 // pred_check_branch
        %207 = sbr.rel (%p205) target = $region36
      $region35: #{basic_block_forward.5} parent=31 // pred_region
        %p208 = scmp.lt.s32.totalorder %s12, 1
        %s209 = scalar_select %p208, %s12, 1
        %s210 = smul.addr %s209, 16
        %s211 = smul.addr %s210, 8
        %s212 = scalar_lea.vmem %s0, %s211
      $region36: #{basic_block_forward.5} parent=31 // pred_fallthru
        _
      // Predicated region
      $region37: #{basic_block_forward.5} parent=31 // pred_check
        %p213 = pneg %p58
      $region38: #{basic_block_forward.5} parent=31 // pred_check_branch
        %215 = sbr.rel (%p213) target = $region40
      $region39: #{basic_block_forward.5} parent=31 // pred_region
        %p216 = scmp.lt.s32.totalorder %s12, 1
        %s217 = scalar_select %p216, %s12, 1
        %s218 = smul.addr %s217, 16
        %s219 = smul.addr %s218, 8
        %s220 = scalar_lea.vmem %s1, %s219
      $region40: #{basic_block_forward.5} parent=31 // pred_fallthru
        _
    $region32: #{basic_block_forward.5} parent=5 // pred_fallthru
      _
    %p221 = scmp.le.s32.totalorder 1, %s12
    %p222 = scmp.lt.s32.totalorder %s12, 3
    %p223 = pnand %p221, %p222
    %p224 = pneg %p223
    // Predicated region
    $region41: #{basic_block_forward.5} parent=5 // pred_check
      _
    $region42: #{basic_block_forward.5} parent=5 // pred_check_branch
      %226 = sbr.rel (%p223) target = $region44
    $region43: #{basic_block_forward.5} parent=5 // pred_region
      %s227 = ssub.s32 %s12, 1
      %p228 = scmp.lt.s32.totalorder %s17, 1
      %s229 = scalar_select %p228, %s17, 1
      %s230 = smul.addr %s229, 16
      %s231 = smul.addr %s230, 8
      %s232 = scalar_lea.vmem %s0, %s231
      %p233 = pneg %p38
      %p234 = pneg %p35
      %p235 = scmp.lt.s32.totalorder %s17, 1
      %s236 = scalar_select %p235, %s17, 1
      %s237 = smul.addr %s236, 16
      %s238 = smul.addr %s237, 8
      %s239 = scalar_lea.vmem %s1, %s238
      %p240 = pneg %p64
      %p241 = pneg %p61
      %p242 = pneg %p85
      %p243 = pneg %p82
      %p244 = pneg %p106
      %p245 = pneg %p103
      %p246 = pneg %p127
      %p247 = pneg %p124
      %p248 = pneg %p148
      %p249 = pneg %p145
      %p250 = pneg %p174
      %p251 = pneg %p171
      %p252 = scmp.lt.s32.totalorder %s17, 1
      %s253 = scalar_select %p252, %s17, 1
      %s254 = smul.addr %s253, 16
      %s255 = smul.addr %s254, 8
      %s256 = scalar_lea.vmem %s6, %s255
      %p257 = scmp.lt.s32.totalorder %s17, 1
      %s258 = scalar_select %p257, %s17, 1
      %s259 = smul.addr %s258, 16
      %s260 = smul.addr %s259, 8
      %s261 = scalar_lea.vmem %s0, %s260
      %p262 = scmp.lt.s32.totalorder %s17, 1
      %s263 = scalar_select %p262, %s17, 1
      %s264 = smul.addr %s263, 16
      %s265 = smul.addr %s264, 8
      %s266 = scalar_lea.vmem %s1, %s265
      %p267 = scmp.lt.s32.totalorder %s17, 1
      %s268 = scalar_select %p267, %s17, 1
      %s269 = smul.addr %s268, 16
      %s270 = smul.addr %s269, 8
      %s271 = scalar_lea.vmem %s6, %s270
      %v272 = vld [vmem:[%s261] sm:$0xff]
      %v273 = vld [vmem:[%s261 + $0x8] sm:$0xff]
      %v274 = vld [vmem:[%s261 + $0x10] sm:$0xff]
      %v275 = vld [vmem:[%s261 + $0x18] sm:$0xff]
      %v276 = vld [vmem:[%s261 + $0x20] sm:$0xff]
      %v277 = vld [vmem:[%s261 + $0x28] sm:$0xff]
      %v278 = vld [vmem:[%s261 + $0x30] sm:$0xff]
      %v279 = vld [vmem:[%s261 + $0x38] sm:$0xff]
      %v280 = vld [vmem:[%s261 + $0x40] sm:$0xff]
      %v281 = vld [vmem:[%s261 + $0x48] sm:$0xff]
      %v282 = vld [vmem:[%s261 + $0x50] sm:$0xff]
      %v283 = vld [vmem:[%s261 + $0x58] sm:$0xff]
      %v284 = vld [vmem:[%s261 + $0x60] sm:$0xff]
      %v285 = vld [vmem:[%s261 + $0x68] sm:$0xff]
      %v286 = vld [vmem:[%s261 + $0x70] sm:$0xff]
      %v287 = vld [vmem:[%s261 + $0x78] sm:$0xff]
      %v288 = vld [vmem:[%s2] sm:$0x1]
      %v290 = vlaneseq
      %v291 = vshrl.u32 %v290, 7
      %v292 = vsub.s32 0, %v291
      %v293 = vrot.slane %v288, %v292
      %v295 = vmul.f32 %v272, %v293
      %v296 = vmul.f32 %v273, %v293
      %v297 = vmul.f32 %v274, %v293
      %v298 = vmul.f32 %v275, %v293
      %v299 = vmul.f32 %v276, %v293
      %v300 = vmul.f32 %v277, %v293
      %v301 = vmul.f32 %v278, %v293
      %v302 = vmul.f32 %v279, %v293
      %v303 = vmul.f32 %v280, %v293
      %v304 = vmul.f32 %v281, %v293
      %v305 = vmul.f32 %v282, %v293
      %v306 = vmul.f32 %v283, %v293
      %v307 = vmul.f32 %v284, %v293
      %v308 = vmul.f32 %v285, %v293
      %v309 = vmul.f32 %v286, %v293
      %v310 = vmul.f32 %v287, %v293
      %v311 = vld [vmem:[%s3] sm:$0x1]
      %v313 = vlaneseq
      %v314 = vshrl.u32 %v313, 7
      %v315 = vsub.s32 0, %v314
      %v316 = vrot.slane %v311, %v315
      %v318 = vadd.f32 %v295, %v316
      %v319 = vadd.f32 %v296, %v316
      %v320 = vadd.f32 %v297, %v316
      %v321 = vadd.f32 %v298, %v316
      %v322 = vadd.f32 %v299, %v316
      %v323 = vadd.f32 %v300, %v316
      %v324 = vadd.f32 %v301, %v316
      %v325 = vadd.f32 %v302, %v316
      %v326 = vadd.f32 %v303, %v316
      %v327 = vadd.f32 %v304, %v316
      %v328 = vadd.f32 %v305, %v316
      %v329 = vadd.f32 %v306, %v316
      %v330 = vadd.f32 %v307, %v316
      %v331 = vadd.f32 %v308, %v316
      %v332 = vadd.f32 %v309, %v316
      %v333 = vadd.f32 %v310, %v316
      %v334 = vld [vmem:[%s266] sm:$0xff]
      %v335 = vld [vmem:[%s266 + $0x8] sm:$0xff]
      %v336 = vld [vmem:[%s266 + $0x10] sm:$0xff]
      %v337 = vld [vmem:[%s266 + $0x18] sm:$0xff]
      %v338 = vld [vmem:[%s266 + $0x20] sm:$0xff]
      %v339 = vld [vmem:[%s266 + $0x28] sm:$0xff]
      %v340 = vld [vmem:[%s266 + $0x30] sm:$0xff]
      %v341 = vld [vmem:[%s266 + $0x38] sm:$0xff]
      %v342 = vld [vmem:[%s266 + $0x40] sm:$0xff]
      %v343 = vld [vmem:[%s266 + $0x48] sm:$0xff]
      %v344 = vld [vmem:[%s266 + $0x50] sm:$0xff]
      %v345 = vld [vmem:[%s266 + $0x58] sm:$0xff]
      %v346 = vld [vmem:[%s266 + $0x60] sm:$0xff]
      %v347 = vld [vmem:[%s266 + $0x68] sm:$0xff]
      %v348 = vld [vmem:[%s266 + $0x70] sm:$0xff]
      %v349 = vld [vmem:[%s266 + $0x78] sm:$0xff]
      %v350 = vld [vmem:[%s4] sm:$0x1]
      %v352 = vlaneseq
      %v353 = vshrl.u32 %v352, 7
      %v354 = vsub.s32 0, %v353
      %v355 = vrot.slane %v350, %v354
      %v357 = vmul.f32 %v334, %v355
      %v358 = vmul.f32 %v335, %v355
      %v359 = vmul.f32 %v336, %v355
      %v360 = vmul.f32 %v337, %v355
      %v361 = vmul.f32 %v338, %v355
      %v362 = vmul.f32 %v339, %v355
      %v363 = vmul.f32 %v340, %v355
      %v364 = vmul.f32 %v341, %v355
      %v365 = vmul.f32 %v342, %v355
      %v366 = vmul.f32 %v343, %v355
      %v367 = vmul.f32 %v344, %v355
      %v368 = vmul.f32 %v345, %v355
      %v369 = vmul.f32 %v346, %v355
      %v370 = vmul.f32 %v347, %v355
      %v371 = vmul.f32 %v348, %v355
      %v372 = vmul.f32 %v349, %v355
      %v373 = vadd.f32 %v318, %v357
      %v374 = vadd.f32 %v319, %v358
      %v375 = vadd.f32 %v320, %v359
      %v376 = vadd.f32 %v321, %v360
      %v377 = vadd.f32 %v322, %v361
      %v378 = vadd.f32 %v323, %v362
      %v379 = vadd.f32 %v324, %v363
      %v380 = vadd.f32 %v325, %v364
      %v381 = vadd.f32 %v326, %v365
      %v382 = vadd.f32 %v327, %v366
      %v383 = vadd.f32 %v328, %v367
      %v384 = vadd.f32 %v329, %v368
      %v385 = vadd.f32 %v330, %v369
      %v386 = vadd.f32 %v331, %v370
      %v387 = vadd.f32 %v332, %v371
      %v388 = vadd.f32 %v333, %v372
      %v389 = vld [vmem:[%s5] sm:$0x1]
      %v391 = vlaneseq
      %v392 = vshrl.u32 %v391, 7
      %v393 = vsub.s32 0, %v392
      %v394 = vrot.slane %v389, %v393
      %v396 = vadd.f32 %v373, %v394
      %v397 = vadd.f32 %v374, %v394
      %v398 = vadd.f32 %v375, %v394
      %v399 = vadd.f32 %v376, %v394
      %v400 = vadd.f32 %v377, %v394
      %v401 = vadd.f32 %v378, %v394
      %v402 = vadd.f32 %v379, %v394
      %v403 = vadd.f32 %v380, %v394
      %v404 = vadd.f32 %v381, %v394
      %v405 = vadd.f32 %v382, %v394
      %v406 = vadd.f32 %v383, %v394
      %v407 = vadd.f32 %v384, %v394
      %v408 = vadd.f32 %v385, %v394
      %v409 = vadd.f32 %v386, %v394
      %v410 = vadd.f32 %v387, %v394
      %v411 = vadd.f32 %v388, %v394
      %v412 = vmax.f32 %v396, 0.0
      %v413 = vmax.f32 %v397, 0.0
      %v414 = vmax.f32 %v398, 0.0
      %v415 = vmax.f32 %v399, 0.0
      %v416 = vmax.f32 %v400, 0.0
      %v417 = vmax.f32 %v401, 0.0
      %v418 = vmax.f32 %v402, 0.0
      %v419 = vmax.f32 %v403, 0.0
      %v420 = vmax.f32 %v404, 0.0
      %v421 = vmax.f32 %v405, 0.0
      %v422 = vmax.f32 %v406, 0.0
      %v423 = vmax.f32 %v407, 0.0
      %v424 = vmax.f32 %v408, 0.0
      %v425 = vmax.f32 %v409, 0.0
      %v426 = vmax.f32 %v410, 0.0
      %v427 = vmax.f32 %v411, 0.0
      %vm428 = vcmask 64512
      %429 = vst.msk [vmem:[%s271] sm:$0xff] %vm428, %v412
      %430 = vst.msk [vmem:[%s271 + $0x8] sm:$0xff] %vm428, %v413
      %431 = vst.msk [vmem:[%s271 + $0x10] sm:$0xff] %vm428, %v414
      %432 = vst.msk [vmem:[%s271 + $0x18] sm:$0xff] %vm428, %v415
      %433 = vst.msk [vmem:[%s271 + $0x20] sm:$0xff] %vm428, %v416
      %434 = vst.msk [vmem:[%s271 + $0x28] sm:$0xff] %vm428, %v417
      %435 = vst.msk [vmem:[%s271 + $0x30] sm:$0xff] %vm428, %v418
      %436 = vst.msk [vmem:[%s271 + $0x38] sm:$0xff] %vm428, %v419
      %437 = vst.msk [vmem:[%s271 + $0x40] sm:$0xff] %vm428, %v420
      %438 = vst.msk [vmem:[%s271 + $0x48] sm:$0xff] %vm428, %v421
      %439 = vst.msk [vmem:[%s271 + $0x50] sm:$0xff] %vm428, %v422
      %440 = vst.msk [vmem:[%s271 + $0x58] sm:$0xff] %vm428, %v423
      %441 = vst.msk [vmem:[%s271 + $0x60] sm:$0xff] %vm428, %v424
      %442 = vst.msk [vmem:[%s271 + $0x68] sm:$0xff] %vm428, %v425
      %443 = vst.msk [vmem:[%s271 + $0x70] sm:$0xff] %vm428, %v426
      %444 = vst.msk [vmem:[%s271 + $0x78] sm:$0xff] %vm428, %v427
      %p445 = scmp.lt.s32.totalorder %s17, 1
      %s446 = scalar_select %p445, %s17, 1
      %s447 = smul.addr %s446, 16
      %s448 = smul.addr %s447, 8
      %s449 = scalar_lea.vmem %s6, %s448
      // Predicated region
      $region45: #{basic_block_forward.5} parent=43 // pred_check
        %p450 = pneg %p171
      $region46: #{basic_block_forward.5} parent=43 // pred_check_branch
        %452 = sbr.rel (%p450) target = $region48
      $region47: #{basic_block_forward.5} parent=43 // pred_region
        _
      $region48: #{basic_block_forward.5} parent=43 // pred_fallthru
        _
    $region44: #{basic_block_forward.5} parent=5 // pred_fallthru
      _
    %p453 = scmp.le.s32.totalorder 2, %s12
    // Predicated region
    $region49: #{basic_block_forward.5} parent=5 // pred_check
      %p454 = pneg %p453
    $region50: #{basic_block_forward.5} parent=5 // pred_check_branch
      %456 = sbr.rel (%p454) target = $region52
    $region51: #{basic_block_forward.5} parent=5 // pred_region
      %s457 = ssub.s32 %s12, 2
      // Predicated region
      $region53: #{basic_block_forward.5} parent=51 // pred_check
        %p458 = pneg %p177
      $region54: #{basic_block_forward.5} parent=51 // pred_check_branch
        %460 = sbr.rel (%p458) target = $region56
      $region55: #{basic_block_forward.5} parent=51 // pred_region
        %p461 = scmp.lt.s32.totalorder %s18, 1
        %s462 = scalar_select %p461, %s18, 1
        %s463 = smul.addr %s462, 16
        %s464 = smul.addr %s463, 8
        %s465 = scalar_lea.vmem %s6, %s464
      $region56: #{basic_block_forward.5} parent=51 // pred_fallthru
        _
    $region52: #{basic_block_forward.5} parent=5 // pred_fallthru
      _
  $region6: #{basic_block_forward.5} parent=0 // loop_footer
    %s16 = sadd.s32 1, %s12
  $region7: #{basic_block_forward.5} parent=0 // loop_footer_branch
    %11 = sbr.rel target = $region3
  $region8: #{basic_block_forward.5} parent=0 // loop_exit
    _

// kernel: basic_block_forward.3
$region0: #{basic_block_forward.3}
  #allocation0 [shape = 'u32[]', space=smem, size = 0x4, offset = 0x4, fixed_abs, tag = 'smem constant byte address 0x4 - core index']
  #allocation1 [shape = 'u32[144,128]{1,0:T(1,128)}', space=vmem, size = 0x12000, scoped, tag = 'internal scratch']
  %s0 = inlined_call_operand.vmem [shape: f32[2,54,8,4], index: 0, kind: input, shape index: {}]
  %s1 = inlined_call_operand.vmem [shape: f32[2,128,4], index: 1, kind: input, shape index: {}]
  %s2 = inlined_call_operand.vmem [shape: bf16[9,4,8], index: 2, kind: input, shape index: {}]
  %s3 = inlined_call_operand.vmem [shape: bf16[4,8], index: 3, kind: input, shape index: {}]
  %s4 = inlined_call_operand.vmem [shape: f32[2,128,8], index: 4, kind: output, shape index: {0}]
  %s5 = inlined_call_operand.vmem [shape: f32[2,128,8], index: 5, kind: output, shape index: {1}]
  %s6 = inlined_call_operand.vmem [shape: f32[2,2,8], index: 6, kind: output, shape index: {2}]
  %s7 = inlined_call_operand.vmem [shape: f32[2,2,8], index: 7, kind: output, shape index: {3}]
  %8 = xla_tuple %s4, %s5, %s6, %s7
  %s9 = sld [smem:[#allocation0]]
  $region73: #{basic_block_forward.3} parent=0
    _
  %s11 = ssub.s32 1, %s9
  %s12 = scalar_select 0, %s11, %s9
  loop: start=0, step=1, limit=4
  $region2: #{basic_block_forward.3} parent=0 // loop_pre_header
    _
  $region3: #{basic_block_forward.3} parent=0 // loop_header
    %s14 = sphi 0, %s18
    %p15 = scmp.ge.s32.totalorder %s14, 4
    %s24 = sphi 0, %s26
    %s27 = sphi 0, %s24
    %s28 = sphi 0, %s27
    %s44 = sphi 0, %s28
    %s50 = sphi 0, %s52
    %s53 = sphi 0, %s50
    %s54 = sphi 0, %s53
    %s70 = sphi 0, %s54
    %s74 = sphi 0, %s74
    %s76 = sphi 0, %s74
    %s77 = sphi 0, %s76
    %s91 = sphi 0, %s77
    %s95 = sphi 0, %s95
    %s97 = sphi 0, %s95
    %s98 = sphi 0, %s97
    %s112 = sphi 0, %s98
    %s118 = sphi 0, %s120
    %s121 = sphi 0, %s118
    %s122 = sphi 0, %s121
    %s138 = sphi 0, %s122
    %s144 = sphi 0, %s146
    %s147 = sphi 0, %s144
    %s148 = sphi 0, %s147
    %s164 = sphi 0, %s148
    %s170 = sphi 0, %s172
    %s173 = sphi 0, %s170
    %s174 = sphi 0, %s173
    %s190 = sphi 0, %s174
    %s196 = sphi 0, %s198
    %s199 = sphi 0, %s196
    %s200 = sphi 0, %s199
    %s216 = sphi 0, %s200
  $region4: #{basic_block_forward.3} parent=0 // loop_header_branch
    %17 = sbr.rel (%p15) target = $region8
  $region5: #{basic_block_forward.3} parent=0 // loop_body
    %s19 = ssub.s32 %s14, 1
    %s20 = ssub.s32 %s14, 2
    %s21 = sadd.s32 %s14, 1
    %s22 = ssub.s32 %s14, %s21
    %p23 = scmp.eq.s32.totalorder %s22, 0
    %s25 = sadd.s32 %s24, 1
    %s26 = scalar_select %p23, %s24, %s25
    %p29 = pneg %p23
    %p30 = scmp.eq.s32.totalorder %s14, 1
    %p31 = por %p29, %p30
    %p32 = scmp.ne.s32.totalorder %s24, %s27
    %p33 = scmp.eq.s32.totalorder %s14, 0
    %p34 = por %p32, %p33
    %p35 = scmp.ne.s32.totalorder %s24, %s27
    %p36 = scmp.eq.s32.totalorder %s19, 1
    %p37 = por %p35, %p36
    %p38 = scmp.ne.s32.totalorder %s27, %s28
    %p39 = scmp.eq.s32.totalorder %s19, 0
    %p40 = por %p38, %p39
    %p41 = scmp.ne.s32.totalorder %s27, %s28
    %p42 = scmp.eq.s32.totalorder %s20, 1
    %p43 = por %p41, %p42
    %p45 = scmp.ne.s32.totalorder %s28, %s44
    %p46 = scmp.eq.s32.totalorder %s20, 0
    %p47 = por %p45, %p46
    %s48 = ssub.s32 %s14, %s21
    %p49 = scmp.eq.s32.totalorder %s48, 0
    %s51 = sadd.s32 %s50, 1
    %s52 = scalar_select %p49, %s50, %s51
    %p55 = pneg %p49
    %p56 = scmp.eq.s32.totalorder %s14, 1
    %p57 = por %p55, %p56
    %p58 = scmp.ne.s32.totalorder %s50, %s53
    %p59 = scmp.eq.s32.totalorder %s14, 0
    %p60 = por %p58, %p59
    %p61 = scmp.ne.s32.totalorder %s50, %s53
    %p62 = scmp.eq.s32.totalorder %s19, 1
    %p63 = por %p61, %p62
    %p64 = scmp.ne.s32.totalorder %s53, %s54
    %p65 = scmp.eq.s32.totalorder %s19, 0
    %p66 = por %p64, %p65
    %p67 = scmp.ne.s32.totalorder %s53, %s54
    %p68 = scmp.eq.s32.totalorder %s20, 1
    %p69 = por %p67, %p68
    %p71 = scmp.ne.s32.totalorder %s54, %s70
    %p72 = scmp.eq.s32.totalorder %s20, 0
    %p73 = por %p71, %p72
    %s75 = sadd.s32 %s74, 1
    %p78 = scmp.eq.s32.totalorder %s14, 1
    %p79 = scmp.ne.s32.totalorder %s74, %s76
    %p80 = scmp.eq.s32.totalorder %s14, 0
    %p81 = por %p79, %p80
    %p82 = scmp.ne.s32.totalorder %s74, %s76
    %p83 = scmp.eq.s32.totalorder %s19, 1
    %p84 = por %p82, %p83
    %p85 = scmp.ne.s32.totalorder %s76, %s77
    %p86 = scmp.eq.s32.totalorder %s19, 0
    %p87 = por %p85, %p86
    %p88 = scmp.ne.s32.totalorder %s76, %s77
    %p89 = scmp.eq.s32.totalorder %s20, 1
    %p90 = por %p88, %p89
    %p92 = scmp.ne.s32.totalorder %s77, %s91
    %p93 = scmp.eq.s32.totalorder %s20, 0
    %p94 = por %p92, %p93
    %s96 = sadd.s32 %s95, 1
    %p99 = scmp.eq.s32.totalorder %s14, 1
    %p100 = scmp.ne.s32.totalorder %s95, %s97
    %p101 = scmp.eq.s32.totalorder %s14, 0
    %p102 = por %p100, %p101
    %p103 = scmp.ne.s32.totalorder %s95, %s97
    %p104 = scmp.eq.s32.totalorder %s19, 1
    %p105 = por %p103, %p104
    %p106 = scmp.ne.s32.totalorder %s97, %s98
    %p107 = scmp.eq.s32.totalorder %s19, 0
    %p108 = por %p106, %p107
    %p109 = scmp.ne.s32.totalorder %s97, %s98
    %p110 = scmp.eq.s32.totalorder %s20, 1
    %p111 = por %p109, %p110
    %p113 = scmp.ne.s32.totalorder %s98, %s112
    %p114 = scmp.eq.s32.totalorder %s20, 0
    %p115 = por %p113, %p114
    %s116 = ssub.s32 %s14, %s21
    %p117 = scmp.eq.s32.totalorder %s116, 0
    %s119 = sadd.s32 %s118, 1
    %s120 = scalar_select %p117, %s118, %s119
    %p123 = pneg %p117
    %p124 = scmp.eq.s32.totalorder %s14, 1
    %p125 = por %p123, %p124
    %p126 = scmp.ne.s32.totalorder %s118, %s121
    %p127 = scmp.eq.s32.totalorder %s14, 0
    %p128 = por %p126, %p127
    %p129 = scmp.ne.s32.totalorder %s118, %s121
    %p130 = scmp.eq.s32.totalorder %s19, 1
    %p131 = por %p129, %p130
    %p132 = scmp.ne.s32.totalorder %s121, %s122
    %p133 = scmp.eq.s32.totalorder %s19, 0
    %p134 = por %p132, %p133
    %p135 = scmp.ne.s32.totalorder %s121, %s122
    %p136 = scmp.eq.s32.totalorder %s20, 1
    %p137 = por %p135, %p136
    %p139 = scmp.ne.s32.totalorder %s122, %s138
    %p140 = scmp.eq.s32.totalorder %s20, 0
    %p141 = por %p139, %p140
    %s142 = ssub.s32 %s14, %s21
    %p143 = scmp.eq.s32.totalorder %s142, 0
    %s145 = sadd.s32 %s144, 1
    %s146 = scalar_select %p143, %s144, %s145
    %p149 = pneg %p143
    %p150 = scmp.eq.s32.totalorder %s14, 1
    %p151 = por %p149, %p150
    %p152 = scmp.ne.s32.totalorder %s144, %s147
    %p153 = scmp.eq.s32.totalorder %s14, 0
    %p154 = por %p152, %p153
    %p155 = scmp.ne.s32.totalorder %s144, %s147
    %p156 = scmp.eq.s32.totalorder %s19, 1
    %p157 = por %p155, %p156
    %p158 = scmp.ne.s32.totalorder %s147, %s148
    %p159 = scmp.eq.s32.totalorder %s19, 0
    %p160 = por %p158, %p159
    %p161 = scmp.ne.s32.totalorder %s147, %s148
    %p162 = scmp.eq.s32.totalorder %s20, 1
    %p163 = por %p161, %p162
    %p165 = scmp.ne.s32.totalorder %s148, %s164
    %p166 = scmp.eq.s32.totalorder %s20, 0
    %p167 = por %p165, %p166
    %s168 = ssub.s32 %s14, %s21
    %p169 = scmp.eq.s32.totalorder %s168, 0
    %s171 = sadd.s32 %s170, 1
    %s172 = scalar_select %p169, %s170, %s171
    %p175 = pneg %p169
    %p176 = scmp.eq.s32.totalorder %s14, 1
    %p177 = por %p175, %p176
    %p178 = scmp.ne.s32.totalorder %s170, %s173
    %p179 = scmp.eq.s32.totalorder %s14, 0
    %p180 = por %p178, %p179
    %p181 = scmp.ne.s32.totalorder %s170, %s173
    %p182 = scmp.eq.s32.totalorder %s19, 1
    %p183 = por %p181, %p182
    %p184 = scmp.ne.s32.totalorder %s173, %s174
    %p185 = scmp.eq.s32.totalorder %s19, 0
    %p186 = por %p184, %p185
    %p187 = scmp.ne.s32.totalorder %s173, %s174
    %p188 = scmp.eq.s32.totalorder %s20, 1
    %p189 = por %p187, %p188
    %p191 = scmp.ne.s32.totalorder %s174, %s190
    %p192 = scmp.eq.s32.totalorder %s20, 0
    %p193 = por %p191, %p192
    %s194 = ssub.s32 %s14, %s21
    %p195 = scmp.eq.s32.totalorder %s194, 0
    %s197 = sadd.s32 %s196, 1
    %s198 = scalar_select %p195, %s196, %s197
    %p201 = pneg %p195
    %p202 = scmp.eq.s32.totalorder %s14, 1
    %p203 = por %p201, %p202
    %p204 = scmp.ne.s32.totalorder %s196, %s199
    %p205 = scmp.eq.s32.totalorder %s14, 0
    %p206 = por %p204, %p205
    %p207 = scmp.ne.s32.totalorder %s196, %s199
    %p208 = scmp.eq.s32.totalorder %s19, 1
    %p209 = por %p207, %p208
    %p210 = scmp.ne.s32.totalorder %s199, %s200
    %p211 = scmp.eq.s32.totalorder %s19, 0
    %p212 = por %p210, %p211
    %p213 = scmp.ne.s32.totalorder %s199, %s200
    %p214 = scmp.eq.s32.totalorder %s20, 1
    %p215 = por %p213, %p214
    %p217 = scmp.ne.s32.totalorder %s200, %s216
    %p218 = scmp.eq.s32.totalorder %s20, 0
    %p219 = por %p217, %p218
    %p220 = scmp.le.s32.totalorder 1, %s14
    %p221 = scmp.lt.s32.totalorder %s14, 3
    %p222 = pnand %p220, %p221
    %p223 = pneg %p222
    // Predicated region
    $region9: #{basic_block_forward.3} parent=5 // pred_check
      _
    $region10: #{basic_block_forward.3} parent=5 // pred_check_branch
      %225 = sbr.rel (%p222) target = $region12
    $region11: #{basic_block_forward.3} parent=5 // pred_region
      %s226 = ssub.s32 %s14, 1
      // Predicated region
      $region13: #{basic_block_forward.3} parent=11 // pred_check
        %p227 = pneg %p87
      $region14: #{basic_block_forward.3} parent=11 // pred_check_branch
        %229 = sbr.rel (%p227) target = $region16
      $region15: #{basic_block_forward.3} parent=11 // pred_region
        _
      $region16: #{basic_block_forward.3} parent=11 // pred_fallthru
        _
      // Predicated region
      $region17: #{basic_block_forward.3} parent=11 // pred_check
        %p230 = pneg %p108
      $region18: #{basic_block_forward.3} parent=11 // pred_check_branch
        %232 = sbr.rel (%p230) target = $region20
      $region19: #{basic_block_forward.3} parent=11 // pred_region
        _
      $region20: #{basic_block_forward.3} parent=11 // pred_fallthru
        _
    $region12: #{basic_block_forward.3} parent=5 // pred_fallthru
      _
    %p233 = scmp.lt.s32.totalorder %s14, 2
    // Predicated region
    $region21: #{basic_block_forward.3} parent=5 // pred_check
      %p234 = pneg %p233
    $region22: #{basic_block_forward.3} parent=5 // pred_check_branch
      %236 = sbr.rel (%p234) target = $region24
    $region23: #{basic_block_forward.3} parent=5 // pred_region
      // Predicated region
      $region25: #{basic_block_forward.3} parent=23 // pred_check
        %p237 = pneg %p34
      $region26: #{basic_block_forward.3} parent=23 // pred_check_branch
        %239 = sbr.rel (%p237) target = $region28
      $region27: #{basic_block_forward.3} parent=23 // pred_region
        %p240 = scmp.lt.s32.totalorder %s14, 1
        %s241 = scalar_select %p240, %s14, 1
        %s242 = smul.addr %s241, 54
        %s243 = smul.addr %s242, 8
        %s244 = scalar_lea.vmem %s0, %s243
      $region28: #{basic_block_forward.3} parent=23 // pred_fallthru
        _
      // Predicated region
      $region29: #{basic_block_forward.3} parent=23 // pred_check
        %p245 = pneg %p60
      $region30: #{basic_block_forward.3} parent=23 // pred_check_branch
        %247 = sbr.rel (%p245) target = $region32
      $region31: #{basic_block_forward.3} parent=23 // pred_region
        %p248 = scmp.lt.s32.totalorder %s14, 1
        %s249 = scalar_select %p248, %s14, 1
        %s250 = smul.addr %s249, 16
        %s251 = smul.addr %s250, 8
        %s252 = scalar_lea.vmem %s1, %s251
      $region32: #{basic_block_forward.3} parent=23 // pred_fallthru
        _
    $region24: #{basic_block_forward.3} parent=5 // pred_fallthru
      _
    %p253 = scmp.le.s32.totalorder 1, %s14
    %p254 = scmp.lt.s32.totalorder %s14, 3
    %p255 = pnand %p253, %p254
    %p256 = pneg %p255
    // Predicated region
    $region33: #{basic_block_forward.3} parent=5 // pred_check
      _
    $region34: #{basic_block_forward.3} parent=5 // pred_check_branch
      %258 = sbr.rel (%p255) target = $region36
    $region35: #{basic_block_forward.3} parent=5 // pred_region
      %s259 = ssub.s32 %s14, 1
      %p260 = scmp.lt.s32.totalorder %s19, 1
      %s261 = scalar_select %p260, %s19, 1
      %s262 = smul.addr %s261, 54
      %s263 = smul.addr %s262, 8
      %s264 = scalar_lea.vmem %s0, %s263
      %p265 = pneg %p40
      %p266 = pneg %p37
      %p267 = scmp.lt.s32.totalorder %s19, 1
      %s268 = scalar_select %p267, %s19, 1
      %s269 = smul.addr %s268, 16
      %s270 = smul.addr %s269, 8
      %s271 = scalar_lea.vmem %s1, %s270
      %p272 = pneg %p66
      %p273 = pneg %p63
      %p274 = pneg %p87
      %p275 = pneg %p84
      %p276 = pneg %p108
      %p277 = pneg %p105
      %p278 = pneg %p134
      %p279 = pneg %p131
      %p280 = scmp.lt.s32.totalorder %s19, 1
      %s281 = scalar_select %p280, %s19, 1
      %s282 = smul.addr %s281, 16
      %s283 = smul.addr %s282, 8
      %s284 = scalar_lea.vmem %s4, %s283
      %p285 = pneg %p160
      %p286 = pneg %p157
      %p287 = scmp.lt.s32.totalorder %s19, 1
      %s288 = scalar_select %p287, %s19, 1
      %s289 = smul.addr %s288, 16
      %s290 = smul.addr %s289, 8
      %s291 = scalar_lea.vmem %s5, %s290
      %p292 = pneg %p186
      %p293 = pneg %p183
      %p294 = scmp.lt.s32.totalorder %s19, 1
      %s295 = scalar_select %p294, %s19, 1
      %s296 = smul.addr %s295, 2
      %s297 = scalar_lea.vmem %s6, %s296
      %p298 = pneg %p212
      %p299 = pneg %p209
      %p300 = scmp.lt.s32.totalorder %s19, 1
      %s301 = scalar_select %p300, %s19, 1
      %s302 = smul.addr %s301, 2
      %s303 = scalar_lea.vmem %s7, %s302
      %p304 = scmp.lt.s32.totalorder %s19, 1
      %s305 = scalar_select %p304, %s19, 1
      %s306 = smul.addr %s305, 54
      %s307 = smul.addr %s306, 8
      %s308 = scalar_lea.vmem %s0, %s307
      %p309 = scmp.lt.s32.totalorder %s19, 1
      %s310 = scalar_select %p309, %s19, 1
      %s311 = smul.addr %s310, 16
      %s312 = smul.addr %s311, 8
      %s313 = scalar_lea.vmem %s1, %s312
      %p314 = scmp.lt.s32.totalorder %s19, 1
      %s315 = scalar_select %p314, %s19, 1
      %s316 = smul.addr %s315, 16
      %s317 = smul.addr %s316, 8
      %s318 = scalar_lea.vmem %s4, %s317
      %p319 = scmp.lt.s32.totalorder %s19, 1
      %s320 = scalar_select %p319, %s19, 1
      %s321 = smul.addr %s320, 16
      %s322 = smul.addr %s321, 8
      %s323 = scalar_lea.vmem %s5, %s322
      %p324 = scmp.lt.s32.totalorder %s19, 1
      %s325 = scalar_select %p324, %s19, 1
      %s326 = smul.addr %s325, 2
      %s327 = scalar_lea.vmem %s6, %s326
      %p328 = scmp.lt.s32.totalorder %s19, 1
      %s329 = scalar_select %p328, %s19, 1
      %s330 = smul.addr %s329, 2
      %s331 = scalar_lea.vmem %s7, %s330
      %v333 = vld [vmem:[%s308] sm:$0xff]
      %v334 = vld [vmem:[%s308 + $0x8] sm:$0xff]
      %v335 = vld [vmem:[%s308 + $0x10] sm:$0xff]
      %v336 = vld [vmem:[%s308 + $0x18] sm:$0xff]
      %v337 = vld [vmem:[%s308 + $0x20] sm:$0xff]
      %v338 = vld [vmem:[%s308 + $0x28] sm:$0xff]
      %v339 = vld [vmem:[%s308 + $0x30] sm:$0xff]
      %v340 = vld [vmem:[%s308 + $0x38] sm:$0xff]
      %v341 = vld [vmem:[%s308 + $0x40] sm:$0xff]
      %v342 = vld [vmem:[%s308 + $0x48] sm:$0xff]
      %v343 = vld [vmem:[%s308 + $0x50] sm:$0xff]
      %v344 = vld [vmem:[%s308 + $0x58] sm:$0xff]
      %v345 = vld [vmem:[%s308 + $0x60] sm:$0xff]
      %v346 = vld [vmem:[%s308 + $0x68] sm:$0xff]
      %v347 = vld [vmem:[%s308 + $0x70] sm:$0xff]
      %v348 = vld [vmem:[%s308 + $0x78] sm:$0xff]
      %v349 = vpack.c.bf16 %v334, %v333
      %v350 = vpack.c.bf16 %v336, %v335
      %v351 = vpack.c.bf16 %v338, %v337
      %v352 = vpack.c.bf16 %v340, %v339
      %v353 = vpack.c.bf16 %v342, %v341
      %v354 = vpack.c.bf16 %v344, %v343
      %v355 = vpack.c.bf16 %v346, %v345
      %v356 = vpack.c.bf16 %v348, %v347
      %v357 = vld [vmem:[%s2] sm:$0x3]
      %s358 = scalar_lea.vmem %s308, 144
      %v359 = vld [vmem:[%s358] sm:$0xff]
      %v360 = vld [vmem:[%s358 + $0x8] sm:$0xff]
      %v361 = vld [vmem:[%s358 + $0x10] sm:$0xff]
      %v362 = vld [vmem:[%s358 + $0x18] sm:$0xff]
      %v363 = vld [vmem:[%s358 + $0x20] sm:$0xff]
      %v364 = vld [vmem:[%s358 + $0x28] sm:$0xff]
      %v365 = vld [vmem:[%s358 + $0x30] sm:$0xff]
      %v366 = vld [vmem:[%s358 + $0x38] sm:$0xff]
      %v367 = vld [vmem:[%s358 + $0x40] sm:$0xff]
      %v368 = vld [vmem:[%s358 + $0x48] sm:$0xff]
      %v369 = vld [vmem:[%s358 + $0x50] sm:$0xff]
      %v370 = vld [vmem:[%s358 + $0x58] sm:$0xff]
      %v371 = vld [vmem:[%s358 + $0x60] sm:$0xff]
      %v372 = vld [vmem:[%s358 + $0x68] sm:$0xff]
      %v373 = vld [vmem:[%s358 + $0x70] sm:$0xff]
      %v374 = vld [vmem:[%s358 + $0x78] sm:$0xff]
      %v375 = vpack.c.bf16 %v360, %v359
      %v376 = vpack.c.bf16 %v362, %v361
      %v377 = vpack.c.bf16 %v364, %v363
      %v378 = vpack.c.bf16 %v366, %v365
      %v379 = vpack.c.bf16 %v368, %v367
      %v380 = vpack.c.bf16 %v370, %v369
      %v381 = vpack.c.bf16 %v372, %v371
      %v382 = vpack.c.bf16 %v374, %v373
      %s383 = scalar_lea.vmem %s2, 2
      %v384 = vld [vmem:[%s383] sm:$0x3]
      %vm385 = vcmask 31744
      %v387 = vsel %vm385, %v375, 0
      %v390 = vsel %vm385, %v376, 0
      %v393 = vsel %vm385, %v377, 0
      %v396 = vsel %vm385, %v378, 0
      %v399 = vsel %vm385, %v379, 0
      %v402 = vsel %vm385, %v380, 0
      %v405 = vsel %vm385, %v381, 0
      %v408 = vsel %vm385, %v382, 0
      %vm410 = vcmask 1041408
      %v412 = vsel %vm410, %v384, 0
      %414 = vmatprep.subr.bf16.mxu0 0
      %415 = vmatpush1.bf16.msra.mxu0 %v412
      %416 = vmatprep.subr.bf16.mxu0 0
      %417 = vmatpush1.bf16.msra.mxu0 0
      %418 = vmatprep.subr.bf16.mxu0 0
      %419 = vmatpush1.bf16.msra.mxu0 0
      %420 = vmatprep.subr.bf16.mxu0 0
      %421 = vmatpush1.bf16.msra.mxu0 0
      %422 = vmatprep.subr.bf16.mxu0 0
      %423 = vmatpush1.bf16.msra.mxu0 0
      %424 = vmatprep.subr.bf16.mxu0 0
      %425 = vmatpush1.bf16.msra.mxu0 0
      %426 = vmatprep.subr.bf16.mxu0 0
      %427 = vmatpush1.bf16.msra.mxu0 0
      %428 = vmatprep.subr.bf16.mxu0 0
      %429 = vmatpush1.bf16.msra.mxu0 0
      %430 = vmatprep.subr.bf16.mxu0 0
      %431 = vmatpush1.bf16.msra.mxu0 0
      %432 = vmatprep.subr.bf16.mxu0 0
      %433 = vmatpush1.bf16.msra.mxu0 0
      %434 = vmatprep.subr.bf16.mxu0 0
      %435 = vmatpush1.bf16.msra.mxu0 0
      %436 = vmatprep.subr.bf16.mxu0 0
      %437 = vmatpush1.bf16.msra.mxu0 0
      %438 = vmatprep.subr.bf16.mxu0 0
      %439 = vmatpush1.bf16.msra.mxu0 0
      %440 = vmatprep.subr.bf16.mxu0 0
      %441 = vmatpush1.bf16.msra.mxu0 0
      %442 = vmatprep.subr.bf16.mxu0 0
      %443 = vmatpush1.bf16.msra.mxu0 0
      %444 = vmatprep.subr.bf16.mxu0 0
      %445 = vmatpush1.bf16.msra.mxu0 0
      %446 = vmatprep.mubr.bf16.mxu0 0
      %447 = vmatmul.mubr.bf16.gmra.mrb[0].mxu0 %v387
      %v448 = vpop.f32.mrb[0].mxu0
      %v449 = vadd.f32 0.0, %v448
      %v450 = vpop.f32.mrb[0].mxu0
      %v451 = vpop.f32.mrb[0].mxu0
      %v452 = vadd.f32 0.0, %v451
      %v453 = vpop.f32.mrb[0].mxu0
      %454 = vmatprep.mubr.bf16.mxu0 0
      %455 = vmatmul.mubr.bf16.gmra.mrb[0].mxu0 %v390
      %v456 = vpop.f32.mrb[0].mxu0
      %v457 = vadd.f32 0.0, %v456
      %v458 = vpop.f32.mrb[0].mxu0
      %v459 = vpop.f32.mrb[0].mxu0
      %v460 = vadd.f32 0.0, %v459
      %v461 = vpop.f32.mrb[0].mxu0
      %462 = vmatprep.mubr.bf16.mxu0 0
      %463 = vmatmul.mubr.bf16.gmra.mrb[0].mxu0 %v393
      %v464 = vpop.f32.mrb[0].mxu0
      %v465 = vadd.f32 0.0, %v464
      %v466 = vpop.f32.mrb[0].mxu0
      %v467 = vpop.f32.mrb[0].mxu0
      %v468 = vadd.f32 0.0, %v467
      %v469 = vpop.f32.mrb[0].mxu0
      %470 = vmatprep.mubr.bf16.mxu0 0
      %471 = vmatmul.mubr.bf16.gmra.mrb[0].mxu0 %v396
      %v472 = vpop.f32.mrb[0].mxu0
      %v473 = vadd.f32 0.0, %v472
      %v474 = vpop.f32.mrb[0].mxu0
      %v475 = vpop.f32.mrb[0].mxu0
      %v476 = vadd.f32 0.0, %v475
      %v477 = vpop.f32.mrb[0].mxu0
      %478 = vmatprep.mubr.bf16.mxu0 0
      %479 = vmatmul.mubr.bf16.gmra.mrb[0].mxu0 %v399
      %v480 = vpop.f32.mrb[0].mxu0
      %v481 = vadd.f32 0.0, %v480
      %v482 = vpop.f32.mrb[0].mxu0
      %v483 = vpop.f32.mrb[0].mxu0
      %v484 = vadd.f32 0.0, %v483
      %v485 = vpop.f32.mrb[0].mxu0
      %486 = vmatprep.mubr.bf16.mxu0 0
      %487 = vmatmul.mubr.bf16.gmra.mrb[0].mxu0 %v402
      %v488 = vpop.f32.mrb[0].mxu0
      %v489 = vadd.f32 0.0, %v488
      %v490 = vpop.f32.mrb[0].mxu0
      %v491 = vpop.f32.mrb[0].mxu0
      %v492 = vadd.f32 0.0, %v491
      %v493 = vpop.f32.mrb[0].mxu0
      %494 = vmatprep.mubr.bf16.mxu0 0
      %495 = vmatmul.mubr.bf16.gmra.mrb[0].mxu0 %v405
      %v496 = vpop.f32.mrb[0].mxu0
      %v497 = vadd.f32 0.0, %v496
      %v498 = vpop.f32.mrb[0].mxu0
      %v499 = vpop.f32.mrb[0].mxu0
      %v500 = vadd.f32 0.0, %v499
      %v501 = vpop.f32.mrb[0].mxu0
      %502 = vmatprep.mubr.bf16.mxu0 0
      %503 = vmatmul.mubr.bf16.gmra.mrb[0].mxu0 %v408
      %v504 = vpop.f32.mrb[0].mxu0
      %v505 = vadd.f32 0.0, %v504
      %v506 = vpop.f32.mrb[0].mxu0
      %v507 = vpop.f32.mrb[0].mxu0
      %v508 = vadd.f32 0.0, %v507
      %v509 = vpop.f32.mrb[0].mxu0
      %510 = vdwg.mxu0
      %v512 = vsel %vm385, %v349, 0
      %v515 = vsel %vm385, %v350, 0
      %v518 = vsel %vm385, %v351, 0
      %v521 = vsel %vm385, %v352, 0
      %v524 = vsel %vm385, %v353, 0
      %v527 = vsel %vm385, %v354, 0
      %v530 = vsel %vm385, %v355, 0
      %v533 = vsel %vm385, %v356, 0
      %v536 = vsel %vm410, %v357, 0
      %538 = vmatprep.subr.bf16.mxu0 0
      %539 = vmatpush1.bf16.msra.mxu0 %v536
      %540 = vmatprep.subr.bf16.mxu0 0
      %541 = vmatpush1.bf16.msra.mxu0 0
      %542 = vmatprep.subr.bf16.mxu0 0
      %543 = vmatpush1.bf16.msra.mxu0 0
      %544 = vmatprep.subr.bf16.mxu0 0
      %545 = vmatpush1.bf16.msra.mxu0 0
      %546 = vmatprep.subr.bf16.mxu0 0
      %547 = vmatpush1.bf16.msra.mxu0 0
      %548 = vmatprep.subr.bf16.mxu0 0
      %549 = vmatpush1.bf16.msra.mxu0 0
      %550 = vmatprep.subr.bf16.mxu0 0
      %551 = vmatpush1.bf16.msra.mxu0 0
      %552 = vmatprep.subr.bf16.mxu0 0
      %553 = vmatpush1.bf16.msra.mxu0 0
      %554 = vmatprep.subr.bf16.mxu0 0
      %555 = vmatpush1.bf16.msra.mxu0 0
      %556 = vmatprep.subr.bf16.mxu0 0
      %557 = vmatpush1.bf16.msra.mxu0 0
      %558 = vmatprep.subr.bf16.mxu0 0
      %559 = vmatpush1.bf16.msra.mxu0 0
      %560 = vmatprep.subr.bf16.mxu0 0
      %561 = vmatpush1.bf16.msra.mxu0 0
      %562 = vmatprep.subr.bf16.mxu0 0
      %563 = vmatpush1.bf16.msra.mxu0 0
      %564 = vmatprep.subr.bf16.mxu0 0
      %565 = vmatpush1.bf16.msra.mxu0 0
      %566 = vmatprep.subr.bf16.mxu0 0
      %567 = vmatpush1.bf16.msra.mxu0 0
      %568 = vmatprep.subr.bf16.mxu0 0
      %569 = vmatpush1.bf16.msra.mxu0 0
      %570 = vmatprep.mubr.bf16.mxu0 0
      %571 = vmatmul.mubr.bf16.gmra.mrb[0].mxu0 %v512
      %v572 = vpop.f32.mrb[0].mxu0
      %v573 = vadd.f32 %v449, %v572
      %v574 = vpop.f32.mrb[0].mxu0
      %v575 = vpop.f32.mrb[0].mxu0
      %v576 = vadd.f32 %v452, %v575
      %v577 = vpop.f32.mrb[0].mxu0
      %578 = vmatprep.mubr.bf16.mxu0 0
      %579 = vmatmul.mubr.bf16.gmra.mrb[0].mxu0 %v515
      %v580 = vpop.f32.mrb[0].mxu0
      %v581 = vadd.f32 %v457, %v580
      %v582 = vpop.f32.mrb[0].mxu0
      %v583 = vpop.f32.mrb[0].mxu0
      %v584 = vadd.f32 %v460, %v583
      %v585 = vpop.f32.mrb[0].mxu0
      %586 = vmatprep.mubr.bf16.mxu0 0
      %587 = vmatmul.mubr.bf16.gmra.mrb[0].mxu0 %v518
      %v588 = vpop.f32.mrb[0].mxu0
      %v589 = vadd.f32 %v465, %v588
      %v590 = vpop.f32.mrb[0].mxu0
      %v591 = vpop.f32.mrb[0].mxu0
      %v592 = vadd.f32 %v468, %v591
      %v593 = vpop.f32.mrb[0].mxu0
      %594 = vmatprep.mubr.bf16.mxu0 0
      %595 = vmatmul.mubr.bf16.gmra.mrb[0].mxu0 %v521
      %v596 = vpop.f32.mrb[0].mxu0
      %v597 = vadd.f32 %v473, %v596
      %v598 = vpop.f32.mrb[0].mxu0
      %v599 = vpop.f32.mrb[0].mxu0
      %v600 = vadd.f32 %v476, %v599
      %v601 = vpop.f32.mrb[0].mxu0
      %602 = vmatprep.mubr.bf16.mxu0 0
      %603 = vmatmul.mubr.bf16.gmra.mrb[0].mxu0 %v524
      %v604 = vpop.f32.mrb[0].mxu0
      %v605 = vadd.f32 %v481, %v604
      %v606 = vpop.f32.mrb[0].mxu0
      %v607 = vpop.f32.mrb[0].mxu0
      %v608 = vadd.f32 %v484, %v607
      %v609 = vpop.f32.mrb[0].mxu0
      %610 = vmatprep.mubr.bf16.mxu0 0
      %611 = vmatmul.mubr.bf16.gmra.mrb[0].mxu0 %v527
      %v612 = vpop.f32.mrb[0].mxu0
      %v613 = vadd.f32 %v489, %v612
      %v614 = vpop.f32.mrb[0].mxu0
      %v615 = vpop.f32.mrb[0].mxu0
      %v616 = vadd.f32 %v492, %v615
      %v617 = vpop.f32.mrb[0].mxu0
      %618 = vmatprep.mubr.bf16.mxu0 0
      %619 = vmatmul.mubr.bf16.gmra.mrb[0].mxu0 %v530
      %v620 = vpop.f32.mrb[0].mxu0
      %v621 = vadd.f32 %v497, %v620
      %v622 = vpop.f32.mrb[0].mxu0
      %v623 = vpop.f32.mrb[0].mxu0
      %v624 = vadd.f32 %v500, %v623
      %v625 = vpop.f32.mrb[0].mxu0
      %626 = vmatprep.mubr.bf16.mxu0 0
      %627 = vmatmul.mubr.bf16.gmra.mrb[0].mxu0 %v533
      %v628 = vpop.f32.mrb[0].mxu0
      %v629 = vadd.f32 %v505, %v628
      %v630 = vpop.f32.mrb[0].mxu0
      %v631 = vpop.f32.mrb[0].mxu0
      %v632 = vadd.f32 %v508, %v631
      %v633 = vpop.f32.mrb[0].mxu0
      %634 = vdwg.mxu0
      %s635 = scalar_lea.vmem %s308, 288
      %v636 = vld [vmem:[%s635] sm:$0xff]
      %v637 = vld [vmem:[%s635 + $0x8] sm:$0xff]
      %v638 = vld [vmem:[%s635 + $0x10] sm:$0xff]
      %v639 = vld [vmem:[%s635 + $0x18] sm:$0xff]
      %v640 = vld [vmem:[%s635 + $0x20] sm:$0xff]
      %v641 = vld [vmem:[%s635 + $0x28] sm:$0xff]
      %v642 = vld [vmem:[%s635 + $0x30] sm:$0xff]
      %v643 = vld [vmem:[%s635 + $0x38] sm:$0xff]
      %v644 = vld [vmem:[%s635 + $0x40] sm:$0xff]
      %v645 = vld [vmem:[%s635 + $0x48] sm:$0xff]
      %v646 = vld [vmem:[%s635 + $0x50] sm:$0xff]
      %v647 = vld [vmem:[%s635 + $0x58] sm:$0xff]
      %v648 = vld [vmem:[%s635 + $0x60] sm:$0xff]
      %v649 = vld [vmem:[%s635 + $0x68] sm:$0xff]
      %v650 = vld [vmem:[%s635 + $0x70] sm:$0xff]
      %v651 = vld [vmem:[%s635 + $0x78] sm:$0xff]
      %v652 = vpack.c.bf16 %v637, %v636
      %v653 = vpack.c.bf16 %v639, %v638
      %v654 = vpack.c.bf16 %v641, %v640
      %v655 = vpack.c.bf16 %v643, %v642
      %v656 = vpack.c.bf16 %v645, %v644
      %v657 = vpack.c.bf16 %v647, %v646
      %v658 = vpack.c.bf16 %v649, %v648
      %v659 = vpack.c.bf16 %v651, %v650
      %s660 = scalar_lea.vmem %s2, 4
      %v661 = vld [vmem:[%s660] sm:$0x3]
      %v663 = vsel %vm385, %v652, 0
      %v666 = vsel %vm385, %v653, 0
      %v669 = vsel %vm385, %v654, 0
      %v672 = vsel %vm385, %v655, 0
      %v675 = vsel %vm385, %v656, 0
      %v678 = vsel %vm385, %v657, 0
      %v681 = vsel %vm385, %v658, 0
      %v684 = vsel %vm385, %v659, 0
      %v687 = vsel %vm410, %v661, 0
      %689 = vmatprep.subr.bf16.mxu0 0
      %690 = vmatpush1.bf16.msra.mxu0 %v687
      %691 = vmatprep.subr.bf16.mxu0 0
      %692 = vmatpush1.bf16.msra.mxu0 0
      %693 = vmatprep.subr.bf16.mxu0 0
      %694 = vmatpush1.bf16.msra.mxu0 0
      %695 = vmatprep.subr.bf16.mxu0 0
      %696 = vmatpush1.bf16.msra.mxu0 0
      %697 = vmatprep.subr.bf16.mxu0 0
      %698 = vmatpush1.bf16.msra.mxu0 0
      %699 = vmatprep.subr.bf16.mxu0 0
      %700 = vmatpush1.bf16.msra.mxu0 0
      %701 = vmatprep.subr.bf16.mxu0 0
      %702 = vmatpush1.bf16.msra.mxu0 0
      %703 = vmatprep.subr.bf16.mxu0 0
      %704 = vmatpush1.bf16.msra.mxu0 0
      %705 = vmatprep.subr.bf16.mxu0 0
      %706 = vmatpush1.bf16.msra.mxu0 0
      %707 = vmatprep.subr.bf16.mxu0 0
      %708 = vmatpush1.bf16.msra.mxu0 0
      %709 = vmatprep.subr.bf16.mxu0 0
      %710 = vmatpush1.bf16.msra.mxu0 0
      %711 = vmatprep.subr.bf16.mxu0 0
      %712 = vmatpush1.bf16.msra.mxu0 0
      %713 = vmatprep.subr.bf16.mxu0 0
      %714 = vmatpush1.bf16.msra.mxu0 0
      %715 = vmatprep.subr.bf16.mxu0 0
      %716 = vmatpush1.bf16.msra.mxu0 0
      %717 = vmatprep.subr.bf16.mxu0 0
      %718 = vmatpush1.bf16.msra.mxu0 0
      %719 = vmatprep.subr.bf16.mxu0 0
      %720 = vmatpush1.bf16.msra.mxu0 0
      %721 = vmatprep.mubr.bf16.mxu0 0
      %722 = vmatmul.mubr.bf16.gmra.mrb[0].mxu0 %v663
      %v723 = vpop.f32.mrb[0].mxu0
      %v724 = vadd.f32 0.0, %v723
      %v725 = vpop.f32.mrb[0].mxu0
      %v726 = vpop.f32.mrb[0].mxu0
      %v727 = vadd.f32 0.0, %v726
      %v728 = vpop.f32.mrb[0].mxu0
      %729 = vmatprep.mubr.bf16.mxu0 0
      %730 = vmatmul.mubr.bf16.gmra.mrb[0].mxu0 %v666
      %v731 = vpop.f32.mrb[0].mxu0
      %v732 = vadd.f32 0.0, %v731
      %v733 = vpop.f32.mrb[0].mxu0
      %v734 = vpop.f32.mrb[0].mxu0
      %v735 = vadd.f32 0.0, %v734
      %v736 = vpop.f32.mrb[0].mxu0
      %737 = vmatprep.mubr.bf16.mxu0 0
      %738 = vmatmul.mubr.bf16.gmra.mrb[0].mxu0 %v669
      %v739 = vpop.f32.mrb[0].mxu0
      %v740 = vadd.f32 0.0, %v739
      %v741 = vpop.f32.mrb[0].mxu0
      %v742 = vpop.f32.mrb[0].mxu0
      %v743 = vadd.f32 0.0, %v742
      %v744 = vpop.f32.mrb[0].mxu0
      %745 = vmatprep.mubr.bf16.mxu0 0
      %746 = vmatmul.mubr.bf16.gmra.mrb[0].mxu0 %v672
      %v747 = vpop.f32.mrb[0].mxu0
      %v748 = vadd.f32 0.0, %v747
      %v749 = vpop.f32.mrb[0].mxu0
      %v750 = vpop.f32.mrb[0].mxu0
      %v751 = vadd.f32 0.0, %v750
      %v752 = vpop.f32.mrb[0].mxu0
      %753 = vmatprep.mubr.bf16.mxu0 0
      %754 = vmatmul.mubr.bf16.gmra.mrb[0].mxu0 %v675
      %v755 = vpop.f32.mrb[0].mxu0
      %v756 = vadd.f32 0.0, %v755
      %v757 = vpop.f32.mrb[0].mxu0
      %v758 = vpop.f32.mrb[0].mxu0
      %v759 = vadd.f32 0.0, %v758
      %v760 = vpop.f32.mrb[0].mxu0
      %761 = vmatprep.mubr.bf16.mxu0 0
      %762 = vmatmul.mubr.bf16.gmra.mrb[0].mxu0 %v678
      %v763 = vpop.f32.mrb[0].mxu0
      %v764 = vadd.f32 0.0, %v763
      %v765 = vpop.f32.mrb[0].mxu0
      %v766 = vpop.f32.mrb[0].mxu0
      %v767 = vadd.f32 0.0, %v766
      %v768 = vpop.f32.mrb[0].mxu0
      %769 = vmatprep.mubr.bf16.mxu0 0
      %770 = vmatmul.mubr.bf16.gmra.mrb[0].mxu0 %v681
      %v771 = vpop.f32.mrb[0].mxu0
      %v772 = vadd.f32 0.0, %v771
      %v773 = vpop.f32.mrb[0].mxu0
      %v774 = vpop.f32.mrb[0].mxu0
      %v775 = vadd.f32 0.0, %v774
      %v776 = vpop.f32.mrb[0].mxu0
      %777 = vmatprep.mubr.bf16.mxu0 0
      %778 = vmatmul.mubr.bf16.gmra.mrb[0].mxu0 %v684
      %v779 = vpop.f32.mrb[0].mxu0
      %v780 = vadd.f32 0.0, %v779
      %v781 = vpop.f32.mrb[0].mxu0
      %v782 = vpop.f32.mrb[0].mxu0
      %v783 = vadd.f32 0.0, %v782
      %v784 = vpop.f32.mrb[0].mxu0
      %785 = vdwg.mxu0
      %v786 = vadd.f32 %v573, %v724
      %v787 = vadd.f32 %v576, %v727
      %v788 = vadd.f32 %v581, %v732
      %v789 = vadd.f32 %v584, %v735
      %v790 = vadd.f32 %v589, %v740
      %v791 = vadd.f32 %v592, %v743
      %v792 = vadd.f32 %v597, %v748
      %v793 = vadd.f32 %v600, %v751
      %v794 = vadd.f32 %v605, %v756
      %v795 = vadd.f32 %v608, %v759
      %v796 = vadd.f32 %v613, %v764
      %v797 = vadd.f32 %v616, %v767
      %v798 = vadd.f32 %v621, %v772
      %v799 = vadd.f32 %v624, %v775
      %v800 = vadd.f32 %v629, %v780
      %v801 = vadd.f32 %v632, %v783
      %s802 = scalar_lea.vmem %s308, 8
      %v803 = vld [vmem:[%s802] sm:$0xff]
      %v804 = vld [vmem:[%s802 + $0x8] sm:$0xff]
      %v805 = vld [vmem:[%s802 + $0x10] sm:$0xff]
      %v806 = vld [vmem:[%s802 + $0x18] sm:$0xff]
      %v807 = vld [vmem:[%s802 + $0x20] sm:$0xff]
      %v808 = vld [vmem:[%s802 + $0x28] sm:$0xff]
      %v809 = vld [vmem:[%s802 + $0x30] sm:$0xff]
      %v810 = vld [vmem:[%s802 + $0x38] sm:$0xff]
      %v811 = vld [vmem:[%s802 + $0x40] sm:$0xff]
      %v812 = vld [vmem:[%s802 + $0x48] sm:$0xff]
      %v813 = vld [vmem:[%s802 + $0x50] sm:$0xff]
      %v814 = vld [vmem:[%s802 + $0x58] sm:$0xff]
      %v815 = vld [vmem:[%s802 + $0x60] sm:$0xff]
      %v816 = vld [vmem:[%s802 + $0x68] sm:$0xff]
      %v817 = vld [vmem:[%s802 + $0x70] sm:$0xff]
      %v818 = vld [vmem:[%s802 + $0x78] sm:$0xff]
      %v819 = vpack.c.bf16 %v804, %v803
      %v820 = vpack.c.bf16 %v806, %v805
      %v821 = vpack.c.bf16 %v808, %v807
      %v822 = vpack.c.bf16 %v810, %v809
      %v823 = vpack.c.bf16 %v812, %v811
      %v824 = vpack.c.bf16 %v814, %v813
      %v825 = vpack.c.bf16 %v816, %v815
      %v826 = vpack.c.bf16 %v818, %v817
      %s827 = scalar_lea.vmem %s2, 6
      %v828 = vld [vmem:[%s827] sm:$0x3]
      %v830 = vsel %vm385, %v819, 0
      %v833 = vsel %vm385, %v820, 0
      %v836 = vsel %vm385, %v821, 0
      %v839 = vsel %vm385, %v822, 0
      %v842 = vsel %vm385, %v823, 0
      %v845 = vsel %vm385, %v824, 0
      %v848 = vsel %vm385, %v825, 0
      %v851 = vsel %vm385, %v826, 0
      %v854 = vsel %vm410, %v828, 0
      %856 = vmatprep.subr.bf16.mxu0 0
      %857 = vmatpush1.bf16.msra.mxu0 %v854
      %858 = vmatprep.subr.bf16.mxu0 0
      %859 = vmatpush1.bf16.msra.mxu0 0
      %860 = vmatprep.subr.bf16.mxu0 0
      %861 = vmatpush1.bf16.msra.mxu0 0
      %862 = vmatprep.subr.bf16.mxu0 0
      %863 = vmatpush1.bf16.msra.mxu0 0
      %864 = vmatprep.subr.bf16.mxu0 0
      %865 = vmatpush1.bf16.msra.mxu0 0
      %866 = vmatprep.subr.bf16.mxu0 0
      %867 = vmatpush1.bf16.msra.mxu0 0
      %868 = vmatprep.subr.bf16.mxu0 0
      %869 = vmatpush1.bf16.msra.mxu0 0
      %870 = vmatprep.subr.bf16.mxu0 0
      %871 = vmatpush1.bf16.msra.mxu0 0
      %872 = vmatprep.subr.bf16.mxu0 0
      %873 = vmatpush1.bf16.msra.mxu0 0
      %874 = vmatprep.subr.bf16.mxu0 0
      %875 = vmatpush1.bf16.msra.mxu0 0
      %876 = vmatprep.subr.bf16.mxu0 0
      %877 = vmatpush1.bf16.msra.mxu0 0
      %878 = vmatprep.subr.bf16.mxu0 0
      %879 = vmatpush1.bf16.msra.mxu0 0
      %880 = vmatprep.subr.bf16.mxu0 0
      %881 = vmatpush1.bf16.msra.mxu0 0
      %882 = vmatprep.subr.bf16.mxu0 0
      %883 = vmatpush1.bf16.msra.mxu0 0
      %884 = vmatprep.subr.bf16.mxu0 0
      %885 = vmatpush1.bf16.msra.mxu0 0
      %886 = vmatprep.subr.bf16.mxu0 0
      %887 = vmatpush1.bf16.msra.mxu0 0
      %888 = vmatprep.mubr.bf16.mxu0 0
      %889 = vmatmul.mubr.bf16.gmra.mrb[0].mxu0 %v830
      %v890 = vpop.f32.mrb[0].mxu0
      %v891 = vadd.f32 0.0, %v890
      %v892 = vpop.f32.mrb[0].mxu0
      %v893 = vpop.f32.mrb[0].mxu0
      %v894 = vadd.f32 0.0, %v893
      %v895 = vpop.f32.mrb[0].mxu0
      %896 = vmatprep.mubr.bf16.mxu0 0
      %897 = vmatmul.mubr.bf16.gmra.mrb[0].mxu0 %v833
      %v898 = vpop.f32.mrb[0].mxu0
      %v899 = vadd.f32 0.0, %v898
      %v900 = vpop.f32.mrb[0].mxu0
      %v901 = vpop.f32.mrb[0].mxu0
      %v902 = vadd.f32 0.0, %v901
      %v903 = vpop.f32.mrb[0].mxu0
      %904 = vmatprep.mubr.bf16.mxu0 0
      %905 = vmatmul.mubr.bf16.gmra.mrb[0].mxu0 %v836
      %v906 = vpop.f32.mrb[0].mxu0
      %v907 = vadd.f32 0.0, %v906
      %v908 = vpop.f32.mrb[0].mxu0
      %v909 = vpop.f32.mrb[0].mxu0
      %v910 = vadd.f32 0.0, %v909
      %v911 = vpop.f32.mrb[0].mxu0
      %912 = vmatprep.mubr.bf16.mxu0 0
      %913 = vmatmul.mubr.bf16.gmra.mrb[0].mxu0 %v839
      %v914 = vpop.f32.mrb[0].mxu0
      %v915 = vadd.f32 0.0, %v914
      %v916 = vpop.f32.mrb[0].mxu0
      %v917 = vpop.f32.mrb[0].mxu0
      %v918 = vadd.f32 0.0, %v917
      %v919 = vpop.f32.mrb[0].mxu0
      %920 = vmatprep.mubr.bf16.mxu0 0
      %921 = vmatmul.mubr.bf16.gmra.mrb[0].mxu0 %v842
      %v922 = vpop.f32.mrb[0].mxu0
      %v923 = vadd.f32 0.0, %v922
      %v924 = vpop.f32.mrb[0].mxu0
      %v925 = vpop.f32.mrb[0].mxu0
      %v926 = vadd.f32 0.0, %v925
      %v927 = vpop.f32.mrb[0].mxu0
      %928 = vmatprep.mubr.bf16.mxu0 0
      %929 = vmatmul.mubr.bf16.gmra.mrb[0].mxu0 %v845
      %v930 = vpop.f32.mrb[0].mxu0
      %v931 = vadd.f32 0.0, %v930
      %v932 = vpop.f32.mrb[0].mxu0
      %v933 = vpop.f32.mrb[0].mxu0
      %v934 = vadd.f32 0.0, %v933
      %v935 = vpop.f32.mrb[0].mxu0
      %936 = vmatprep.mubr.bf16.mxu0 0
      %937 = vmatmul.mubr.bf16.gmra.mrb[0].mxu0 %v848
      %v938 = vpop.f32.mrb[0].mxu0
      %v939 = vadd.f32 0.0, %v938
      %v940 = vpop.f32.mrb[0].mxu0
      %v941 = vpop.f32.mrb[0].mxu0
      %v942 = vadd.f32 0.0, %v941
      %v943 = vpop.f32.mrb[0].mxu0
      %944 = vmatprep.mubr.bf16.mxu0 0
      %945 = vmatmul.mubr.bf16.gmra.mrb[0].mxu0 %v851
      %v946 = vpop.f32.mrb[0].mxu0
      %v947 = vadd.f32 0.0, %v946
      %v948 = vpop.f32.mrb[0].mxu0
      %v949 = vpop.f32.mrb[0].mxu0
      %v950 = vadd.f32 0.0, %v949
      %v951 = vpop.f32.mrb[0].mxu0
      %952 = vdwg.mxu0
      %v953 = vadd.f32 %v786, %v891
      %v954 = vadd.f32 %v787, %v894
      %v955 = vadd.f32 %v788, %v899
      %v956 = vadd.f32 %v789, %v902
      %v957 = vadd.f32 %v790, %v907
      %v958 = vadd.f32 %v791, %v910
      %v959 = vadd.f32 %v792, %v915
      %v960 = vadd.f32 %v793, %v918
      %v961 = vadd.f32 %v794, %v923
      %v962 = vadd.f32 %v795, %v926
      %v963 = vadd.f32 %v796, %v931
      %v964 = vadd.f32 %v797, %v934
      %v965 = vadd.f32 %v798, %v939
      %v966 = vadd.f32 %v799, %v942
      %v967 = vadd.f32 %v800, %v947
      %v968 = vadd.f32 %v801, %v950
      %s969 = scalar_lea.vmem %s308, 152
      %v970 = vld [vmem:[%s969] sm:$0xff]
      %v971 = vld [vmem:[%s969 + $0x8] sm:$0xff]
      %v972 = vld [vmem:[%s969 + $0x10] sm:$0xff]
      %v973 = vld [vmem:[%s969 + $0x18] sm:$0xff]
      %v974 = vld [vmem:[%s969 + $0x20] sm:$0xff]
      %v975 = vld [vmem:[%s969 + $0x28] sm:$0xff]
      %v976 = vld [vmem:[%s969 + $0x30] sm:$0xff]
      %v977 = vld [vmem:[%s969 + $0x38] sm:$0xff]
      %v978 = vld [vmem:[%s969 + $0x40] sm:$0xff]
      %v979 = vld [vmem:[%s969 + $0x48] sm:$0xff]
      %v980 = vld [vmem:[%s969 + $0x50] sm:$0xff]
      %v981 = vld [vmem:[%s969 + $0x58] sm:$0xff]
      %v982 = vld [vmem:[%s969 + $0x60] sm:$0xff]
      %v983 = vld [vmem:[%s969 + $0x68] sm:$0xff]
      %v984 = vld [vmem:[%s969 + $0x70] sm:$0xff]
      %v985 = vld [vmem:[%s969 + $0x78] sm:$0xff]
      %v986 = vpack.c.bf16 %v971, %v970
      %v987 = vpack.c.bf16 %v973, %v972
      %v988 = vpack.c.bf16 %v975, %v974
      %v989 = vpack.c.bf16 %v977, %v976
      %v990 = vpack.c.bf16 %v979, %v978
      %v991 = vpack.c.bf16 %v981, %v980
      %v992 = vpack.c.bf16 %v983, %v982
      %v993 = vpack.c.bf16 %v985, %v984
      %s994 = scalar_lea.vmem %s2, 8
      %v995 = vld [vmem:[%s994] sm:$0x3]
      %v997 = vsel %vm385, %v986, 0
      %v1000 = vsel %vm385, %v987, 0
      %v1003 = vsel %vm385, %v988, 0
      %v1006 = vsel %vm385, %v989, 0
      %v1009 = vsel %vm385, %v990, 0
      %v1012 = vsel %vm385, %v991, 0
      %v1015 = vsel %vm385, %v992, 0
      %v1018 = vsel %vm385, %v993, 0
      %v1021 = vsel %vm410, %v995, 0
      %1023 = vmatprep.subr.bf16.mxu0 0
      %1024 = vmatpush1.bf16.msra.mxu0 %v1021
      %1025 = vmatprep.subr.bf16.mxu0 0
      %1026 = vmatpush1.bf16.msra.mxu0 0
      %1027 = vmatprep.subr.bf16.mxu0 0
      %1028 = vmatpush1.bf16.msra.mxu0 0
      %1029 = vmatprep.subr.bf16.mxu0 0
      %1030 = vmatpush1.bf16.msra.mxu0 0
      %1031 = vmatprep.subr.bf16.mxu0 0
      %1032 = vmatpush1.bf16.msra.mxu0 0
      %1033 = vmatprep.subr.bf16.mxu0 0
      %1034 = vmatpush1.bf16.msra.mxu0 0
      %1035 = vmatprep.subr.bf16.mxu0 0
      %1036 = vmatpush1.bf16.msra.mxu0 0
      %1037 = vmatprep.subr.bf16.mxu0 0
      %1038 = vmatpush1.bf16.msra.mxu0 0
      %1039 = vmatprep.subr.bf16.mxu0 0
      %1040 = vmatpush1.bf16.msra.mxu0 0
      %1041 = vmatprep.subr.bf16.mxu0 0
      %1042 = vmatpush1.bf16.msra.mxu0 0
      %1043 = vmatprep.subr.bf16.mxu0 0
      %1044 = vmatpush1.bf16.msra.mxu0 0
      %1045 = vmatprep.subr.bf16.mxu0 0
      %1046 = vmatpush1.bf16.msra.mxu0 0
      %1047 = vmatprep.subr.bf16.mxu0 0
      %1048 = vmatpush1.bf16.msra.mxu0 0
      %1049 = vmatprep.subr.bf16.mxu0 0
      %1050 = vmatpush1.bf16.msra.mxu0 0
      %1051 = vmatprep.subr.bf16.mxu0 0
      %1052 = vmatpush1.bf16.msra.mxu0 0
      %1053 = vmatprep.subr.bf16.mxu0 0
      %1054 = vmatpush1.bf16.msra.mxu0 0
      %1055 = vmatprep.mubr.bf16.mxu0 0
      %1056 = vmatmul.mubr.bf16.gmra.mrb[0].mxu0 %v997
      %v1057 = vpop.f32.mrb[0].mxu0
      %v1058 = vadd.f32 0.0, %v1057
      %v1059 = vpop.f32.mrb[0].mxu0
      %v1060 = vpop.f32.mrb[0].mxu0
      %v1061 = vadd.f32 0.0, %v1060
      %v1062 = vpop.f32.mrb[0].mxu0
      %1063 = vmatprep.mubr.bf16.mxu0 0
      %1064 = vmatmul.mubr.bf16.gmra.mrb[0].mxu0 %v1000
      %v1065 = vpop.f32.mrb[0].mxu0
      %v1066 = vadd.f32 0.0, %v1065
      %v1067 = vpop.f32.mrb[0].mxu0
      %v1068 = vpop.f32.mrb[0].mxu0
      %v1069 = vadd.f32 0.0, %v1068
      %v1070 = vpop.f32.mrb[0].mxu0
      %1071 = vmatprep.mubr.bf16.mxu0 0
      %1072 = vmatmul.mubr.bf16.gmra.mrb[0].mxu0 %v1003
      %v1073 = vpop.f32.mrb[0].mxu0
      %v1074 = vadd.f32 0.0, %v1073
      %v1075 = vpop.f32.mrb[0].mxu0
      %v1076 = vpop.f32.mrb[0].mxu0
      %v1077 = vadd.f32 0.0, %v1076
      %v1078 = vpop.f32.mrb[0].mxu0
      %1079 = vmatprep.mubr.bf16.mxu0 0
      %1080 = vmatmul.mubr.bf16.gmra.mrb[0].mxu0 %v1006
      %v1081 = vpop.f32.mrb[0].mxu0
      %v1082 = vadd.f32 0.0, %v1081
      %v1083 = vpop.f32.mrb[0].mxu0
      %v1084 = vpop.f32.mrb[0].mxu0
      %v1085 = vadd.f32 0.0, %v1084
      %v1086 = vpop.f32.mrb[0].mxu0
      %1087 = vmatprep.mubr.bf16.mxu0 0
      %1088 = vmatmul.mubr.bf16.gmra.mrb[0].mxu0 %v1009
      %v1089 = vpop.f32.mrb[0].mxu0
      %v1090 = vadd.f32 0.0, %v1089
      %v1091 = vpop.f32.mrb[0].mxu0
      %v1092 = vpop.f32.mrb[0].mxu0
      %v1093 = vadd.f32 0.0, %v1092
      %v1094 = vpop.f32.mrb[0].mxu0
      %1095 = vmatprep.mubr.bf16.mxu0 0
      %1096 = vmatmul.mubr.bf16.gmra.mrb[0].mxu0 %v1012
      %v1097 = vpop.f32.mrb[0].mxu0
      %v1098 = vadd.f32 0.0, %v1097
      %v1099 = vpop.f32.mrb[0].mxu0
      %v1100 = vpop.f32.mrb[0].mxu0
      %v1101 = vadd.f32 0.0, %v1100
      %v1102 = vpop.f32.mrb[0].mxu0
      %1103 = vmatprep.mubr.bf16.mxu0 0
      %1104 = vmatmul.mubr.bf16.gmra.mrb[0].mxu0 %v1015
      %v1105 = vpop.f32.mrb[0].mxu0
      %v1106 = vadd.f32 0.0, %v1105
      %v1107 = vpop.f32.mrb[0].mxu0
      %v1108 = vpop.f32.mrb[0].mxu0
      %v1109 = vadd.f32 0.0, %v1108
      %v1110 = vpop.f32.mrb[0].mxu0
      %1111 = vmatprep.mubr.bf16.mxu0 0
      %1112 = vmatmul.mubr.bf16.gmra.mrb[0].mxu0 %v1018
      %v1113 = vpop.f32.mrb[0].mxu0
      %v1114 = vadd.f32 0.0, %v1113
      %v1115 = vpop.f32.mrb[0].mxu0
      %v1116 = vpop.f32.mrb[0].mxu0
      %v1117 = vadd.f32 0.0, %v1116
      %v1118 = vpop.f32.mrb[0].mxu0
      %1119 = vdwg.mxu0
      %v1120 = vadd.f32 %v953, %v1058
      %v1121 = vadd.f32 %v954, %v1061
      %v1122 = vadd.f32 %v955, %v1066
      %v1123 = vadd.f32 %v956, %v1069
      %v1124 = vadd.f32 %v957, %v1074
      %v1125 = vadd.f32 %v958, %v1077
      %v1126 = vadd.f32 %v959, %v1082
      %v1127 = vadd.f32 %v960, %v1085
      %v1128 = vadd.f32 %v961, %v1090
      %v1129 = vadd.f32 %v962, %v1093
      %v1130 = vadd.f32 %v963, %v1098
      %v1131 = vadd.f32 %v964, %v1101
      %v1132 = vadd.f32 %v965, %v1106
      %v1133 = vadd.f32 %v966, %v1109
      %v1134 = vadd.f32 %v967, %v1114
      %v1135 = vadd.f32 %v968, %v1117
      %s1136 = scalar_lea.vmem %s308, 296
      %v1137 = vld [vmem:[%s1136] sm:$0xff]
      %v1138 = vld [vmem:[%s1136 + $0x8] sm:$0xff]
      %v1139 = vld [vmem:[%s1136 + $0x10] sm:$0xff]
      %v1140 = vld [vmem:[%s1136 + $0x18] sm:$0xff]
      %v1141 = vld [vmem:[%s1136 + $0x20] sm:$0xff]
      %v1142 = vld [vmem:[%s1136 + $0x28] sm:$0xff]
      %v1143 = vld [vmem:[%s1136 + $0x30] sm:$0xff]
      %v1144 = vld [vmem:[%s1136 + $0x38] sm:$0xff]
      %v1145 = vld [vmem:[%s1136 + $0x40] sm:$0xff]
      %v1146 = vld [vmem:[%s1136 + $0x48] sm:$0xff]
      %v1147 = vld [vmem:[%s1136 + $0x50] sm:$0xff]
      %v1148 = vld [vmem:[%s1136 + $0x58] sm:$0xff]
      %v1149 = vld [vmem:[%s1136 + $0x60] sm:$0xff]
      %v1150 = vld [vmem:[%s1136 + $0x68] sm:$0xff]
      %v1151 = vld [vmem:[%s1136 + $0x70] sm:$0xff]
      %v1152 = vld [vmem:[%s1136 + $0x78] sm:$0xff]
      %v1153 = vpack.c.bf16 %v1138, %v1137
      %v1154 = vpack.c.bf16 %v1140, %v1139
      %v1155 = vpack.c.bf16 %v1142, %v1141
      %v1156 = vpack.c.bf16 %v1144, %v1143
      %v1157 = vpack.c.bf16 %v1146, %v1145
      %v1158 = vpack.c.bf16 %v1148, %v1147
      %v1159 = vpack.c.bf16 %v1150, %v1149
      %v1160 = vpack.c.bf16 %v1152, %v1151
      %s1161 = scalar_lea.vmem %s2, 10
      %v1162 = vld [vmem:[%s1161] sm:$0x3]
      %v1164 = vsel %vm385, %v1153, 0
      %v1167 = vsel %vm385, %v1154, 0
      %v1170 = vsel %vm385, %v1155, 0
      %v1173 = vsel %vm385, %v1156, 0
      %v1176 = vsel %vm385, %v1157, 0
      %v1179 = vsel %vm385, %v1158, 0
      %v1182 = vsel %vm385, %v1159, 0
      %v1185 = vsel %vm385, %v1160, 0
      %v1188 = vsel %vm410, %v1162, 0
      %1190 = vmatprep.subr.bf16.mxu0 0
      %1191 = vmatpush1.bf16.msra.mxu0 %v1188
      %1192 = vmatprep.subr.bf16.mxu0 0
      %1193 = vmatpush1.bf16.msra.mxu0 0
      %1194 = vmatprep.subr.bf16.mxu0 0
      %1195 = vmatpush1.bf16.msra.mxu0 0
      %1196 = vmatprep.subr.bf16.mxu0 0
      %1197 = vmatpush1.bf16.msra.mxu0 0
      %1198 = vmatprep.subr.bf16.mxu0 0
      %1199 = vmatpush1.bf16.msra.mxu0 0
      %1200 = vmatprep.subr.bf16.mxu0 0
      %1201 = vmatpush1.bf16.msra.mxu0 0
      %1202 = vmatprep.subr.bf16.mxu0 0
      %1203 = vmatpush1.bf16.msra.mxu0 0
      %1204 = vmatprep.subr.bf16.mxu0 0
      %1205 = vmatpush1.bf16.msra.mxu0 0
      %1206 = vmatprep.subr.bf16.mxu0 0
      %1207 = vmatpush1.bf16.msra.mxu0 0
      %1208 = vmatprep.subr.bf16.mxu0 0
      %1209 = vmatpush1.bf16.msra.mxu0 0
      %1210 = vmatprep.subr.bf16.mxu0 0
      %1211 = vmatpush1.bf16.msra.mxu0 0
      %1212 = vmatprep.subr.bf16.mxu0 0
      %1213 = vmatpush1.bf16.msra.mxu0 0
      %1214 = vmatprep.subr.bf16.mxu0 0
      %1215 = vmatpush1.bf16.msra.mxu0 0
      %1216 = vmatprep.subr.bf16.mxu0 0
      %1217 = vmatpush1.bf16.msra.mxu0 0
      %1218 = vmatprep.subr.bf16.mxu0 0
      %1219 = vmatpush1.bf16.msra.mxu0 0
      %1220 = vmatprep.subr.bf16.mxu0 0
      %1221 = vmatpush1.bf16.msra.mxu0 0
      %1222 = vmatprep.mubr.bf16.mxu0 0
      %1223 = vmatmul.mubr.bf16.gmra.mrb[0].mxu0 %v1164
      %v1224 = vpop.f32.mrb[0].mxu0
      %v1225 = vadd.f32 0.0, %v1224
      %v1226 = vpop.f32.mrb[0].mxu0
      %v1227 = vpop.f32.mrb[0].mxu0
      %v1228 = vadd.f32 0.0, %v1227
      %v1229 = vpop.f32.mrb[0].mxu0
      %1230 = vmatprep.mubr.bf16.mxu0 0
      %1231 = vmatmul.mubr.bf16.gmra.mrb[0].mxu0 %v1167
      %v1232 = vpop.f32.mrb[0].mxu0
      %v1233 = vadd.f32 0.0, %v1232
      %v1234 = vpop.f32.mrb[0].mxu0
      %v1235 = vpop.f32.mrb[0].mxu0
      %v1236 = vadd.f32 0.0, %v1235
      %v1237 = vpop.f32.mrb[0].mxu0
      %1238 = vmatprep.mubr.bf16.mxu0 0
      %1239 = vmatmul.mubr.bf16.gmra.mrb[0].mxu0 %v1170
      %v1240 = vpop.f32.mrb[0].mxu0
      %v1241 = vadd.f32 0.0, %v1240
      %v1242 = vpop.f32.mrb[0].mxu0
      %v1243 = vpop.f32.mrb[0].mxu0
      %v1244 = vadd.f32 0.0, %v1243
      %v1245 = vpop.f32.mrb[0].mxu0
      %1246 = vmatprep.mubr.bf16.mxu0 0
      %1247 = vmatmul.mubr.bf16.gmra.mrb[0].mxu0 %v1173
      %v1248 = vpop.f32.mrb[0].mxu0
      %v1249 = vadd.f32 0.0, %v1248
      %v1250 = vpop.f32.mrb[0].mxu0
      %v1251 = vpop.f32.mrb[0].mxu0
      %v1252 = vadd.f32 0.0, %v1251
      %v1253 = vpop.f32.mrb[0].mxu0
      %1254 = vmatprep.mubr.bf16.mxu0 0
      %1255 = vmatmul.mubr.bf16.gmra.mrb[0].mxu0 %v1176
      %v1256 = vpop.f32.mrb[0].mxu0
      %v1257 = vadd.f32 0.0, %v1256
      %v1258 = vpop.f32.mrb[0].mxu0
      %v1259 = vpop.f32.mrb[0].mxu0
      %v1260 = vadd.f32 0.0, %v1259
      %v1261 = vpop.f32.mrb[0].mxu0
      %1262 = vmatprep.mubr.bf16.mxu0 0
      %1263 = vmatmul.mubr.bf16.gmra.mrb[0].mxu0 %v1179
      %v1264 = vpop.f32.mrb[0].mxu0
      %v1265 = vadd.f32 0.0, %v1264
      %v1266 = vpop.f32.mrb[0].mxu0
      %v1267 = vpop.f32.mrb[0].mxu0
      %v1268 = vadd.f32 0.0, %v1267
      %v1269 = vpop.f32.mrb[0].mxu0
      %1270 = vmatprep.mubr.bf16.mxu0 0
      %1271 = vmatmul.mubr.bf16.gmra.mrb[0].mxu0 %v1182
      %v1272 = vpop.f32.mrb[0].mxu0
      %v1273 = vadd.f32 0.0, %v1272
      %v1274 = vpop.f32.mrb[0].mxu0
      %v1275 = vpop.f32.mrb[0].mxu0
      %v1276 = vadd.f32 0.0, %v1275
      %v1277 = vpop.f32.mrb[0].mxu0
      %1278 = vmatprep.mubr.bf16.mxu0 0
      %1279 = vmatmul.mubr.bf16.gmra.mrb[0].mxu0 %v1185
      %v1280 = vpop.f32.mrb[0].mxu0
      %v1281 = vadd.f32 0.0, %v1280
      %v1282 = vpop.f32.mrb[0].mxu0
      %v1283 = vpop.f32.mrb[0].mxu0
      %v1284 = vadd.f32 0.0, %v1283
      %v1285 = vpop.f32.mrb[0].mxu0
      %1286 = vdwg.mxu0
      %v1287 = vadd.f32 %v1120, %v1225
      %v1288 = vadd.f32 %v1121, %v1228
      %v1289 = vadd.f32 %v1122, %v1233
      %v1290 = vadd.f32 %v1123, %v1236
      %v1291 = vadd.f32 %v1124, %v1241
      %v1292 = vadd.f32 %v1125, %v1244
      %v1293 = vadd.f32 %v1126, %v1249
      %v1294 = vadd.f32 %v1127, %v1252
      %v1295 = vadd.f32 %v1128, %v1257
      %v1296 = vadd.f32 %v1129, %v1260
      %v1297 = vadd.f32 %v1130, %v1265
      %v1298 = vadd.f32 %v1131, %v1268
      %v1299 = vadd.f32 %v1132, %v1273
      %v1300 = vadd.f32 %v1133, %v1276
      %v1301 = vadd.f32 %v1134, %v1281
      %v1302 = vadd.f32 %v1135, %v1284
      %s1303 = scalar_lea.vmem %s308, 16
      %v1304 = vld [vmem:[%s1303] sm:$0xff]
      %v1305 = vld [vmem:[%s1303 + $0x8] sm:$0xff]
      %v1306 = vld [vmem:[%s1303 + $0x10] sm:$0xff]
      %v1307 = vld [vmem:[%s1303 + $0x18] sm:$0xff]
      %v1308 = vld [vmem:[%s1303 + $0x20] sm:$0xff]
      %v1309 = vld [vmem:[%s1303 + $0x28] sm:$0xff]
      %v1310 = vld [vmem:[%s1303 + $0x30] sm:$0xff]
      %v1311 = vld [vmem:[%s1303 + $0x38] sm:$0xff]
      %v1312 = vld [vmem:[%s1303 + $0x40] sm:$0xff]
      %v1313 = vld [vmem:[%s1303 + $0x48] sm:$0xff]
      %v1314 = vld [vmem:[%s1303 + $0x50] sm:$0xff]
      %v1315 = vld [vmem:[%s1303 + $0x58] sm:$0xff]
      %v1316 = vld [vmem:[%s1303 + $0x60] sm:$0xff]
      %v1317 = vld [vmem:[%s1303 + $0x68] sm:$0xff]
      %v1318 = vld [vmem:[%s1303 + $0x70] sm:$0xff]
      %v1319 = vld [vmem:[%s1303 + $0x78] sm:$0xff]
      %v1320 = vpack.c.bf16 %v1305, %v1304
      %v1321 = vpack.c.bf16 %v1307, %v1306
      %v1322 = vpack.c.bf16 %v1309, %v1308
      %v1323 = vpack.c.bf16 %v1311, %v1310
      %v1324 = vpack.c.bf16 %v1313, %v1312
      %v1325 = vpack.c.bf16 %v1315, %v1314
      %v1326 = vpack.c.bf16 %v1317, %v1316
      %v1327 = vpack.c.bf16 %v1319, %v1318
      %s1328 = scalar_lea.vmem %s2, 12
      %v1329 = vld [vmem:[%s1328] sm:$0x3]
      %v1331 = vsel %vm385, %v1320, 0
      %v1334 = vsel %vm385, %v1321, 0
      %v1337 = vsel %vm385, %v1322, 0
      %v1340 = vsel %vm385, %v1323, 0
      %v1343 = vsel %vm385, %v1324, 0
      %v1346 = vsel %vm385, %v1325, 0
      %v1349 = vsel %vm385, %v1326, 0
      %v1352 = vsel %vm385, %v1327, 0
      %v1355 = vsel %vm410, %v1329, 0
      %1357 = vmatprep.subr.bf16.mxu0 0
      %1358 = vmatpush1.bf16.msra.mxu0 %v1355
      %1359 = vmatprep.subr.bf16.mxu0 0
      %1360 = vmatpush1.bf16.msra.mxu0 0
      %1361 = vmatprep.subr.bf16.mxu0 0
      %1362 = vmatpush1.bf16.msra.mxu0 0
      %1363 = vmatprep.subr.bf16.mxu0 0
      %1364 = vmatpush1.bf16.msra.mxu0 0
      %1365 = vmatprep.subr.bf16.mxu0 0
      %1366 = vmatpush1.bf16.msra.mxu0 0
      %1367 = vmatprep.subr.bf16.mxu0 0
      %1368 = vmatpush1.bf16.msra.mxu0 0
      %1369 = vmatprep.subr.bf16.mxu0 0
      %1370 = vmatpush1.bf16.msra.mxu0 0
      %1371 = vmatprep.subr.bf16.mxu0 0
      %1372 = vmatpush1.bf16.msra.mxu0 0
      %1373 = vmatprep.subr.bf16.mxu0 0
      %1374 = vmatpush1.bf16.msra.mxu0 0
      %1375 = vmatprep.subr.bf16.mxu0 0
      %1376 = vmatpush1.bf16.msra.mxu0 0
      %1377 = vmatprep.subr.bf16.mxu0 0
      %1378 = vmatpush1.bf16.msra.mxu0 0
      %1379 = vmatprep.subr.bf16.mxu0 0
      %1380 = vmatpush1.bf16.msra.mxu0 0
      %1381 = vmatprep.subr.bf16.mxu0 0
      %1382 = vmatpush1.bf16.msra.mxu0 0
      %1383 = vmatprep.subr.bf16.mxu0 0
      %1384 = vmatpush1.bf16.msra.mxu0 0
      %1385 = vmatprep.subr.bf16.mxu0 0
      %1386 = vmatpush1.bf16.msra.mxu0 0
      %1387 = vmatprep.subr.bf16.mxu0 0
      %1388 = vmatpush1.bf16.msra.mxu0 0
      %1389 = vmatprep.mubr.bf16.mxu0 0
      %1390 = vmatmul.mubr.bf16.gmra.mrb[0].mxu0 %v1331
      %v1391 = vpop.f32.mrb[0].mxu0
      %v1392 = vadd.f32 0.0, %v1391
      %v1393 = vpop.f32.mrb[0].mxu0
      %v1394 = vpop.f32.mrb[0].mxu0
      %v1395 = vadd.f32 0.0, %v1394
      %v1396 = vpop.f32.mrb[0].mxu0
      %1397 = vmatprep.mubr.bf16.mxu0 0
      %1398 = vmatmul.mubr.bf16.gmra.mrb[0].mxu0 %v1334
      %v1399 = vpop.f32.mrb[0].mxu0
      %v1400 = vadd.f32 0.0, %v1399
      %v1401 = vpop.f32.mrb[0].mxu0
      %v1402 = vpop.f32.mrb[0].mxu0
      %v1403 = vadd.f32 0.0, %v1402
      %v1404 = vpop.f32.mrb[0].mxu0
      %1405 = vmatprep.mubr.bf16.mxu0 0
      %1406 = vmatmul.mubr.bf16.gmra.mrb[0].mxu0 %v1337
      %v1407 = vpop.f32.mrb[0].mxu0
      %v1408 = vadd.f32 0.0, %v1407
      %v1409 = vpop.f32.mrb[0].mxu0
      %v1410 = vpop.f32.mrb[0].mxu0
      %v1411 = vadd.f32 0.0, %v1410
      %v1412 = vpop.f32.mrb[0].mxu0
      %1413 = vmatprep.mubr.bf16.mxu0 0
      %1414 = vmatmul.mubr.bf16.gmra.mrb[0].mxu0 %v1340
      %v1415 = vpop.f32.mrb[0].mxu0
      %v1416 = vadd.f32 0.0, %v1415
      %v1417 = vpop.f32.mrb[0].mxu0
      %v1418 = vpop.f32.mrb[0].mxu0
      %v1419 = vadd.f32 0.0, %v1418
      %v1420 = vpop.f32.mrb[0].mxu0
      %1421 = vmatprep.mubr.bf16.mxu0 0
      %1422 = vmatmul.mubr.bf16.gmra.mrb[0].mxu0 %v1343
      %v1423 = vpop.f32.mrb[0].mxu0
      %v1424 = vadd.f32 0.0, %v1423
      %v1425 = vpop.f32.mrb[0].mxu0
      %v1426 = vpop.f32.mrb[0].mxu0
      %v1427 = vadd.f32 0.0, %v1426
      %v1428 = vpop.f32.mrb[0].mxu0
      %1429 = vmatprep.mubr.bf16.mxu0 0
      %1430 = vmatmul.mubr.bf16.gmra.mrb[0].mxu0 %v1346
      %v1431 = vpop.f32.mrb[0].mxu0
      %v1432 = vadd.f32 0.0, %v1431
      %v1433 = vpop.f32.mrb[0].mxu0
      %v1434 = vpop.f32.mrb[0].mxu0
      %v1435 = vadd.f32 0.0, %v1434
      %v1436 = vpop.f32.mrb[0].mxu0
      %1437 = vmatprep.mubr.bf16.mxu0 0
      %1438 = vmatmul.mubr.bf16.gmra.mrb[0].mxu0 %v1349
      %v1439 = vpop.f32.mrb[0].mxu0
      %v1440 = vadd.f32 0.0, %v1439
      %v1441 = vpop.f32.mrb[0].mxu0
      %v1442 = vpop.f32.mrb[0].mxu0
      %v1443 = vadd.f32 0.0, %v1442
      %v1444 = vpop.f32.mrb[0].mxu0
      %1445 = vmatprep.mubr.bf16.mxu0 0
      %1446 = vmatmul.mubr.bf16.gmra.mrb[0].mxu0 %v1352
      %v1447 = vpop.f32.mrb[0].mxu0
      %v1448 = vadd.f32 0.0, %v1447
      %v1449 = vpop.f32.mrb[0].mxu0
      %v1450 = vpop.f32.mrb[0].mxu0
      %v1451 = vadd.f32 0.0, %v1450
      %v1452 = vpop.f32.mrb[0].mxu0
      %1453 = vdwg.mxu0
      %v1454 = vadd.f32 %v1287, %v1392
      %v1455 = vadd.f32 %v1288, %v1395
      %v1456 = vadd.f32 %v1289, %v1400
      %v1457 = vadd.f32 %v1290, %v1403
      %v1458 = vadd.f32 %v1291, %v1408
      %v1459 = vadd.f32 %v1292, %v1411
      %v1460 = vadd.f32 %v1293, %v1416
      %v1461 = vadd.f32 %v1294, %v1419
      %v1462 = vadd.f32 %v1295, %v1424
      %v1463 = vadd.f32 %v1296, %v1427
      %v1464 = vadd.f32 %v1297, %v1432
      %v1465 = vadd.f32 %v1298, %v1435
      %v1466 = vadd.f32 %v1299, %v1440
      %v1467 = vadd.f32 %v1300, %v1443
      %v1468 = vadd.f32 %v1301, %v1448
      %v1469 = vadd.f32 %v1302, %v1451
      %s1470 = scalar_lea.vmem %s308, 160
      %v1471 = vld [vmem:[%s1470] sm:$0xff]
      %v1472 = vld [vmem:[%s1470 + $0x8] sm:$0xff]
      %v1473 = vld [vmem:[%s1470 + $0x10] sm:$0xff]
      %v1474 = vld [vmem:[%s1470 + $0x18] sm:$0xff]
      %v1475 = vld [vmem:[%s1470 + $0x20] sm:$0xff]
      %v1476 = vld [vmem:[%s1470 + $0x28] sm:$0xff]
      %v1477 = vld [vmem:[%s1470 + $0x30] sm:$0xff]
      %v1478 = vld [vmem:[%s1470 + $0x38] sm:$0xff]
      %v1479 = vld [vmem:[%s1470 + $0x40] sm:$0xff]
      %v1480 = vld [vmem:[%s1470 + $0x48] sm:$0xff]
      %v1481 = vld [vmem:[%s1470 + $0x50] sm:$0xff]
      %v1482 = vld [vmem:[%s1470 + $0x58] sm:$0xff]
      %v1483 = vld [vmem:[%s1470 + $0x60] sm:$0xff]
      %v1484 = vld [vmem:[%s1470 + $0x68] sm:$0xff]
      %v1485 = vld [vmem:[%s1470 + $0x70] sm:$0xff]
      %v1486 = vld [vmem:[%s1470 + $0x78] sm:$0xff]
      %v1487 = vpack.c.bf16 %v1472, %v1471
      %v1488 = vpack.c.bf16 %v1474, %v1473
      %v1489 = vpack.c.bf16 %v1476, %v1475
      %v1490 = vpack.c.bf16 %v1478, %v1477
      %v1491 = vpack.c.bf16 %v1480, %v1479
      %v1492 = vpack.c.bf16 %v1482, %v1481
      %v1493 = vpack.c.bf16 %v1484, %v1483
      %v1494 = vpack.c.bf16 %v1486, %v1485
      %s1495 = scalar_lea.vmem %s2, 14
      %v1496 = vld [vmem:[%s1495] sm:$0x3]
      %v1498 = vsel %vm385, %v1487, 0
      %v1501 = vsel %vm385, %v1488, 0
      %v1504 = vsel %vm385, %v1489, 0
      %v1507 = vsel %vm385, %v1490, 0
      %v1510 = vsel %vm385, %v1491, 0
      %v1513 = vsel %vm385, %v1492, 0
      %v1516 = vsel %vm385, %v1493, 0
      %v1519 = vsel %vm385, %v1494, 0
      %v1522 = vsel %vm410, %v1496, 0
      %1524 = vmatprep.subr.bf16.mxu0 0
      %1525 = vmatpush1.bf16.msra.mxu0 %v1522
      %1526 = vmatprep.subr.bf16.mxu0 0
      %1527 = vmatpush1.bf16.msra.mxu0 0
      %1528 = vmatprep.subr.bf16.mxu0 0
      %1529 = vmatpush1.bf16.msra.mxu0 0
      %1530 = vmatprep.subr.bf16.mxu0 0
      %1531 = vmatpush1.bf16.msra.mxu0 0
      %1532 = vmatprep.subr.bf16.mxu0 0
      %1533 = vmatpush1.bf16.msra.mxu0 0
      %1534 = vmatprep.subr.bf16.mxu0 0
      %1535 = vmatpush1.bf16.msra.mxu0 0
      %1536 = vmatprep.subr.bf16.mxu0 0
      %1537 = vmatpush1.bf16.msra.mxu0 0
      %1538 = vmatprep.subr.bf16.mxu0 0
      %1539 = vmatpush1.bf16.msra.mxu0 0
      %1540 = vmatprep.subr.bf16.mxu0 0
      %1541 = vmatpush1.bf16.msra.mxu0 0
      %1542 = vmatprep.subr.bf16.mxu0 0
      %1543 = vmatpush1.bf16.msra.mxu0 0
      %1544 = vmatprep.subr.bf16.mxu0 0
      %1545 = vmatpush1.bf16.msra.mxu0 0
      %1546 = vmatprep.subr.bf16.mxu0 0
      %1547 = vmatpush1.bf16.msra.mxu0 0
      %1548 = vmatprep.subr.bf16.mxu0 0
      %1549 = vmatpush1.bf16.msra.mxu0 0
      %1550 = vmatprep.subr.bf16.mxu0 0
      %1551 = vmatpush1.bf16.msra.mxu0 0
      %1552 = vmatprep.subr.bf16.mxu0 0
      %1553 = vmatpush1.bf16.msra.mxu0 0
      %1554 = vmatprep.subr.bf16.mxu0 0
      %1555 = vmatpush1.bf16.msra.mxu0 0
      %1556 = vmatprep.mubr.bf16.mxu0 0
      %1557 = vmatmul.mubr.bf16.gmra.mrb[0].mxu0 %v1498
      %v1558 = vpop.f32.mrb[0].mxu0
      %v1559 = vadd.f32 0.0, %v1558
      %v1560 = vpop.f32.mrb[0].mxu0
      %v1561 = vpop.f32.mrb[0].mxu0
      %v1562 = vadd.f32 0.0, %v1561
      %v1563 = vpop.f32.mrb[0].mxu0
      %1564 = vmatprep.mubr.bf16.mxu0 0
      %1565 = vmatmul.mubr.bf16.gmra.mrb[0].mxu0 %v1501
      %v1566 = vpop.f32.mrb[0].mxu0
      %v1567 = vadd.f32 0.0, %v1566
      %v1568 = vpop.f32.mrb[0].mxu0
      %v1569 = vpop.f32.mrb[0].mxu0
      %v1570 = vadd.f32 0.0, %v1569
      %v1571 = vpop.f32.mrb[0].mxu0
      %1572 = vmatprep.mubr.bf16.mxu0 0
      %1573 = vmatmul.mubr.bf16.gmra.mrb[0].mxu0 %v1504
      %v1574 = vpop.f32.mrb[0].mxu0
      %v1575 = vadd.f32 0.0, %v1574
      %v1576 = vpop.f32.mrb[0].mxu0
      %v1577 = vpop.f32.mrb[0].mxu0
      %v1578 = vadd.f32 0.0, %v1577
      %v1579 = vpop.f32.mrb[0].mxu0
      %1580 = vmatprep.mubr.bf16.mxu0 0
      %1581 = vmatmul.mubr.bf16.gmra.mrb[0].mxu0 %v1507
      %v1582 = vpop.f32.mrb[0].mxu0
      %v1583 = vadd.f32 0.0, %v1582
      %v1584 = vpop.f32.mrb[0].mxu0
      %v1585 = vpop.f32.mrb[0].mxu0
      %v1586 = vadd.f32 0.0, %v1585
      %v1587 = vpop.f32.mrb[0].mxu0
      %1588 = vmatprep.mubr.bf16.mxu0 0
      %1589 = vmatmul.mubr.bf16.gmra.mrb[0].mxu0 %v1510
      %v1590 = vpop.f32.mrb[0].mxu0
      %v1591 = vadd.f32 0.0, %v1590
      %v1592 = vpop.f32.mrb[0].mxu0
      %v1593 = vpop.f32.mrb[0].mxu0
      %v1594 = vadd.f32 0.0, %v1593
      %v1595 = vpop.f32.mrb[0].mxu0
      %1596 = vmatprep.mubr.bf16.mxu0 0
      %1597 = vmatmul.mubr.bf16.gmra.mrb[0].mxu0 %v1513
      %v1598 = vpop.f32.mrb[0].mxu0
      %v1599 = vadd.f32 0.0, %v1598
      %v1600 = vpop.f32.mrb[0].mxu0
      %v1601 = vpop.f32.mrb[0].mxu0
      %v1602 = vadd.f32 0.0, %v1601
      %v1603 = vpop.f32.mrb[0].mxu0
      %1604 = vmatprep.mubr.bf16.mxu0 0
      %1605 = vmatmul.mubr.bf16.gmra.mrb[0].mxu0 %v1516
      %v1606 = vpop.f32.mrb[0].mxu0
      %v1607 = vadd.f32 0.0, %v1606
      %v1608 = vpop.f32.mrb[0].mxu0
      %v1609 = vpop.f32.mrb[0].mxu0
      %v1610 = vadd.f32 0.0, %v1609
      %v1611 = vpop.f32.mrb[0].mxu0
      %1612 = vmatprep.mubr.bf16.mxu0 0
      %1613 = vmatmul.mubr.bf16.gmra.mrb[0].mxu0 %v1519
      %v1614 = vpop.f32.mrb[0].mxu0
      %v1615 = vadd.f32 0.0, %v1614
      %v1616 = vpop.f32.mrb[0].mxu0
      %v1617 = vpop.f32.mrb[0].mxu0
      %v1618 = vadd.f32 0.0, %v1617
      %v1619 = vpop.f32.mrb[0].mxu0
      %1620 = vdwg.mxu0
      %v1621 = vadd.f32 %v1454, %v1559
      %v1622 = vadd.f32 %v1455, %v1562
      %v1623 = vadd.f32 %v1456, %v1567
      %v1624 = vadd.f32 %v1457, %v1570
      %v1625 = vadd.f32 %v1458, %v1575
      %v1626 = vadd.f32 %v1459, %v1578
      %v1627 = vadd.f32 %v1460, %v1583
      %v1628 = vadd.f32 %v1461, %v1586
      %v1629 = vadd.f32 %v1462, %v1591
      %v1630 = vadd.f32 %v1463, %v1594
      %v1631 = vadd.f32 %v1464, %v1599
      %v1632 = vadd.f32 %v1465, %v1602
      %v1633 = vadd.f32 %v1466, %v1607
      %v1634 = vadd.f32 %v1467, %v1610
      %v1635 = vadd.f32 %v1468, %v1615
      %v1636 = vadd.f32 %v1469, %v1618
      %s1637 = scalar_lea.vmem %s308, 304
      %v1638 = vld [vmem:[%s1637] sm:$0xff]
      %v1639 = vld [vmem:[%s1637 + $0x8] sm:$0xff]
      %v1640 = vld [vmem:[%s1637 + $0x10] sm:$0xff]
      %v1641 = vld [vmem:[%s1637 + $0x18] sm:$0xff]
      %v1642 = vld [vmem:[%s1637 + $0x20] sm:$0xff]
      %v1643 = vld [vmem:[%s1637 + $0x28] sm:$0xff]
      %v1644 = vld [vmem:[%s1637 + $0x30] sm:$0xff]
      %v1645 = vld [vmem:[%s1637 + $0x38] sm:$0xff]
      %v1646 = vld [vmem:[%s1637 + $0x40] sm:$0xff]
      %v1647 = vld [vmem:[%s1637 + $0x48] sm:$0xff]
      %v1648 = vld [vmem:[%s1637 + $0x50] sm:$0xff]
      %v1649 = vld [vmem:[%s1637 + $0x58] sm:$0xff]
      %v1650 = vld [vmem:[%s1637 + $0x60] sm:$0xff]
      %v1651 = vld [vmem:[%s1637 + $0x68] sm:$0xff]
      %v1652 = vld [vmem:[%s1637 + $0x70] sm:$0xff]
      %v1653 = vld [vmem:[%s1637 + $0x78] sm:$0xff]
      %v1654 = vpack.c.bf16 %v1639, %v1638
      %v1655 = vpack.c.bf16 %v1641, %v1640
      %v1656 = vpack.c.bf16 %v1643, %v1642
      %v1657 = vpack.c.bf16 %v1645, %v1644
      %v1658 = vpack.c.bf16 %v1647, %v1646
      %v1659 = vpack.c.bf16 %v1649, %v1648
      %v1660 = vpack.c.bf16 %v1651, %v1650
      %v1661 = vpack.c.bf16 %v1653, %v1652
      %s1662 = scalar_lea.vmem %s2, 16
      %v1663 = vld [vmem:[%s1662] sm:$0x3]
      %v1665 = vsel %vm385, %v1654, 0
      %v1668 = vsel %vm385, %v1655, 0
      %v1671 = vsel %vm385, %v1656, 0
      %v1674 = vsel %vm385, %v1657, 0
      %v1677 = vsel %vm385, %v1658, 0
      %v1680 = vsel %vm385, %v1659, 0
      %v1683 = vsel %vm385, %v1660, 0
      %v1686 = vsel %vm385, %v1661, 0
      %v1689 = vsel %vm410, %v1663, 0
      %1691 = vmatprep.subr.bf16.mxu0 0
      %1692 = vmatpush1.bf16.msra.mxu0 %v1689
      %1693 = vmatprep.subr.bf16.mxu0 0
      %1694 = vmatpush1.bf16.msra.mxu0 0
      %1695 = vmatprep.subr.bf16.mxu0 0
      %1696 = vmatpush1.bf16.msra.mxu0 0
      %1697 = vmatprep.subr.bf16.mxu0 0
      %1698 = vmatpush1.bf16.msra.mxu0 0
      %1699 = vmatprep.subr.bf16.mxu0 0
      %1700 = vmatpush1.bf16.msra.mxu0 0
      %1701 = vmatprep.subr.bf16.mxu0 0
      %1702 = vmatpush1.bf16.msra.mxu0 0
      %1703 = vmatprep.subr.bf16.mxu0 0
      %1704 = vmatpush1.bf16.msra.mxu0 0
      %1705 = vmatprep.subr.bf16.mxu0 0
      %1706 = vmatpush1.bf16.msra.mxu0 0
      %1707 = vmatprep.subr.bf16.mxu0 0
      %1708 = vmatpush1.bf16.msra.mxu0 0
      %1709 = vmatprep.subr.bf16.mxu0 0
      %1710 = vmatpush1.bf16.msra.mxu0 0
      %1711 = vmatprep.subr.bf16.mxu0 0
      %1712 = vmatpush1.bf16.msra.mxu0 0
      %1713 = vmatprep.subr.bf16.mxu0 0
      %1714 = vmatpush1.bf16.msra.mxu0 0
      %1715 = vmatprep.subr.bf16.mxu0 0
      %1716 = vmatpush1.bf16.msra.mxu0 0
      %1717 = vmatprep.subr.bf16.mxu0 0
      %1718 = vmatpush1.bf16.msra.mxu0 0
      %1719 = vmatprep.subr.bf16.mxu0 0
      %1720 = vmatpush1.bf16.msra.mxu0 0
      %1721 = vmatprep.subr.bf16.mxu0 0
      %1722 = vmatpush1.bf16.msra.mxu0 0
      %1723 = vmatprep.mubr.bf16.mxu0 0
      %1724 = vmatmul.mubr.bf16.gmra.mrb[0].mxu0 %v1665
      %v1725 = vpop.f32.mrb[0].mxu0
      %v1726 = vadd.f32 0.0, %v1725
      %v1727 = vpop.f32.mrb[0].mxu0
      %v1728 = vpop.f32.mrb[0].mxu0
      %v1729 = vadd.f32 0.0, %v1728
      %v1730 = vpop.f32.mrb[0].mxu0
      %1731 = vmatprep.mubr.bf16.mxu0 0
      %1732 = vmatmul.mubr.bf16.gmra.mrb[0].mxu0 %v1668
      %v1733 = vpop.f32.mrb[0].mxu0
      %v1734 = vadd.f32 0.0, %v1733
      %v1735 = vpop.f32.mrb[0].mxu0
      %v1736 = vpop.f32.mrb[0].mxu0
      %v1737 = vadd.f32 0.0, %v1736
      %v1738 = vpop.f32.mrb[0].mxu0
      %1739 = vmatprep.mubr.bf16.mxu0 0
      %1740 = vmatmul.mubr.bf16.gmra.mrb[0].mxu0 %v1671
      %v1741 = vpop.f32.mrb[0].mxu0
      %v1742 = vadd.f32 0.0, %v1741
      %v1743 = vpop.f32.mrb[0].mxu0
      %v1744 = vpop.f32.mrb[0].mxu0
      %v1745 = vadd.f32 0.0, %v1744
      %v1746 = vpop.f32.mrb[0].mxu0
      %1747 = vmatprep.mubr.bf16.mxu0 0
      %1748 = vmatmul.mubr.bf16.gmra.mrb[0].mxu0 %v1674
      %v1749 = vpop.f32.mrb[0].mxu0
      %v1750 = vadd.f32 0.0, %v1749
      %v1751 = vpop.f32.mrb[0].mxu0
      %v1752 = vpop.f32.mrb[0].mxu0
      %v1753 = vadd.f32 0.0, %v1752
      %v1754 = vpop.f32.mrb[0].mxu0
      %1755 = vmatprep.mubr.bf16.mxu0 0
      %1756 = vmatmul.mubr.bf16.gmra.mrb[0].mxu0 %v1677
      %v1757 = vpop.f32.mrb[0].mxu0
      %v1758 = vadd.f32 0.0, %v1757
      %v1759 = vpop.f32.mrb[0].mxu0
      %v1760 = vpop.f32.mrb[0].mxu0
      %v1761 = vadd.f32 0.0, %v1760
      %v1762 = vpop.f32.mrb[0].mxu0
      %1763 = vmatprep.mubr.bf16.mxu0 0
      %1764 = vmatmul.mubr.bf16.gmra.mrb[0].mxu0 %v1680
      %v1765 = vpop.f32.mrb[0].mxu0
      %v1766 = vadd.f32 0.0, %v1765
      %v1767 = vpop.f32.mrb[0].mxu0
      %v1768 = vpop.f32.mrb[0].mxu0
      %v1769 = vadd.f32 0.0, %v1768
      %v1770 = vpop.f32.mrb[0].mxu0
      %1771 = vmatprep.mubr.bf16.mxu0 0
      %1772 = vmatmul.mubr.bf16.gmra.mrb[0].mxu0 %v1683
      %v1773 = vpop.f32.mrb[0].mxu0
      %v1774 = vadd.f32 0.0, %v1773
      %v1775 = vpop.f32.mrb[0].mxu0
      %v1776 = vpop.f32.mrb[0].mxu0
      %v1777 = vadd.f32 0.0, %v1776
      %v1778 = vpop.f32.mrb[0].mxu0
      %1779 = vmatprep.mubr.bf16.mxu0 0
      %1780 = vmatmul.mubr.bf16.gmra.mrb[0].mxu0 %v1686
      %v1781 = vpop.f32.mrb[0].mxu0
      %v1782 = vadd.f32 0.0, %v1781
      %v1783 = vpop.f32.mrb[0].mxu0
      %v1784 = vpop.f32.mrb[0].mxu0
      %v1785 = vadd.f32 0.0, %v1784
      %v1786 = vpop.f32.mrb[0].mxu0
      %1787 = vdwg.mxu0
      %v1788 = vadd.f32 %v1621, %v1726
      %v1789 = vadd.f32 %v1622, %v1729
      %v1790 = vadd.f32 %v1623, %v1734
      %v1791 = vadd.f32 %v1624, %v1737
      %v1792 = vadd.f32 %v1625, %v1742
      %v1793 = vadd.f32 %v1626, %v1745
      %v1794 = vadd.f32 %v1627, %v1750
      %v1795 = vadd.f32 %v1628, %v1753
      %v1796 = vadd.f32 %v1629, %v1758
      %v1797 = vadd.f32 %v1630, %v1761
      %v1798 = vadd.f32 %v1631, %v1766
      %v1799 = vadd.f32 %v1632, %v1769
      %v1800 = vadd.f32 %v1633, %v1774
      %v1801 = vadd.f32 %v1634, %v1777
      %v1802 = vadd.f32 %v1635, %v1782
      %v1803 = vadd.f32 %v1636, %v1785
      %vm1804 = vcmask 64512
      %1805 = vst.msk [vmem:[%s318] sm:$0xff] %vm1804, %v1788
      %1806 = vst.msk [vmem:[%s318 + $0x8] sm:$0xff] %vm1804, %v1789
      %1807 = vst.msk [vmem:[%s318 + $0x10] sm:$0xff] %vm1804, %v1790
      %1808 = vst.msk [vmem:[%s318 + $0x18] sm:$0xff] %vm1804, %v1791
      %1809 = vst.msk [vmem:[%s318 + $0x20] sm:$0xff] %vm1804, %v1792
      %1810 = vst.msk [vmem:[%s318 + $0x28] sm:$0xff] %vm1804, %v1793
      %1811 = vst.msk [vmem:[%s318 + $0x30] sm:$0xff] %vm1804, %v1794
      %1812 = vst.msk [vmem:[%s318 + $0x38] sm:$0xff] %vm1804, %v1795
      %1813 = vst.msk [vmem:[%s318 + $0x40] sm:$0xff] %vm1804, %v1796
      %1814 = vst.msk [vmem:[%s318 + $0x48] sm:$0xff] %vm1804, %v1797
      %1815 = vst.msk [vmem:[%s318 + $0x50] sm:$0xff] %vm1804, %v1798
      %1816 = vst.msk [vmem:[%s318 + $0x58] sm:$0xff] %vm1804, %v1799
      %1817 = vst.msk [vmem:[%s318 + $0x60] sm:$0xff] %vm1804, %v1800
      %1818 = vst.msk [vmem:[%s318 + $0x68] sm:$0xff] %vm1804, %v1801
      %1819 = vst.msk [vmem:[%s318 + $0x70] sm:$0xff] %vm1804, %v1802
      %1820 = vst.msk [vmem:[%s318 + $0x78] sm:$0xff] %vm1804, %v1803
      %v1821 = vsel %vm1804, %v1788, 0.0
      %v1822 = vsel %vm1804, %v1789, 0.0
      %v1823 = vadd.f32 %v1821, %v1822
      %v1824 = vsel %vm1804, %v1790, 0.0
      %v1825 = vadd.f32 %v1823, %v1824
      %v1826 = vsel %vm1804, %v1791, 0.0
      %v1827 = vadd.f32 %v1825, %v1826
      %v1828 = vsel %vm1804, %v1792, 0.0
      %v1829 = vadd.f32 %v1827, %v1828
      %v1830 = vsel %vm1804, %v1793, 0.0
      %v1831 = vadd.f32 %v1829, %v1830
      %v1832 = vsel %vm1804, %v1794, 0.0
      %v1833 = vadd.f32 %v1831, %v1832
      %v1834 = vsel %vm1804, %v1795, 0.0
      %v1835 = vadd.f32 %v1833, %v1834
      %v1836 = vsel %vm1804, %v1796, 0.0
      %v1837 = vadd.f32 %v1835, %v1836
      %v1838 = vsel %vm1804, %v1797, 0.0
      %v1839 = vadd.f32 %v1837, %v1838
      %v1840 = vsel %vm1804, %v1798, 0.0
      %v1841 = vadd.f32 %v1839, %v1840
      %v1842 = vsel %vm1804, %v1799, 0.0
      %v1843 = vadd.f32 %v1841, %v1842
      %v1844 = vsel %vm1804, %v1800, 0.0
      %v1845 = vadd.f32 %v1843, %v1844
      %v1846 = vsel %vm1804, %v1801, 0.0
      %v1847 = vadd.f32 %v1845, %v1846
      %v1848 = vsel %vm1804, %v1802, 0.0
      %v1849 = vadd.f32 %v1847, %v1848
      %v1850 = vsel %vm1804, %v1803, 0.0
      %v1851 = vadd.f32 %v1849, %v1850
      %v1852 = vrot.slane %v1851, 4
      %v1853 = vadd.f32 %v1851, %v1852
      %v1854 = vrot.slane %v1853, 2
      %v1855 = vadd.f32 %v1853, %v1854
      %v1856 = vrot.slane %v1855, 1
      %v1857 = vadd.f32 %v1855, %v1856
      %vm1858 = vcmask 57344
      %1859 = vst.msk [vmem:[%s327] sm:$0x1] %vm1858, %v1857
      %v1860 = vmul.f32 %v1788, %v1788
      %v1861 = vmul.f32 %v1789, %v1789
      %v1862 = vmul.f32 %v1790, %v1790
      %v1863 = vmul.f32 %v1791, %v1791
      %v1864 = vmul.f32 %v1792, %v1792
      %v1865 = vmul.f32 %v1793, %v1793
      %v1866 = vmul.f32 %v1794, %v1794
      %v1867 = vmul.f32 %v1795, %v1795
      %v1868 = vmul.f32 %v1796, %v1796
      %v1869 = vmul.f32 %v1797, %v1797
      %v1870 = vmul.f32 %v1798, %v1798
      %v1871 = vmul.f32 %v1799, %v1799
      %v1872 = vmul.f32 %v1800, %v1800
      %v1873 = vmul.f32 %v1801, %v1801
      %v1874 = vmul.f32 %v1802, %v1802
      %v1875 = vmul.f32 %v1803, %v1803
      %v1876 = vsel %vm1804, %v1860, 0.0
      %v1877 = vsel %vm1804, %v1861, 0.0
      %v1878 = vadd.f32 %v1876, %v1877
      %v1879 = vsel %vm1804, %v1862, 0.0
      %v1880 = vadd.f32 %v1878, %v1879
      %v1881 = vsel %vm1804, %v1863, 0.0
      %v1882 = vadd.f32 %v1880, %v1881
      %v1883 = vsel %vm1804, %v1864, 0.0
      %v1884 = vadd.f32 %v1882, %v1883
      %v1885 = vsel %vm1804, %v1865, 0.0
      %v1886 = vadd.f32 %v1884, %v1885
      %v1887 = vsel %vm1804, %v1866, 0.0
      %v1888 = vadd.f32 %v1886, %v1887
      %v1889 = vsel %vm1804, %v1867, 0.0
      %v1890 = vadd.f32 %v1888, %v1889
      %v1891 = vsel %vm1804, %v1868, 0.0
      %v1892 = vadd.f32 %v1890, %v1891
      %v1893 = vsel %vm1804, %v1869, 0.0
      %v1894 = vadd.f32 %v1892, %v1893
      %v1895 = vsel %vm1804, %v1870, 0.0
      %v1896 = vadd.f32 %v1894, %v1895
      %v1897 = vsel %vm1804, %v1871, 0.0
      %v1898 = vadd.f32 %v1896, %v1897
      %v1899 = vsel %vm1804, %v1872, 0.0
      %v1900 = vadd.f32 %v1898, %v1899
      %v1901 = vsel %vm1804, %v1873, 0.0
      %v1902 = vadd.f32 %v1900, %v1901
      %v1903 = vsel %vm1804, %v1874, 0.0
      %v1904 = vadd.f32 %v1902, %v1903
      %v1905 = vsel %vm1804, %v1875, 0.0
      %v1906 = vadd.f32 %v1904, %v1905
      %v1907 = vrot.slane %v1906, 4
      %v1908 = vadd.f32 %v1906, %v1907
      %v1909 = vrot.slane %v1908, 2
      %v1910 = vadd.f32 %v1908, %v1909
      %v1911 = vrot.slane %v1910, 1
      %v1912 = vadd.f32 %v1910, %v1911
      %1913 = vst.msk [vmem:[%s327 + $0x1] sm:$0x1] %vm1858, %v1912
      %v1914 = vld [vmem:[%s313] sm:$0xff]
      %v1915 = vld [vmem:[%s313 + $0x8] sm:$0xff]
      %v1916 = vld [vmem:[%s313 + $0x10] sm:$0xff]
      %v1917 = vld [vmem:[%s313 + $0x18] sm:$0xff]
      %v1918 = vld [vmem:[%s313 + $0x20] sm:$0xff]
      %v1919 = vld [vmem:[%s313 + $0x28] sm:$0xff]
      %v1920 = vld [vmem:[%s313 + $0x30] sm:$0xff]
      %v1921 = vld [vmem:[%s313 + $0x38] sm:$0xff]
      %v1922 = vld [vmem:[%s313 + $0x40] sm:$0xff]
      %v1923 = vld [vmem:[%s313 + $0x48] sm:$0xff]
      %v1924 = vld [vmem:[%s313 + $0x50] sm:$0xff]
      %v1925 = vld [vmem:[%s313 + $0x58] sm:$0xff]
      %v1926 = vld [vmem:[%s313 + $0x60] sm:$0xff]
      %v1927 = vld [vmem:[%s313 + $0x68] sm:$0xff]
      %v1928 = vld [vmem:[%s313 + $0x70] sm:$0xff]
      %v1929 = vld [vmem:[%s313 + $0x78] sm:$0xff]
      %v1930 = vpack.c.bf16 %v1915, %v1914
      %v1931 = vpack.c.bf16 %v1917, %v1916
      %v1932 = vpack.c.bf16 %v1919, %v1918
      %v1933 = vpack.c.bf16 %v1921, %v1920
      %v1934 = vpack.c.bf16 %v1923, %v1922
      %v1935 = vpack.c.bf16 %v1925, %v1924
      %v1936 = vpack.c.bf16 %v1927, %v1926
      %v1937 = vpack.c.bf16 %v1929, %v1928
      %v1938 = vld [vmem:[%s3] sm:$0x3]
      %v1940 = vsel %vm385, %v1930, 0
      %v1943 = vsel %vm385, %v1931, 0
      %v1946 = vsel %vm385, %v1932, 0
      %v1949 = vsel %vm385, %v1933, 0
      %v1952 = vsel %vm385, %v1934, 0
      %v1955 = vsel %vm385, %v1935, 0
      %v1958 = vsel %vm385, %v1936, 0
      %v1961 = vsel %vm385, %v1937, 0
      %v1964 = vsel %vm410, %v1938, 0
      %1966 = vmatprep.subr.bf16.mxu0 0
      %1967 = vmatpush1.bf16.msra.mxu0 %v1964
      %1968 = vmatprep.subr.bf16.mxu0 0
      %1969 = vmatpush1.bf16.msra.mxu0 0
      %1970 = vmatprep.subr.bf16.mxu0 0
      %1971 = vmatpush1.bf16.msra.mxu0 0
      %1972 = vmatprep.subr.bf16.mxu0 0
      %1973 = vmatpush1.bf16.msra.mxu0 0
      %1974 = vmatprep.subr.bf16.mxu0 0
      %1975 = vmatpush1.bf16.msra.mxu0 0
      %1976 = vmatprep.subr.bf16.mxu0 0
      %1977 = vmatpush1.bf16.msra.mxu0 0
      %1978 = vmatprep.subr.bf16.mxu0 0
      %1979 = vmatpush1.bf16.msra.mxu0 0
      %1980 = vmatprep.subr.bf16.mxu0 0
      %1981 = vmatpush1.bf16.msra.mxu0 0
      %1982 = vmatprep.subr.bf16.mxu0 0
      %1983 = vmatpush1.bf16.msra.mxu0 0
      %1984 = vmatprep.subr.bf16.mxu0 0
      %1985 = vmatpush1.bf16.msra.mxu0 0
      %1986 = vmatprep.subr.bf16.mxu0 0
      %1987 = vmatpush1.bf16.msra.mxu0 0
      %1988 = vmatprep.subr.bf16.mxu0 0
      %1989 = vmatpush1.bf16.msra.mxu0 0
      %1990 = vmatprep.subr.bf16.mxu0 0
      %1991 = vmatpush1.bf16.msra.mxu0 0
      %1992 = vmatprep.subr.bf16.mxu0 0
      %1993 = vmatpush1.bf16.msra.mxu0 0
      %1994 = vmatprep.subr.bf16.mxu0 0
      %1995 = vmatpush1.bf16.msra.mxu0 0
      %1996 = vmatprep.subr.bf16.mxu0 0
      %1997 = vmatpush1.bf16.msra.mxu0 0
      %1998 = vmatprep.mubr.bf16.mxu0 0
      %1999 = vmatmul.mubr.bf16.gmra.mrb[0].mxu0 %v1940
      %v2000 = vpop.f32.mrb[0].mxu0
      %v2001 = vadd.f32 0.0, %v2000
      %v2002 = vpop.f32.mrb[0].mxu0
      %v2003 = vpop.f32.mrb[0].mxu0
      %v2004 = vadd.f32 0.0, %v2003
      %v2005 = vpop.f32.mrb[0].mxu0
      %2006 = vmatprep.mubr.bf16.mxu0 0
      %2007 = vmatmul.mubr.bf16.gmra.mrb[0].mxu0 %v1943
      %v2008 = vpop.f32.mrb[0].mxu0
      %v2009 = vadd.f32 0.0, %v2008
      %v2010 = vpop.f32.mrb[0].mxu0
      %v2011 = vpop.f32.mrb[0].mxu0
      %v2012 = vadd.f32 0.0, %v2011
      %v2013 = vpop.f32.mrb[0].mxu0
      %2014 = vmatprep.mubr.bf16.mxu0 0
      %2015 = vmatmul.mubr.bf16.gmra.mrb[0].mxu0 %v1946
      %v2016 = vpop.f32.mrb[0].mxu0
      %v2017 = vadd.f32 0.0, %v2016
      %v2018 = vpop.f32.mrb[0].mxu0
      %v2019 = vpop.f32.mrb[0].mxu0
      %v2020 = vadd.f32 0.0, %v2019
      %v2021 = vpop.f32.mrb[0].mxu0
      %2022 = vmatprep.mubr.bf16.mxu0 0
      %2023 = vmatmul.mubr.bf16.gmra.mrb[0].mxu0 %v1949
      %v2024 = vpop.f32.mrb[0].mxu0
      %v2025 = vadd.f32 0.0, %v2024
      %v2026 = vpop.f32.mrb[0].mxu0
      %v2027 = vpop.f32.mrb[0].mxu0
      %v2028 = vadd.f32 0.0, %v2027
      %v2029 = vpop.f32.mrb[0].mxu0
      %2030 = vmatprep.mubr.bf16.mxu0 0
      %2031 = vmatmul.mubr.bf16.gmra.mrb[0].mxu0 %v1952
      %v2032 = vpop.f32.mrb[0].mxu0
      %v2033 = vadd.f32 0.0, %v2032
      %v2034 = vpop.f32.mrb[0].mxu0
      %v2035 = vpop.f32.mrb[0].mxu0
      %v2036 = vadd.f32 0.0, %v2035
      %v2037 = vpop.f32.mrb[0].mxu0
      %2038 = vmatprep.mubr.bf16.mxu0 0
      %2039 = vmatmul.mubr.bf16.gmra.mrb[0].mxu0 %v1955
      %v2040 = vpop.f32.mrb[0].mxu0
      %v2041 = vadd.f32 0.0, %v2040
      %v2042 = vpop.f32.mrb[0].mxu0
      %v2043 = vpop.f32.mrb[0].mxu0
      %v2044 = vadd.f32 0.0, %v2043
      %v2045 = vpop.f32.mrb[0].mxu0
      %2046 = vmatprep.mubr.bf16.mxu0 0
      %2047 = vmatmul.mubr.bf16.gmra.mrb[0].mxu0 %v1958
      %v2048 = vpop.f32.mrb[0].mxu0
      %v2049 = vadd.f32 0.0, %v2048
      %v2050 = vpop.f32.mrb[0].mxu0
      %v2051 = vpop.f32.mrb[0].mxu0
      %v2052 = vadd.f32 0.0, %v2051
      %v2053 = vpop.f32.mrb[0].mxu0
      %2054 = vmatprep.mubr.bf16.mxu0 0
      %2055 = vmatmul.mubr.bf16.gmra.mrb[0].mxu0 %v1961
      %v2056 = vpop.f32.mrb[0].mxu0
      %v2057 = vadd.f32 0.0, %v2056
      %v2058 = vpop.f32.mrb[0].mxu0
      %v2059 = vpop.f32.mrb[0].mxu0
      %v2060 = vadd.f32 0.0, %v2059
      %v2061 = vpop.f32.mrb[0].mxu0
      %2062 = vdwg.mxu0
      %2063 = vst.msk [vmem:[%s323] sm:$0xff] %vm1804, %v2001
      %2064 = vst.msk [vmem:[%s323 + $0x8] sm:$0xff] %vm1804, %v2004
      %2065 = vst.msk [vmem:[%s323 + $0x10] sm:$0xff] %vm1804, %v2009
      %2066 = vst.msk [vmem:[%s323 + $0x18] sm:$0xff] %vm1804, %v2012
      %2067 = vst.msk [vmem:[%s323 + $0x20] sm:$0xff] %vm1804, %v2017
      %2068 = vst.msk [vmem:[%s323 + $0x28] sm:$0xff] %vm1804, %v2020
      %2069 = vst.msk [vmem:[%s323 + $0x30] sm:$0xff] %vm1804, %v2025
      %2070 = vst.msk [vmem:[%s323 + $0x38] sm:$0xff] %vm1804, %v2028
      %2071 = vst.msk [vmem:[%s323 + $0x40] sm:$0xff] %vm1804, %v2033
      %2072 = vst.msk [vmem:[%s323 + $0x48] sm:$0xff] %vm1804, %v2036
      %2073 = vst.msk [vmem:[%s323 + $0x50] sm:$0xff] %vm1804, %v2041
      %2074 = vst.msk [vmem:[%s323 + $0x58] sm:$0xff] %vm1804, %v2044
      %2075 = vst.msk [vmem:[%s323 + $0x60] sm:$0xff] %vm1804, %v2049
      %2076 = vst.msk [vmem:[%s323 + $0x68] sm:$0xff] %vm1804, %v2052
      %2077 = vst.msk [vmem:[%s323 + $0x70] sm:$0xff] %vm1804, %v2057
      %2078 = vst.msk [vmem:[%s323 + $0x78] sm:$0xff] %vm1804, %v2060
      %v2079 = vsel %vm1804, %v2001, 0.0
      %v2080 = vsel %vm1804, %v2004, 0.0
      %v2081 = vadd.f32 %v2079, %v2080
      %v2082 = vsel %vm1804, %v2009, 0.0
      %v2083 = vadd.f32 %v2081, %v2082
      %v2084 = vsel %vm1804, %v2012, 0.0
      %v2085 = vadd.f32 %v2083, %v2084
      %v2086 = vsel %vm1804, %v2017, 0.0
      %v2087 = vadd.f32 %v2085, %v2086
      %v2088 = vsel %vm1804, %v2020, 0.0
      %v2089 = vadd.f32 %v2087, %v2088
      %v2090 = vsel %vm1804, %v2025, 0.0
      %v2091 = vadd.f32 %v2089, %v2090
      %v2092 = vsel %vm1804, %v2028, 0.0
      %v2093 = vadd.f32 %v2091, %v2092
      %v2094 = vsel %vm1804, %v2033, 0.0
      %v2095 = vadd.f32 %v2093, %v2094
      %v2096 = vsel %vm1804, %v2036, 0.0
      %v2097 = vadd.f32 %v2095, %v2096
      %v2098 = vsel %vm1804, %v2041, 0.0
      %v2099 = vadd.f32 %v2097, %v2098
      %v2100 = vsel %vm1804, %v2044, 0.0
      %v2101 = vadd.f32 %v2099, %v2100
      %v2102 = vsel %vm1804, %v2049, 0.0
      %v2103 = vadd.f32 %v2101, %v2102
      %v2104 = vsel %vm1804, %v2052, 0.0
      %v2105 = vadd.f32 %v2103, %v2104
      %v2106 = vsel %vm1804, %v2057, 0.0
      %v2107 = vadd.f32 %v2105, %v2106
      %v2108 = vsel %vm1804, %v2060, 0.0
      %v2109 = vadd.f32 %v2107, %v2108
      %v2110 = vrot.slane %v2109, 4
      %v2111 = vadd.f32 %v2109, %v2110
      %v2112 = vrot.slane %v2111, 2
      %v2113 = vadd.f32 %v2111, %v2112
      %v2114 = vrot.slane %v2113, 1
      %v2115 = vadd.f32 %v2113, %v2114
      %2116 = vst.msk [vmem:[%s331] sm:$0x1] %vm1858, %v2115
      %v2117 = vmul.f32 %v2001, %v2001
      %v2118 = vmul.f32 %v2004, %v2004
      %v2119 = vmul.f32 %v2009, %v2009
      %v2120 = vmul.f32 %v2012, %v2012
      %v2121 = vmul.f32 %v2017, %v2017
      %v2122 = vmul.f32 %v2020, %v2020
      %v2123 = vmul.f32 %v2025, %v2025
      %v2124 = vmul.f32 %v2028, %v2028
      %v2125 = vmul.f32 %v2033, %v2033
      %v2126 = vmul.f32 %v2036, %v2036
      %v2127 = vmul.f32 %v2041, %v2041
      %v2128 = vmul.f32 %v2044, %v2044
      %v2129 = vmul.f32 %v2049, %v2049
      %v2130 = vmul.f32 %v2052, %v2052
      %v2131 = vmul.f32 %v2057, %v2057
      %v2132 = vmul.f32 %v2060, %v2060
      %v2133 = vsel %vm1804, %v2117, 0.0
      %v2134 = vsel %vm1804, %v2118, 0.0
      %v2135 = vadd.f32 %v2133, %v2134
      %v2136 = vsel %vm1804, %v2119, 0.0
      %v2137 = vadd.f32 %v2135, %v2136
      %v2138 = vsel %vm1804, %v2120, 0.0
      %v2139 = vadd.f32 %v2137, %v2138
      %v2140 = vsel %vm1804, %v2121, 0.0
      %v2141 = vadd.f32 %v2139, %v2140
      %v2142 = vsel %vm1804, %v2122, 0.0
      %v2143 = vadd.f32 %v2141, %v2142
      %v2144 = vsel %vm1804, %v2123, 0.0
      %v2145 = vadd.f32 %v2143, %v2144
      %v2146 = vsel %vm1804, %v2124, 0.0
      %v2147 = vadd.f32 %v2145, %v2146
      %v2148 = vsel %vm1804, %v2125, 0.0
      %v2149 = vadd.f32 %v2147, %v2148
      %v2150 = vsel %vm1804, %v2126, 0.0
      %v2151 = vadd.f32 %v2149, %v2150
      %v2152 = vsel %vm1804, %v2127, 0.0
      %v2153 = vadd.f32 %v2151, %v2152
      %v2154 = vsel %vm1804, %v2128, 0.0
      %v2155 = vadd.f32 %v2153, %v2154
      %v2156 = vsel %vm1804, %v2129, 0.0
      %v2157 = vadd.f32 %v2155, %v2156
      %v2158 = vsel %vm1804, %v2130, 0.0
      %v2159 = vadd.f32 %v2157, %v2158
      %v2160 = vsel %vm1804, %v2131, 0.0
      %v2161 = vadd.f32 %v2159, %v2160
      %v2162 = vsel %vm1804, %v2132, 0.0
      %v2163 = vadd.f32 %v2161, %v2162
      %v2164 = vrot.slane %v2163, 4
      %v2165 = vadd.f32 %v2163, %v2164
      %v2166 = vrot.slane %v2165, 2
      %v2167 = vadd.f32 %v2165, %v2166
      %v2168 = vrot.slane %v2167, 1
      %v2169 = vadd.f32 %v2167, %v2168
      %2170 = vst.msk [vmem:[%s331 + $0x1] sm:$0x1] %vm1858, %v2169
      %p2171 = scmp.lt.s32.totalorder %s19, 1
      %s2172 = scalar_select %p2171, %s19, 1
      %s2173 = smul.addr %s2172, 16
      %s2174 = smul.addr %s2173, 8
      %s2175 = scalar_lea.vmem %s4, %s2174
      %p2176 = scmp.lt.s32.totalorder %s19, 1
      %s2177 = scalar_select %p2176, %s19, 1
      %s2178 = smul.addr %s2177, 16
      %s2179 = smul.addr %s2178, 8
      %s2180 = scalar_lea.vmem %s5, %s2179
      %p2181 = scmp.lt.s32.totalorder %s19, 1
      %s2182 = scalar_select %p2181, %s19, 1
      %s2183 = smul.addr %s2182, 2
      %s2184 = scalar_lea.vmem %s6, %s2183
      %p2185 = scmp.lt.s32.totalorder %s19, 1
      %s2186 = scalar_select %p2185, %s19, 1
      %s2187 = smul.addr %s2186, 2
      %s2188 = scalar_lea.vmem %s7, %s2187
      // Predicated region
      $region37: #{basic_block_forward.3} parent=35 // pred_check
        %p2189 = pneg %p131
      $region38: #{basic_block_forward.3} parent=35 // pred_check_branch
        %2191 = sbr.rel (%p2189) target = $region40
      $region39: #{basic_block_forward.3} parent=35 // pred_region
        _
      $region40: #{basic_block_forward.3} parent=35 // pred_fallthru
        _
      // Predicated region
      $region41: #{basic_block_forward.3} parent=35 // pred_check
        %p2192 = pneg %p157
      $region42: #{basic_block_forward.3} parent=35 // pred_check_branch
        %2194 = sbr.rel (%p2192) target = $region44
      $region43: #{basic_block_forward.3} parent=35 // pred_region
        _
      $region44: #{basic_block_forward.3} parent=35 // pred_fallthru
        _
      // Predicated region
      $region45: #{basic_block_forward.3} parent=35 // pred_check
        %p2195 = pneg %p183
      $region46: #{basic_block_forward.3} parent=35 // pred_check_branch
        %2197 = sbr.rel (%p2195) target = $region48
      $region47: #{basic_block_forward.3} parent=35 // pred_region
        _
      $region48: #{basic_block_forward.3} parent=35 // pred_fallthru
        _
      // Predicated region
      $region49: #{basic_block_forward.3} parent=35 // pred_check
        %p2198 = pneg %p209
      $region50: #{basic_block_forward.3} parent=35 // pred_check_branch
        %2200 = sbr.rel (%p2198) target = $region52
      $region51: #{basic_block_forward.3} parent=35 // pred_region
        _
      $region52: #{basic_block_forward.3} parent=35 // pred_fallthru
        _
    $region36: #{basic_block_forward.3} parent=5 // pred_fallthru
      _
    %p2201 = scmp.le.s32.totalorder 2, %s14
    // Predicated region
    $region53: #{basic_block_forward.3} parent=5 // pred_check
      %p2202 = pneg %p2201
    $region54: #{basic_block_forward.3} parent=5 // pred_check_branch
      %2204 = sbr.rel (%p2202) target = $region56
    $region55: #{basic_block_forward.3} parent=5 // pred_region
      %s2205 = ssub.s32 %s14, 2
      // Predicated region
      $region57: #{basic_block_forward.3} parent=55 // pred_check
        %p2206 = pneg %p137
      $region58: #{basic_block_forward.3} parent=55 // pred_check_branch
        %2208 = sbr.rel (%p2206) target = $region60
      $region59: #{basic_block_forward.3} parent=55 // pred_region
        %p2209 = scmp.lt.s32.totalorder %s20, 1
        %s2210 = scalar_select %p2209, %s20, 1
        %s2211 = smul.addr %s2210, 16
        %s2212 = smul.addr %s2211, 8
        %s2213 = scalar_lea.vmem %s4, %s2212
      $region60: #{basic_block_forward.3} parent=55 // pred_fallthru
        _
      // Predicated region
      $region61: #{basic_block_forward.3} parent=55 // pred_check
        %p2214 = pneg %p163
      $region62: #{basic_block_forward.3} parent=55 // pred_check_branch
        %2216 = sbr.rel (%p2214) target = $region64
      $region63: #{basic_block_forward.3} parent=55 // pred_region
        %p2217 = scmp.lt.s32.totalorder %s20, 1
        %s2218 = scalar_select %p2217, %s20, 1
        %s2219 = smul.addr %s2218, 16
        %s2220 = smul.addr %s2219, 8
        %s2221 = scalar_lea.vmem %s5, %s2220
      $region64: #{basic_block_forward.3} parent=55 // pred_fallthru
        _
      // Predicated region
      $region65: #{basic_block_forward.3} parent=55 // pred_check
        %p2222 = pneg %p189
      $region66: #{basic_block_forward.3} parent=55 // pred_check_branch
        %2224 = sbr.rel (%p2222) target = $region68
      $region67: #{basic_block_forward.3} parent=55 // pred_region
        %p2225 = scmp.lt.s32.totalorder %s20, 1
        %s2226 = scalar_select %p2225, %s20, 1
        %s2227 = smul.addr %s2226, 2
        %s2228 = scalar_lea.vmem %s6, %s2227
      $region68: #{basic_block_forward.3} parent=55 // pred_fallthru
        _
      // Predicated region
      $region69: #{basic_block_forward.3} parent=55 // pred_check
        %p2229 = pneg %p215
      $region70: #{basic_block_forward.3} parent=55 // pred_check_branch
        %2231 = sbr.rel (%p2229) target = $region72
      $region71: #{basic_block_forward.3} parent=55 // pred_region
        %p2232 = scmp.lt.s32.totalorder %s20, 1
        %s2233 = scalar_select %p2232, %s20, 1
        %s2234 = smul.addr %s2233, 2
        %s2235 = scalar_lea.vmem %s7, %s2234
      $region72: #{basic_block_forward.3} parent=55 // pred_fallthru
        _
    $region56: #{basic_block_forward.3} parent=5 // pred_fallthru
      _
  $region6: #{basic_block_forward.3} parent=0 // loop_footer
    %s18 = sadd.s32 1, %s14
  $region7: #{basic_block_forward.3} parent=0 // loop_footer_branch
    %13 = sbr.rel target = $region3
  $region8: #{basic_block_forward.3} parent=0 // loop_exit
    _

// kernel: basic_block_forward.4
$region0: #{basic_block_forward.4}
  #allocation0 [shape = 'u32[]', space=smem, size = 0x4, offset = 0x4, fixed_abs, tag = 'smem constant byte address 0x4 - core index']
  #allocation1 [shape = 'u32[144,128]{1,0:T(1,128)}', space=vmem, size = 0x12000, scoped, tag = 'internal scratch']
  #allocation2 [shape = 'f32[18,10,8]{2,1,0:T(8,128)}', space=vmem, size = 0x24000, scoped, tag = 'scratch operand']
  %s0 = inlined_call_operand.vmem [shape: f32[2,128,8], index: 0, kind: input, shape index: {}]
  %s1 = inlined_call_operand.vmem [shape: f32[1,8], index: 1, kind: input, shape index: {}]
  %s2 = inlined_call_operand.vmem [shape: f32[1,8], index: 2, kind: input, shape index: {}]
  %s3 = inlined_call_operand.vmem [shape: bf16[9,8,8], index: 3, kind: input, shape index: {}]
  %s4 = inlined_call_operand.vmem [shape: f32[2,128,8], index: 4, kind: output, shape index: {0}]
  %s5 = inlined_call_operand.vmem [shape: f32[2,2,8], index: 5, kind: output, shape index: {1}]
  %6 = xla_tuple %s4, %s5
  %s7 = sld [smem:[#allocation0]]
  $region57: #{basic_block_forward.4} parent=0
    _
  %s9 = ssub.s32 1, %s7
  %s10 = scalar_select 0, %s9, %s7
  loop: start=0, step=1, limit=4
  $region2: #{basic_block_forward.4} parent=0 // loop_pre_header
    _
  $region3: #{basic_block_forward.4} parent=0 // loop_header
    %s12 = sphi 0, %s16
    %p13 = scmp.ge.s32.totalorder %s12, 4
    %s22 = sphi 0, %s24
    %s25 = sphi 0, %s22
    %s26 = sphi 0, %s25
    %s42 = sphi 0, %s26
    %s46 = sphi 0, %s46
    %s48 = sphi 0, %s46
    %s49 = sphi 0, %s48
    %s63 = sphi 0, %s49
    %s67 = sphi 0, %s67
    %s69 = sphi 0, %s67
    %s70 = sphi 0, %s69
    %s84 = sphi 0, %s70
    %s88 = sphi 0, %s88
    %s90 = sphi 0, %s88
    %s91 = sphi 0, %s90
    %s105 = sphi 0, %s91
    %s111 = sphi 0, %s113
    %s114 = sphi 0, %s111
    %s115 = sphi 0, %s114
    %s131 = sphi 0, %s115
    %s137 = sphi 0, %s139
    %s140 = sphi 0, %s137
    %s141 = sphi 0, %s140
    %s157 = sphi 0, %s141
  $region4: #{basic_block_forward.4} parent=0 // loop_header_branch
    %15 = sbr.rel (%p13) target = $region8
  $region5: #{basic_block_forward.4} parent=0 // loop_body
    %s17 = ssub.s32 %s12, 1
    %s18 = ssub.s32 %s12, 2
    %s19 = sadd.s32 %s12, 1
    %s20 = ssub.s32 %s12, %s19
    %p21 = scmp.eq.s32.totalorder %s20, 0
    %s23 = sadd.s32 %s22, 1
    %s24 = scalar_select %p21, %s22, %s23
    %p27 = pneg %p21
    %p28 = scmp.eq.s32.totalorder %s12, 1
    %p29 = por %p27, %p28
    %p30 = scmp.ne.s32.totalorder %s22, %s25
    %p31 = scmp.eq.s32.totalorder %s12, 0
    %p32 = por %p30, %p31
    %p33 = scmp.ne.s32.totalorder %s22, %s25
    %p34 = scmp.eq.s32.totalorder %s17, 1
    %p35 = por %p33, %p34
    %p36 = scmp.ne.s32.totalorder %s25, %s26
    %p37 = scmp.eq.s32.totalorder %s17, 0
    %p38 = por %p36, %p37
    %p39 = scmp.ne.s32.totalorder %s25, %s26
    %p40 = scmp.eq.s32.totalorder %s18, 1
    %p41 = por %p39, %p40
    %p43 = scmp.ne.s32.totalorder %s26, %s42
    %p44 = scmp.eq.s32.totalorder %s18, 0
    %p45 = por %p43, %p44
    %s47 = sadd.s32 %s46, 1
    %p50 = scmp.eq.s32.totalorder %s12, 1
    %p51 = scmp.ne.s32.totalorder %s46, %s48
    %p52 = scmp.eq.s32.totalorder %s12, 0
    %p53 = por %p51, %p52
    %p54 = scmp.ne.s32.totalorder %s46, %s48
    %p55 = scmp.eq.s32.totalorder %s17, 1
    %p56 = por %p54, %p55
    %p57 = scmp.ne.s32.totalorder %s48, %s49
    %p58 = scmp.eq.s32.totalorder %s17, 0
    %p59 = por %p57, %p58
    %p60 = scmp.ne.s32.totalorder %s48, %s49
    %p61 = scmp.eq.s32.totalorder %s18, 1
    %p62 = por %p60, %p61
    %p64 = scmp.ne.s32.totalorder %s49, %s63
    %p65 = scmp.eq.s32.totalorder %s18, 0
    %p66 = por %p64, %p65
    %s68 = sadd.s32 %s67, 1
    %p71 = scmp.eq.s32.totalorder %s12, 1
    %p72 = scmp.ne.s32.totalorder %s67, %s69
    %p73 = scmp.eq.s32.totalorder %s12, 0
    %p74 = por %p72, %p73
    %p75 = scmp.ne.s32.totalorder %s67, %s69
    %p76 = scmp.eq.s32.totalorder %s17, 1
    %p77 = por %p75, %p76
    %p78 = scmp.ne.s32.totalorder %s69, %s70
    %p79 = scmp.eq.s32.totalorder %s17, 0
    %p80 = por %p78, %p79
    %p81 = scmp.ne.s32.totalorder %s69, %s70
    %p82 = scmp.eq.s32.totalorder %s18, 1
    %p83 = por %p81, %p82
    %p85 = scmp.ne.s32.totalorder %s70, %s84
    %p86 = scmp.eq.s32.totalorder %s18, 0
    %p87 = por %p85, %p86
    %s89 = sadd.s32 %s88, 1
    %p92 = scmp.eq.s32.totalorder %s12, 1
    %p93 = scmp.ne.s32.totalorder %s88, %s90
    %p94 = scmp.eq.s32.totalorder %s12, 0
    %p95 = por %p93, %p94
    %p96 = scmp.ne.s32.totalorder %s88, %s90
    %p97 = scmp.eq.s32.totalorder %s17, 1
    %p98 = por %p96, %p97
    %p99 = scmp.ne.s32.totalorder %s90, %s91
    %p100 = scmp.eq.s32.totalorder %s17, 0
    %p101 = por %p99, %p100
    %p102 = scmp.ne.s32.totalorder %s90, %s91
    %p103 = scmp.eq.s32.totalorder %s18, 1
    %p104 = por %p102, %p103
    %p106 = scmp.ne.s32.totalorder %s91, %s105
    %p107 = scmp.eq.s32.totalorder %s18, 0
    %p108 = por %p106, %p107
    %s109 = ssub.s32 %s12, %s19
    %p110 = scmp.eq.s32.totalorder %s109, 0
    %s112 = sadd.s32 %s111, 1
    %s113 = scalar_select %p110, %s111, %s112
    %p116 = pneg %p110
    %p117 = scmp.eq.s32.totalorder %s12, 1
    %p118 = por %p116, %p117
    %p119 = scmp.ne.s32.totalorder %s111, %s114
    %p120 = scmp.eq.s32.totalorder %s12, 0
    %p121 = por %p119, %p120
    %p122 = scmp.ne.s32.totalorder %s111, %s114
    %p123 = scmp.eq.s32.totalorder %s17, 1
    %p124 = por %p122, %p123
    %p125 = scmp.ne.s32.totalorder %s114, %s115
    %p126 = scmp.eq.s32.totalorder %s17, 0
    %p127 = por %p125, %p126
    %p128 = scmp.ne.s32.totalorder %s114, %s115
    %p129 = scmp.eq.s32.totalorder %s18, 1
    %p130 = por %p128, %p129
    %p132 = scmp.ne.s32.totalorder %s115, %s131
    %p133 = scmp.eq.s32.totalorder %s18, 0
    %p134 = por %p132, %p133
    %s135 = ssub.s32 %s12, %s19
    %p136 = scmp.eq.s32.totalorder %s135, 0
    %s138 = sadd.s32 %s137, 1
    %s139 = scalar_select %p136, %s137, %s138
    %p142 = pneg %p136
    %p143 = scmp.eq.s32.totalorder %s12, 1
    %p144 = por %p142, %p143
    %p145 = scmp.ne.s32.totalorder %s137, %s140
    %p146 = scmp.eq.s32.totalorder %s12, 0
    %p147 = por %p145, %p146
    %p148 = scmp.ne.s32.totalorder %s137, %s140
    %p149 = scmp.eq.s32.totalorder %s17, 1
    %p150 = por %p148, %p149
    %p151 = scmp.ne.s32.totalorder %s140, %s141
    %p152 = scmp.eq.s32.totalorder %s17, 0
    %p153 = por %p151, %p152
    %p154 = scmp.ne.s32.totalorder %s140, %s141
    %p155 = scmp.eq.s32.totalorder %s18, 1
    %p156 = por %p154, %p155
    %p158 = scmp.ne.s32.totalorder %s141, %s157
    %p159 = scmp.eq.s32.totalorder %s18, 0
    %p160 = por %p158, %p159
    %p161 = scmp.le.s32.totalorder 1, %s12
    %p162 = scmp.lt.s32.totalorder %s12, 3
    %p163 = pnand %p161, %p162
    %p164 = pneg %p163
    // Predicated region
    $region9: #{basic_block_forward.4} parent=5 // pred_check
      _
    $region10: #{basic_block_forward.4} parent=5 // pred_check_branch
      %166 = sbr.rel (%p163) target = $region12
    $region11: #{basic_block_forward.4} parent=5 // pred_region
      %s167 = ssub.s32 %s12, 1
      // Predicated region
      $region13: #{basic_block_forward.4} parent=11 // pred_check
        %p168 = pneg %p59
      $region14: #{basic_block_forward.4} parent=11 // pred_check_branch
        %170 = sbr.rel (%p168) target = $region16
      $region15: #{basic_block_forward.4} parent=11 // pred_region
        _
      $region16: #{basic_block_forward.4} parent=11 // pred_fallthru
        _
      // Predicated region
      $region17: #{basic_block_forward.4} parent=11 // pred_check
        %p171 = pneg %p80
      $region18: #{basic_block_forward.4} parent=11 // pred_check_branch
        %173 = sbr.rel (%p171) target = $region20
      $region19: #{basic_block_forward.4} parent=11 // pred_region
        _
      $region20: #{basic_block_forward.4} parent=11 // pred_fallthru
        _
      // Predicated region
      $region21: #{basic_block_forward.4} parent=11 // pred_check
        %p174 = pneg %p101
      $region22: #{basic_block_forward.4} parent=11 // pred_check_branch
        %176 = sbr.rel (%p174) target = $region24
      $region23: #{basic_block_forward.4} parent=11 // pred_region
        _
      $region24: #{basic_block_forward.4} parent=11 // pred_fallthru
        _
    $region12: #{basic_block_forward.4} parent=5 // pred_fallthru
      _
    %p177 = scmp.lt.s32.totalorder %s12, 2
    // Predicated region
    $region25: #{basic_block_forward.4} parent=5 // pred_check
      %p178 = pneg %p177
    $region26: #{basic_block_forward.4} parent=5 // pred_check_branch
      %180 = sbr.rel (%p178) target = $region28
    $region27: #{basic_block_forward.4} parent=5 // pred_region
      // Predicated region
      $region29: #{basic_block_forward.4} parent=27 // pred_check
        %p181 = pneg %p32
      $region30: #{basic_block_forward.4} parent=27 // pred_check_branch
        %183 = sbr.rel (%p181) target = $region32
      $region31: #{basic_block_forward.4} parent=27 // pred_region
        %p184 = scmp.lt.s32.totalorder %s12, 1
        %s185 = scalar_select %p184, %s12, 1
        %s186 = smul.addr %s185, 16
        %s187 = smul.addr %s186, 8
        %s188 = scalar_lea.vmem %s0, %s187
      $region32: #{basic_block_forward.4} parent=27 // pred_fallthru
        _
    $region28: #{basic_block_forward.4} parent=5 // pred_fallthru
      _
    %p189 = scmp.le.s32.totalorder 1, %s12
    %p190 = scmp.lt.s32.totalorder %s12, 3
    %p191 = pnand %p189, %p190
    %p192 = pneg %p191
    // Predicated region
    $region33: #{basic_block_forward.4} parent=5 // pred_check
      _
    $region34: #{basic_block_forward.4} parent=5 // pred_check_branch
      %194 = sbr.rel (%p191) target = $region36
    $region35: #{basic_block_forward.4} parent=5 // pred_region
      %s195 = ssub.s32 %s12, 1
      %p196 = scmp.lt.s32.totalorder %s17, 1
      %s197 = scalar_select %p196, %s17, 1
      %s198 = smul.addr %s197, 16
      %s199 = smul.addr %s198, 8
      %s200 = scalar_lea.vmem %s0, %s199
      %p201 = pneg %p38
      %p202 = pneg %p35
      %p203 = pneg %p59
      %p204 = pneg %p56
      %p205 = pneg %p80
      %p206 = pneg %p77
      %p207 = pneg %p101
      %p208 = pneg %p98
      %p209 = pneg %p127
      %p210 = pneg %p124
      %p211 = scmp.lt.s32.totalorder %s17, 1
      %s212 = scalar_select %p211, %s17, 1
      %s213 = smul.addr %s212, 16
      %s214 = smul.addr %s213, 8
      %s215 = scalar_lea.vmem %s4, %s214
      %p216 = pneg %p153
      %p217 = pneg %p150
      %p218 = scmp.lt.s32.totalorder %s17, 1
      %s219 = scalar_select %p218, %s17, 1
      %s220 = smul.addr %s219, 2
      %s221 = scalar_lea.vmem %s5, %s220
      %p222 = scmp.lt.s32.totalorder %s17, 1
      %s223 = scalar_select %p222, %s17, 1
      %s224 = smul.addr %s223, 16
      %s225 = smul.addr %s224, 8
      %s226 = scalar_lea.vmem %s0, %s225
      %p227 = scmp.lt.s32.totalorder %s17, 1
      %s228 = scalar_select %p227, %s17, 1
      %s229 = smul.addr %s228, 16
      %s230 = smul.addr %s229, 8
      %s231 = scalar_lea.vmem %s4, %s230
      %p232 = scmp.lt.s32.totalorder %s17, 1
      %s233 = scalar_select %p232, %s17, 1
      %s234 = smul.addr %s233, 2
      %s235 = scalar_lea.vmem %s5, %s234
      %v237 = vld [vmem:[%s226] sm:$0xff]
      %v238 = vld [vmem:[%s226 + $0x8] sm:$0xff]
      %v239 = vld [vmem:[%s226 + $0x10] sm:$0xff]
      %v240 = vld [vmem:[%s226 + $0x18] sm:$0xff]
      %v241 = vld [vmem:[%s226 + $0x20] sm:$0xff]
      %v242 = vld [vmem:[%s226 + $0x28] sm:$0xff]
      %v243 = vld [vmem:[%s226 + $0x30] sm:$0xff]
      %v244 = vld [vmem:[%s226 + $0x38] sm:$0xff]
      %v245 = vld [vmem:[%s226 + $0x40] sm:$0xff]
      %v246 = vld [vmem:[%s226 + $0x48] sm:$0xff]
      %v247 = vld [vmem:[%s226 + $0x50] sm:$0xff]
      %v248 = vld [vmem:[%s226 + $0x58] sm:$0xff]
      %v249 = vld [vmem:[%s226 + $0x60] sm:$0xff]
      %v250 = vld [vmem:[%s226 + $0x68] sm:$0xff]
      %v251 = vld [vmem:[%s226 + $0x70] sm:$0xff]
      %v252 = vld [vmem:[%s226 + $0x78] sm:$0xff]
      %v253 = vld [vmem:[%s1] sm:$0x1]
      %v255 = vlaneseq
      %v256 = vshrl.u32 %v255, 7
      %v257 = vsub.s32 0, %v256
      %v258 = vrot.slane %v253, %v257
      %v260 = vmul.f32 %v237, %v258
      %v261 = vmul.f32 %v238, %v258
      %v262 = vmul.f32 %v239, %v258
      %v263 = vmul.f32 %v240, %v258
      %v264 = vmul.f32 %v241, %v258
      %v265 = vmul.f32 %v242, %v258
      %v266 = vmul.f32 %v243, %v258
      %v267 = vmul.f32 %v244, %v258
      %v268 = vmul.f32 %v245, %v258
      %v269 = vmul.f32 %v246, %v258
      %v270 = vmul.f32 %v247, %v258
      %v271 = vmul.f32 %v248, %v258
      %v272 = vmul.f32 %v249, %v258
      %v273 = vmul.f32 %v250, %v258
      %v274 = vmul.f32 %v251, %v258
      %v275 = vmul.f32 %v252, %v258
      %v276 = vld [vmem:[%s2] sm:$0x1]
      %v278 = vlaneseq
      %v279 = vshrl.u32 %v278, 7
      %v280 = vsub.s32 0, %v279
      %v281 = vrot.slane %v276, %v280
      %v283 = vadd.f32 %v260, %v281
      %v284 = vadd.f32 %v261, %v281
      %v285 = vadd.f32 %v262, %v281
      %v286 = vadd.f32 %v263, %v281
      %v287 = vadd.f32 %v264, %v281
      %v288 = vadd.f32 %v265, %v281
      %v289 = vadd.f32 %v266, %v281
      %v290 = vadd.f32 %v267, %v281
      %v291 = vadd.f32 %v268, %v281
      %v292 = vadd.f32 %v269, %v281
      %v293 = vadd.f32 %v270, %v281
      %v294 = vadd.f32 %v271, %v281
      %v295 = vadd.f32 %v272, %v281
      %v296 = vadd.f32 %v273, %v281
      %v297 = vadd.f32 %v274, %v281
      %v298 = vadd.f32 %v275, %v281
      %v299 = vmax.f32 %v283, 0.0
      %v300 = vmax.f32 %v284, 0.0
      %v301 = vmax.f32 %v285, 0.0
      %v302 = vmax.f32 %v286, 0.0
      %v303 = vmax.f32 %v287, 0.0
      %v304 = vmax.f32 %v288, 0.0
      %v305 = vmax.f32 %v289, 0.0
      %v306 = vmax.f32 %v290, 0.0
      %v307 = vmax.f32 %v291, 0.0
      %v308 = vmax.f32 %v292, 0.0
      %v309 = vmax.f32 %v293, 0.0
      %v310 = vmax.f32 %v294, 0.0
      %v311 = vmax.f32 %v295, 0.0
      %v312 = vmax.f32 %v296, 0.0
      %v313 = vmax.f32 %v297, 0.0
      %v314 = vmax.f32 %v298, 0.0
      %vm315 = vcmask 64512
      %316 = vst.msk [vmem:[#allocation2] sm:$0xff] %vm315, 0.0
      %vm317 = vcmask 58368
      %318 = vst.msk [vmem:[#allocation2 + $0x8] sm:$0x3] %vm317, 0.0
      %319 = vst.msk [vmem:[#allocation2 + $0x10] sm:$0xff] %vm315, 0.0
      %320 = vst.msk [vmem:[#allocation2 + $0x18] sm:$0x3] %vm317, 0.0
      %321 = vst.msk [vmem:[#allocation2 + $0x20] sm:$0xff] %vm315, 0.0
      %322 = vst.msk [vmem:[#allocation2 + $0x28] sm:$0x3] %vm317, 0.0
      %323 = vst.msk [vmem:[#allocation2 + $0x30] sm:$0xff] %vm315, 0.0
      %324 = vst.msk [vmem:[#allocation2 + $0x38] sm:$0x3] %vm317, 0.0
      %325 = vst.msk [vmem:[#allocation2 + $0x40] sm:$0xff] %vm315, 0.0
      %326 = vst.msk [vmem:[#allocation2 + $0x48] sm:$0x3] %vm317, 0.0
      %327 = vst.msk [vmem:[#allocation2 + $0x50] sm:$0xff] %vm315, 0.0
      %328 = vst.msk [vmem:[#allocation2 + $0x58] sm:$0x3] %vm317, 0.0
      %329 = vst.msk [vmem:[#allocation2 + $0x60] sm:$0xff] %vm315, 0.0
      %330 = vst.msk [vmem:[#allocation2 + $0x68] sm:$0x3] %vm317, 0.0
      %331 = vst.msk [vmem:[#allocation2 + $0x70] sm:$0xff] %vm315, 0.0
      %332 = vst.msk [vmem:[#allocation2 + $0x78] sm:$0x3] %vm317, 0.0
      %333 = vst.msk [vmem:[#allocation2 + $0x80] sm:$0xff] %vm315, 0.0
      %334 = vst.msk [vmem:[#allocation2 + $0x88] sm:$0x3] %vm317, 0.0
      %335 = vst.msk [vmem:[#allocation2 + $0x90] sm:$0xff] %vm315, 0.0
      %336 = vst.msk [vmem:[#allocation2 + $0x98] sm:$0x3] %vm317, 0.0
      %337 = vst.msk [vmem:[#allocation2 + $0xa0] sm:$0xff] %vm315, 0.0
      %338 = vst.msk [vmem:[#allocation2 + $0xa8] sm:$0x3] %vm317, 0.0
      %339 = vst.msk [vmem:[#allocation2 + $0xb0] sm:$0xff] %vm315, 0.0
      %340 = vst.msk [vmem:[#allocation2 + $0xb8] sm:$0x3] %vm317, 0.0
      %341 = vst.msk [vmem:[#allocation2 + $0xc0] sm:$0xff] %vm315, 0.0
      %342 = vst.msk [vmem:[#allocation2 + $0xc8] sm:$0x3] %vm317, 0.0
      %343 = vst.msk [vmem:[#allocation2 + $0xd0] sm:$0xff] %vm315, 0.0
      %344 = vst.msk [vmem:[#allocation2 + $0xd8] sm:$0x3] %vm317, 0.0
      %345 = vst.msk [vmem:[#allocation2 + $0xe0] sm:$0xff] %vm315, 0.0
      %346 = vst.msk [vmem:[#allocation2 + $0xe8] sm:$0x3] %vm317, 0.0
      %347 = vst.msk [vmem:[#allocation2 + $0xf0] sm:$0xff] %vm315, 0.0
      %348 = vst.msk [vmem:[#allocation2 + $0xf8] sm:$0x3] %vm317, 0.0
      %349 = vst.msk [vmem:[#allocation2 + $0x100] sm:$0xff] %vm315, 0.0
      %350 = vst.msk [vmem:[#allocation2 + $0x108] sm:$0x3] %vm317, 0.0
      %351 = vst.msk [vmem:[#allocation2 + $0x110] sm:$0xff] %vm315, 0.0
      %352 = vst.msk [vmem:[#allocation2 + $0x118] sm:$0x3] %vm317, 0.0
      %s353 = scalar_lea.vmem [#allocation2], 16
      %354 = vst.msk [vmem:[%s353 + $0x1] sm:$0xff] %vm315, %v299
      %355 = vst.msk [vmem:[%s353 + $0x11] sm:$0xff] %vm315, %v300
      %356 = vst.msk [vmem:[%s353 + $0x21] sm:$0xff] %vm315, %v301
      %357 = vst.msk [vmem:[%s353 + $0x31] sm:$0xff] %vm315, %v302
      %358 = vst.msk [vmem:[%s353 + $0x41] sm:$0xff] %vm315, %v303
      %359 = vst.msk [vmem:[%s353 + $0x51] sm:$0xff] %vm315, %v304
      %360 = vst.msk [vmem:[%s353 + $0x61] sm:$0xff] %vm315, %v305
      %361 = vst.msk [vmem:[%s353 + $0x71] sm:$0xff] %vm315, %v306
      %362 = vst.msk [vmem:[%s353 + $0x81] sm:$0xff] %vm315, %v307
      %363 = vst.msk [vmem:[%s353 + $0x91] sm:$0xff] %vm315, %v308
      %364 = vst.msk [vmem:[%s353 + $0xa1] sm:$0xff] %vm315, %v309
      %365 = vst.msk [vmem:[%s353 + $0xb1] sm:$0xff] %vm315, %v310
      %366 = vst.msk [vmem:[%s353 + $0xc1] sm:$0xff] %vm315, %v311
      %367 = vst.msk [vmem:[%s353 + $0xd1] sm:$0xff] %vm315, %v312
      %368 = vst.msk [vmem:[%s353 + $0xe1] sm:$0xff] %vm315, %v313
      %369 = vst.msk [vmem:[%s353 + $0xf1] sm:$0xff] %vm315, %v314
      %v370 = vld [vmem:[#allocation2] sm:$0xff]
      %v371 = vld [vmem:[#allocation2 + $0x10] sm:$0xff]
      %v372 = vld [vmem:[#allocation2 + $0x20] sm:$0xff]
      %v373 = vld [vmem:[#allocation2 + $0x30] sm:$0xff]
      %v374 = vld [vmem:[#allocation2 + $0x40] sm:$0xff]
      %v375 = vld [vmem:[#allocation2 + $0x50] sm:$0xff]
      %v376 = vld [vmem:[#allocation2 + $0x60] sm:$0xff]
      %v377 = vld [vmem:[#allocation2 + $0x70] sm:$0xff]
      %v378 = vld [vmem:[#allocation2 + $0x80] sm:$0xff]
      %v379 = vld [vmem:[#allocation2 + $0x90] sm:$0xff]
      %v380 = vld [vmem:[#allocation2 + $0xa0] sm:$0xff]
      %v381 = vld [vmem:[#allocation2 + $0xb0] sm:$0xff]
      %v382 = vld [vmem:[#allocation2 + $0xc0] sm:$0xff]
      %v383 = vld [vmem:[#allocation2 + $0xd0] sm:$0xff]
      %v384 = vld [vmem:[#allocation2 + $0xe0] sm:$0xff]
      %v385 = vld [vmem:[#allocation2 + $0xf0] sm:$0xff]
      %v386 = vpack.c.bf16 %v371, %v370
      %v387 = vpack.c.bf16 %v373, %v372
      %v388 = vpack.c.bf16 %v375, %v374
      %v389 = vpack.c.bf16 %v377, %v376
      %v390 = vpack.c.bf16 %v379, %v378
      %v391 = vpack.c.bf16 %v381, %v380
      %v392 = vpack.c.bf16 %v383, %v382
      %v393 = vpack.c.bf16 %v385, %v384
      %v394 = vld [vmem:[%s3] sm:$0xf]
      %v395 = vld [vmem:[#allocation2 + $0x1] sm:$0xff]
      %v396 = vld [vmem:[#allocation2 + $0x11] sm:$0xff]
      %v397 = vld [vmem:[#allocation2 + $0x21] sm:$0xff]
      %v398 = vld [vmem:[#allocation2 + $0x31] sm:$0xff]
      %v399 = vld [vmem:[#allocation2 + $0x41] sm:$0xff]
      %v400 = vld [vmem:[#allocation2 + $0x51] sm:$0xff]
      %v401 = vld [vmem:[#allocation2 + $0x61] sm:$0xff]
      %v402 = vld [vmem:[#allocation2 + $0x71] sm:$0xff]
      %v403 = vld [vmem:[#allocation2 + $0x81] sm:$0xff]
      %v404 = vld [vmem:[#allocation2 + $0x91] sm:$0xff]
      %v405 = vld [vmem:[#allocation2 + $0xa1] sm:$0xff]
      %v406 = vld [vmem:[#allocation2 + $0xb1] sm:$0xff]
      %v407 = vld [vmem:[#allocation2 + $0xc1] sm:$0xff]
      %v408 = vld [vmem:[#allocation2 + $0xd1] sm:$0xff]
      %v409 = vld [vmem:[#allocation2 + $0xe1] sm:$0xff]
      %v410 = vld [vmem:[#allocation2 + $0xf1] sm:$0xff]
      %v411 = vpack.c.bf16 %v396, %v395
      %v412 = vpack.c.bf16 %v398, %v397
      %v413 = vpack.c.bf16 %v400, %v399
      %v414 = vpack.c.bf16 %v402, %v401
      %v415 = vpack.c.bf16 %v404, %v403
      %v416 = vpack.c.bf16 %v406, %v405
      %v417 = vpack.c.bf16 %v408, %v407
      %v418 = vpack.c.bf16 %v410, %v409
      %s419 = scalar_lea.vmem %s3, 4
      %v420 = vld [vmem:[%s419] sm:$0xf]
      %v422 = vsel %vm315, %v411, 0
      %v425 = vsel %vm315, %v412, 0
      %v428 = vsel %vm315, %v413, 0
      %v431 = vsel %vm315, %v414, 0
      %v434 = vsel %vm315, %v415, 0
      %v437 = vsel %vm315, %v416, 0
      %v440 = vsel %vm315, %v417, 0
      %v443 = vsel %vm315, %v418, 0
      %vm445 = vcmask 1043456
      %v447 = vsel %vm445, %v420, 0
      %449 = vmatprep.subr.bf16.mxu0 0
      %450 = vmatpush1.bf16.msra.mxu0 %v447
      %451 = vmatprep.subr.bf16.mxu0 0
      %452 = vmatpush1.bf16.msra.mxu0 0
      %453 = vmatprep.subr.bf16.mxu0 0
      %454 = vmatpush1.bf16.msra.mxu0 0
      %455 = vmatprep.subr.bf16.mxu0 0
      %456 = vmatpush1.bf16.msra.mxu0 0
      %457 = vmatprep.subr.bf16.mxu0 0
      %458 = vmatpush1.bf16.msra.mxu0 0
      %459 = vmatprep.subr.bf16.mxu0 0
      %460 = vmatpush1.bf16.msra.mxu0 0
      %461 = vmatprep.subr.bf16.mxu0 0
      %462 = vmatpush1.bf16.msra.mxu0 0
      %463 = vmatprep.subr.bf16.mxu0 0
      %464 = vmatpush1.bf16.msra.mxu0 0
      %465 = vmatprep.subr.bf16.mxu0 0
      %466 = vmatpush1.bf16.msra.mxu0 0
      %467 = vmatprep.subr.bf16.mxu0 0
      %468 = vmatpush1.bf16.msra.mxu0 0
      %469 = vmatprep.subr.bf16.mxu0 0
      %470 = vmatpush1.bf16.msra.mxu0 0
      %471 = vmatprep.subr.bf16.mxu0 0
      %472 = vmatpush1.bf16.msra.mxu0 0
      %473 = vmatprep.subr.bf16.mxu0 0
      %474 = vmatpush1.bf16.msra.mxu0 0
      %475 = vmatprep.subr.bf16.mxu0 0
      %476 = vmatpush1.bf16.msra.mxu0 0
      %477 = vmatprep.subr.bf16.mxu0 0
      %478 = vmatpush1.bf16.msra.mxu0 0
      %479 = vmatprep.subr.bf16.mxu0 0
      %480 = vmatpush1.bf16.msra.mxu0 0
      %481 = vmatprep.mubr.bf16.mxu0 0
      %482 = vmatmul.mubr.bf16.gmra.mrb[0].mxu0 %v422
      %v483 = vpop.f32.mrb[0].mxu0
      %v484 = vadd.f32 0.0, %v483
      %v485 = vpop.f32.mrb[0].mxu0
      %v486 = vpop.f32.mrb[0].mxu0
      %v487 = vadd.f32 0.0, %v486
      %v488 = vpop.f32.mrb[0].mxu0
      %489 = vmatprep.mubr.bf16.mxu0 0
      %490 = vmatmul.mubr.bf16.gmra.mrb[0].mxu0 %v425
      %v491 = vpop.f32.mrb[0].mxu0
      %v492 = vadd.f32 0.0, %v491
      %v493 = vpop.f32.mrb[0].mxu0
      %v494 = vpop.f32.mrb[0].mxu0
      %v495 = vadd.f32 0.0, %v494
      %v496 = vpop.f32.mrb[0].mxu0
      %497 = vmatprep.mubr.bf16.mxu0 0
      %498 = vmatmul.mubr.bf16.gmra.mrb[0].mxu0 %v428
      %v499 = vpop.f32.mrb[0].mxu0
      %v500 = vadd.f32 0.0, %v499
      %v501 = vpop.f32.mrb[0].mxu0
      %v502 = vpop.f32.mrb[0].mxu0
      %v503 = vadd.f32 0.0, %v502
      %v504 = vpop.f32.mrb[0].mxu0
      %505 = vmatprep.mubr.bf16.mxu0 0
      %506 = vmatmul.mubr.bf16.gmra.mrb[0].mxu0 %v431
      %v507 = vpop.f32.mrb[0].mxu0
      %v508 = vadd.f32 0.0, %v507
      %v509 = vpop.f32.mrb[0].mxu0
      %v510 = vpop.f32.mrb[0].mxu0
      %v511 = vadd.f32 0.0, %v510
      %v512 = vpop.f32.mrb[0].mxu0
      %513 = vmatprep.mubr.bf16.mxu0 0
      %514 = vmatmul.mubr.bf16.gmra.mrb[0].mxu0 %v434
      %v515 = vpop.f32.mrb[0].mxu0
      %v516 = vadd.f32 0.0, %v515
      %v517 = vpop.f32.mrb[0].mxu0
      %v518 = vpop.f32.mrb[0].mxu0
      %v519 = vadd.f32 0.0, %v518
      %v520 = vpop.f32.mrb[0].mxu0
      %521 = vmatprep.mubr.bf16.mxu0 0
      %522 = vmatmul.mubr.bf16.gmra.mrb[0].mxu0 %v437
      %v523 = vpop.f32.mrb[0].mxu0
      %v524 = vadd.f32 0.0, %v523
      %v525 = vpop.f32.mrb[0].mxu0
      %v526 = vpop.f32.mrb[0].mxu0
      %v527 = vadd.f32 0.0, %v526
      %v528 = vpop.f32.mrb[0].mxu0
      %529 = vmatprep.mubr.bf16.mxu0 0
      %530 = vmatmul.mubr.bf16.gmra.mrb[0].mxu0 %v440
      %v531 = vpop.f32.mrb[0].mxu0
      %v532 = vadd.f32 0.0, %v531
      %v533 = vpop.f32.mrb[0].mxu0
      %v534 = vpop.f32.mrb[0].mxu0
      %v535 = vadd.f32 0.0, %v534
      %v536 = vpop.f32.mrb[0].mxu0
      %537 = vmatprep.mubr.bf16.mxu0 0
      %538 = vmatmul.mubr.bf16.gmra.mrb[0].mxu0 %v443
      %v539 = vpop.f32.mrb[0].mxu0
      %v540 = vadd.f32 0.0, %v539
      %v541 = vpop.f32.mrb[0].mxu0
      %v542 = vpop.f32.mrb[0].mxu0
      %v543 = vadd.f32 0.0, %v542
      %v544 = vpop.f32.mrb[0].mxu0
      %545 = vdwg.mxu0
      %v547 = vsel %vm315, %v386, 0
      %v550 = vsel %vm315, %v387, 0
      %v553 = vsel %vm315, %v388, 0
      %v556 = vsel %vm315, %v389, 0
      %v559 = vsel %vm315, %v390, 0
      %v562 = vsel %vm315, %v391, 0
      %v565 = vsel %vm315, %v392, 0
      %v568 = vsel %vm315, %v393, 0
      %v571 = vsel %vm445, %v394, 0
      %573 = vmatprep.subr.bf16.mxu0 0
      %574 = vmatpush1.bf16.msra.mxu0 %v571
      %575 = vmatprep.subr.bf16.mxu0 0
      %576 = vmatpush1.bf16.msra.mxu0 0
      %577 = vmatprep.subr.bf16.mxu0 0
      %578 = vmatpush1.bf16.msra.mxu0 0
      %579 = vmatprep.subr.bf16.mxu0 0
      %580 = vmatpush1.bf16.msra.mxu0 0
      %581 = vmatprep.subr.bf16.mxu0 0
      %582 = vmatpush1.bf16.msra.mxu0 0
      %583 = vmatprep.subr.bf16.mxu0 0
      %584 = vmatpush1.bf16.msra.mxu0 0
      %585 = vmatprep.subr.bf16.mxu0 0
      %586 = vmatpush1.bf16.msra.mxu0 0
      %587 = vmatprep.subr.bf16.mxu0 0
      %588 = vmatpush1.bf16.msra.mxu0 0
      %589 = vmatprep.subr.bf16.mxu0 0
      %590 = vmatpush1.bf16.msra.mxu0 0
      %591 = vmatprep.subr.bf16.mxu0 0
      %592 = vmatpush1.bf16.msra.mxu0 0
      %593 = vmatprep.subr.bf16.mxu0 0
      %594 = vmatpush1.bf16.msra.mxu0 0
      %595 = vmatprep.subr.bf16.mxu0 0
      %596 = vmatpush1.bf16.msra.mxu0 0
      %597 = vmatprep.subr.bf16.mxu0 0
      %598 = vmatpush1.bf16.msra.mxu0 0
      %599 = vmatprep.subr.bf16.mxu0 0
      %600 = vmatpush1.bf16.msra.mxu0 0
      %601 = vmatprep.subr.bf16.mxu0 0
      %602 = vmatpush1.bf16.msra.mxu0 0
      %603 = vmatprep.subr.bf16.mxu0 0
      %604 = vmatpush1.bf16.msra.mxu0 0
      %605 = vmatprep.mubr.bf16.mxu0 0
      %606 = vmatmul.mubr.bf16.gmra.mrb[0].mxu0 %v547
      %v607 = vpop.f32.mrb[0].mxu0
      %v608 = vadd.f32 %v484, %v607
      %v609 = vpop.f32.mrb[0].mxu0
      %v610 = vpop.f32.mrb[0].mxu0
      %v611 = vadd.f32 %v487, %v610
      %v612 = vpop.f32.mrb[0].mxu0
      %613 = vmatprep.mubr.bf16.mxu0 0
      %614 = vmatmul.mubr.bf16.gmra.mrb[0].mxu0 %v550
      %v615 = vpop.f32.mrb[0].mxu0
      %v616 = vadd.f32 %v492, %v615
      %v617 = vpop.f32.mrb[0].mxu0
      %v618 = vpop.f32.mrb[0].mxu0
      %v619 = vadd.f32 %v495, %v618
      %v620 = vpop.f32.mrb[0].mxu0
      %621 = vmatprep.mubr.bf16.mxu0 0
      %622 = vmatmul.mubr.bf16.gmra.mrb[0].mxu0 %v553
      %v623 = vpop.f32.mrb[0].mxu0
      %v624 = vadd.f32 %v500, %v623
      %v625 = vpop.f32.mrb[0].mxu0
      %v626 = vpop.f32.mrb[0].mxu0
      %v627 = vadd.f32 %v503, %v626
      %v628 = vpop.f32.mrb[0].mxu0
      %629 = vmatprep.mubr.bf16.mxu0 0
      %630 = vmatmul.mubr.bf16.gmra.mrb[0].mxu0 %v556
      %v631 = vpop.f32.mrb[0].mxu0
      %v632 = vadd.f32 %v508, %v631
      %v633 = vpop.f32.mrb[0].mxu0
      %v634 = vpop.f32.mrb[0].mxu0
      %v635 = vadd.f32 %v511, %v634
      %v636 = vpop.f32.mrb[0].mxu0
      %637 = vmatprep.mubr.bf16.mxu0 0
      %638 = vmatmul.mubr.bf16.gmra.mrb[0].mxu0 %v559
      %v639 = vpop.f32.mrb[0].mxu0
      %v640 = vadd.f32 %v516, %v639
      %v641 = vpop.f32.mrb[0].mxu0
      %v642 = vpop.f32.mrb[0].mxu0
      %v643 = vadd.f32 %v519, %v642
      %v644 = vpop.f32.mrb[0].mxu0
      %645 = vmatprep.mubr.bf16.mxu0 0
      %646 = vmatmul.mubr.bf16.gmra.mrb[0].mxu0 %v562
      %v647 = vpop.f32.mrb[0].mxu0
      %v648 = vadd.f32 %v524, %v647
      %v649 = vpop.f32.mrb[0].mxu0
      %v650 = vpop.f32.mrb[0].mxu0
      %v651 = vadd.f32 %v527, %v650
      %v652 = vpop.f32.mrb[0].mxu0
      %653 = vmatprep.mubr.bf16.mxu0 0
      %654 = vmatmul.mubr.bf16.gmra.mrb[0].mxu0 %v565
      %v655 = vpop.f32.mrb[0].mxu0
      %v656 = vadd.f32 %v532, %v655
      %v657 = vpop.f32.mrb[0].mxu0
      %v658 = vpop.f32.mrb[0].mxu0
      %v659 = vadd.f32 %v535, %v658
      %v660 = vpop.f32.mrb[0].mxu0
      %661 = vmatprep.mubr.bf16.mxu0 0
      %662 = vmatmul.mubr.bf16.gmra.mrb[0].mxu0 %v568
      %v663 = vpop.f32.mrb[0].mxu0
      %v664 = vadd.f32 %v540, %v663
      %v665 = vpop.f32.mrb[0].mxu0
      %v666 = vpop.f32.mrb[0].mxu0
      %v667 = vadd.f32 %v543, %v666
      %v668 = vpop.f32.mrb[0].mxu0
      %669 = vdwg.mxu0
      %v670 = vld [vmem:[#allocation2 + $0x2] sm:$0xff]
      %v671 = vld [vmem:[#allocation2 + $0x12] sm:$0xff]
      %v672 = vld [vmem:[#allocation2 + $0x22] sm:$0xff]
      %v673 = vld [vmem:[#allocation2 + $0x32] sm:$0xff]
      %v674 = vld [vmem:[#allocation2 + $0x42] sm:$0xff]
      %v675 = vld [vmem:[#allocation2 + $0x52] sm:$0xff]
      %v676 = vld [vmem:[#allocation2 + $0x62] sm:$0xff]
      %v677 = vld [vmem:[#allocation2 + $0x72] sm:$0xff]
      %v678 = vld [vmem:[#allocation2 + $0x82] sm:$0xff]
      %v679 = vld [vmem:[#allocation2 + $0x92] sm:$0xff]
      %v680 = vld [vmem:[#allocation2 + $0xa2] sm:$0xff]
      %v681 = vld [vmem:[#allocation2 + $0xb2] sm:$0xff]
      %v682 = vld [vmem:[#allocation2 + $0xc2] sm:$0xff]
      %v683 = vld [vmem:[#allocation2 + $0xd2] sm:$0xff]
      %v684 = vld [vmem:[#allocation2 + $0xe2] sm:$0xff]
      %v685 = vld [vmem:[#allocation2 + $0xf2] sm:$0xff]
      %v686 = vpack.c.bf16 %v671, %v670
      %v687 = vpack.c.bf16 %v673, %v672
      %v688 = vpack.c.bf16 %v675, %v674
      %v689 = vpack.c.bf16 %v677, %v676
      %v690 = vpack.c.bf16 %v679, %v678
      %v691 = vpack.c.bf16 %v681, %v680
      %v692 = vpack.c.bf16 %v683, %v682
      %v693 = vpack.c.bf16 %v685, %v684
      %s694 = scalar_lea.vmem %s3, 8
      %v695 = vld [vmem:[%s694] sm:$0xf]
      %v697 = vsel %vm315, %v686, 0
      %v700 = vsel %vm315, %v687, 0
      %v703 = vsel %vm315, %v688, 0
      %v706 = vsel %vm315, %v689, 0
      %v709 = vsel %vm315, %v690, 0
      %v712 = vsel %vm315, %v691, 0
      %v715 = vsel %vm315, %v692, 0
      %v718 = vsel %vm315, %v693, 0
      %v721 = vsel %vm445, %v695, 0
      %723 = vmatprep.subr.bf16.mxu0 0
      %724 = vmatpush1.bf16.msra.mxu0 %v721
      %725 = vmatprep.subr.bf16.mxu0 0
      %726 = vmatpush1.bf16.msra.mxu0 0
      %727 = vmatprep.subr.bf16.mxu0 0
      %728 = vmatpush1.bf16.msra.mxu0 0
      %729 = vmatprep.subr.bf16.mxu0 0
      %730 = vmatpush1.bf16.msra.mxu0 0
      %731 = vmatprep.subr.bf16.mxu0 0
      %732 = vmatpush1.bf16.msra.mxu0 0
      %733 = vmatprep.subr.bf16.mxu0 0
      %734 = vmatpush1.bf16.msra.mxu0 0
      %735 = vmatprep.subr.bf16.mxu0 0
      %736 = vmatpush1.bf16.msra.mxu0 0
      %737 = vmatprep.subr.bf16.mxu0 0
      %738 = vmatpush1.bf16.msra.mxu0 0
      %739 = vmatprep.subr.bf16.mxu0 0
      %740 = vmatpush1.bf16.msra.mxu0 0
      %741 = vmatprep.subr.bf16.mxu0 0
      %742 = vmatpush1.bf16.msra.mxu0 0
      %743 = vmatprep.subr.bf16.mxu0 0
      %744 = vmatpush1.bf16.msra.mxu0 0
      %745 = vmatprep.subr.bf16.mxu0 0
      %746 = vmatpush1.bf16.msra.mxu0 0
      %747 = vmatprep.subr.bf16.mxu0 0
      %748 = vmatpush1.bf16.msra.mxu0 0
      %749 = vmatprep.subr.bf16.mxu0 0
      %750 = vmatpush1.bf16.msra.mxu0 0
      %751 = vmatprep.subr.bf16.mxu0 0
      %752 = vmatpush1.bf16.msra.mxu0 0
      %753 = vmatprep.subr.bf16.mxu0 0
      %754 = vmatpush1.bf16.msra.mxu0 0
      %755 = vmatprep.mubr.bf16.mxu0 0
      %756 = vmatmul.mubr.bf16.gmra.mrb[0].mxu0 %v697
      %v757 = vpop.f32.mrb[0].mxu0
      %v758 = vadd.f32 0.0, %v757
      %v759 = vpop.f32.mrb[0].mxu0
      %v760 = vpop.f32.mrb[0].mxu0
      %v761 = vadd.f32 0.0, %v760
      %v762 = vpop.f32.mrb[0].mxu0
      %763 = vmatprep.mubr.bf16.mxu0 0
      %764 = vmatmul.mubr.bf16.gmra.mrb[0].mxu0 %v700
      %v765 = vpop.f32.mrb[0].mxu0
      %v766 = vadd.f32 0.0, %v765
      %v767 = vpop.f32.mrb[0].mxu0
      %v768 = vpop.f32.mrb[0].mxu0
      %v769 = vadd.f32 0.0, %v768
      %v770 = vpop.f32.mrb[0].mxu0
      %771 = vmatprep.mubr.bf16.mxu0 0
      %772 = vmatmul.mubr.bf16.gmra.mrb[0].mxu0 %v703
      %v773 = vpop.f32.mrb[0].mxu0
      %v774 = vadd.f32 0.0, %v773
      %v775 = vpop.f32.mrb[0].mxu0
      %v776 = vpop.f32.mrb[0].mxu0
      %v777 = vadd.f32 0.0, %v776
      %v778 = vpop.f32.mrb[0].mxu0
      %779 = vmatprep.mubr.bf16.mxu0 0
      %780 = vmatmul.mubr.bf16.gmra.mrb[0].mxu0 %v706
      %v781 = vpop.f32.mrb[0].mxu0
      %v782 = vadd.f32 0.0, %v781
      %v783 = vpop.f32.mrb[0].mxu0
      %v784 = vpop.f32.mrb[0].mxu0
      %v785 = vadd.f32 0.0, %v784
      %v786 = vpop.f32.mrb[0].mxu0
      %787 = vmatprep.mubr.bf16.mxu0 0
      %788 = vmatmul.mubr.bf16.gmra.mrb[0].mxu0 %v709
      %v789 = vpop.f32.mrb[0].mxu0
      %v790 = vadd.f32 0.0, %v789
      %v791 = vpop.f32.mrb[0].mxu0
      %v792 = vpop.f32.mrb[0].mxu0
      %v793 = vadd.f32 0.0, %v792
      %v794 = vpop.f32.mrb[0].mxu0
      %795 = vmatprep.mubr.bf16.mxu0 0
      %796 = vmatmul.mubr.bf16.gmra.mrb[0].mxu0 %v712
      %v797 = vpop.f32.mrb[0].mxu0
      %v798 = vadd.f32 0.0, %v797
      %v799 = vpop.f32.mrb[0].mxu0
      %v800 = vpop.f32.mrb[0].mxu0
      %v801 = vadd.f32 0.0, %v800
      %v802 = vpop.f32.mrb[0].mxu0
      %803 = vmatprep.mubr.bf16.mxu0 0
      %804 = vmatmul.mubr.bf16.gmra.mrb[0].mxu0 %v715
      %v805 = vpop.f32.mrb[0].mxu0
      %v806 = vadd.f32 0.0, %v805
      %v807 = vpop.f32.mrb[0].mxu0
      %v808 = vpop.f32.mrb[0].mxu0
      %v809 = vadd.f32 0.0, %v808
      %v810 = vpop.f32.mrb[0].mxu0
      %811 = vmatprep.mubr.bf16.mxu0 0
      %812 = vmatmul.mubr.bf16.gmra.mrb[0].mxu0 %v718
      %v813 = vpop.f32.mrb[0].mxu0
      %v814 = vadd.f32 0.0, %v813
      %v815 = vpop.f32.mrb[0].mxu0
      %v816 = vpop.f32.mrb[0].mxu0
      %v817 = vadd.f32 0.0, %v816
      %v818 = vpop.f32.mrb[0].mxu0
      %819 = vdwg.mxu0
      %v820 = vadd.f32 %v608, %v758
      %v821 = vadd.f32 %v611, %v761
      %v822 = vadd.f32 %v616, %v766
      %v823 = vadd.f32 %v619, %v769
      %v824 = vadd.f32 %v624, %v774
      %v825 = vadd.f32 %v627, %v777
      %v826 = vadd.f32 %v632, %v782
      %v827 = vadd.f32 %v635, %v785
      %v828 = vadd.f32 %v640, %v790
      %v829 = vadd.f32 %v643, %v793
      %v830 = vadd.f32 %v648, %v798
      %v831 = vadd.f32 %v651, %v801
      %v832 = vadd.f32 %v656, %v806
      %v833 = vadd.f32 %v659, %v809
      %v834 = vadd.f32 %v664, %v814
      %v835 = vadd.f32 %v667, %v817
      %v836 = vld [vmem:[%s353] sm:$0xff]
      %v837 = vld [vmem:[%s353 + $0x10] sm:$0xff]
      %v838 = vld [vmem:[%s353 + $0x20] sm:$0xff]
      %v839 = vld [vmem:[%s353 + $0x30] sm:$0xff]
      %v840 = vld [vmem:[%s353 + $0x40] sm:$0xff]
      %v841 = vld [vmem:[%s353 + $0x50] sm:$0xff]
      %v842 = vld [vmem:[%s353 + $0x60] sm:$0xff]
      %v843 = vld [vmem:[%s353 + $0x70] sm:$0xff]
      %v844 = vld [vmem:[%s353 + $0x80] sm:$0xff]
      %v845 = vld [vmem:[%s353 + $0x90] sm:$0xff]
      %v846 = vld [vmem:[%s353 + $0xa0] sm:$0xff]
      %v847 = vld [vmem:[%s353 + $0xb0] sm:$0xff]
      %v848 = vld [vmem:[%s353 + $0xc0] sm:$0xff]
      %v849 = vld [vmem:[%s353 + $0xd0] sm:$0xff]
      %v850 = vld [vmem:[%s353 + $0xe0] sm:$0xff]
      %v851 = vld [vmem:[%s353 + $0xf0] sm:$0xff]
      %v852 = vpack.c.bf16 %v837, %v836
      %v853 = vpack.c.bf16 %v839, %v838
      %v854 = vpack.c.bf16 %v841, %v840
      %v855 = vpack.c.bf16 %v843, %v842
      %v856 = vpack.c.bf16 %v845, %v844
      %v857 = vpack.c.bf16 %v847, %v846
      %v858 = vpack.c.bf16 %v849, %v848
      %v859 = vpack.c.bf16 %v851, %v850
      %s860 = scalar_lea.vmem %s3, 12
      %v861 = vld [vmem:[%s860] sm:$0xf]
      %v863 = vsel %vm315, %v852, 0
      %v866 = vsel %vm315, %v853, 0
      %v869 = vsel %vm315, %v854, 0
      %v872 = vsel %vm315, %v855, 0
      %v875 = vsel %vm315, %v856, 0
      %v878 = vsel %vm315, %v857, 0
      %v881 = vsel %vm315, %v858, 0
      %v884 = vsel %vm315, %v859, 0
      %v887 = vsel %vm445, %v861, 0
      %889 = vmatprep.subr.bf16.mxu0 0
      %890 = vmatpush1.bf16.msra.mxu0 %v887
      %891 = vmatprep.subr.bf16.mxu0 0
      %892 = vmatpush1.bf16.msra.mxu0 0
      %893 = vmatprep.subr.bf16.mxu0 0
      %894 = vmatpush1.bf16.msra.mxu0 0
      %895 = vmatprep.subr.bf16.mxu0 0
      %896 = vmatpush1.bf16.msra.mxu0 0
      %897 = vmatprep.subr.bf16.mxu0 0
      %898 = vmatpush1.bf16.msra.mxu0 0
      %899 = vmatprep.subr.bf16.mxu0 0
      %900 = vmatpush1.bf16.msra.mxu0 0
      %901 = vmatprep.subr.bf16.mxu0 0
      %902 = vmatpush1.bf16.msra.mxu0 0
      %903 = vmatprep.subr.bf16.mxu0 0
      %904 = vmatpush1.bf16.msra.mxu0 0
      %905 = vmatprep.subr.bf16.mxu0 0
      %906 = vmatpush1.bf16.msra.mxu0 0
      %907 = vmatprep.subr.bf16.mxu0 0
      %908 = vmatpush1.bf16.msra.mxu0 0
      %909 = vmatprep.subr.bf16.mxu0 0
      %910 = vmatpush1.bf16.msra.mxu0 0
      %911 = vmatprep.subr.bf16.mxu0 0
      %912 = vmatpush1.bf16.msra.mxu0 0
      %913 = vmatprep.subr.bf16.mxu0 0
      %914 = vmatpush1.bf16.msra.mxu0 0
      %915 = vmatprep.subr.bf16.mxu0 0
      %916 = vmatpush1.bf16.msra.mxu0 0
      %917 = vmatprep.subr.bf16.mxu0 0
      %918 = vmatpush1.bf16.msra.mxu0 0
      %919 = vmatprep.subr.bf16.mxu0 0
      %920 = vmatpush1.bf16.msra.mxu0 0
      %921 = vmatprep.mubr.bf16.mxu0 0
      %922 = vmatmul.mubr.bf16.gmra.mrb[0].mxu0 %v863
      %v923 = vpop.f32.mrb[0].mxu0
      %v924 = vadd.f32 0.0, %v923
      %v925 = vpop.f32.mrb[0].mxu0
      %v926 = vpop.f32.mrb[0].mxu0
      %v927 = vadd.f32 0.0, %v926
      %v928 = vpop.f32.mrb[0].mxu0
      %929 = vmatprep.mubr.bf16.mxu0 0
      %930 = vmatmul.mubr.bf16.gmra.mrb[0].mxu0 %v866
      %v931 = vpop.f32.mrb[0].mxu0
      %v932 = vadd.f32 0.0, %v931
      %v933 = vpop.f32.mrb[0].mxu0
      %v934 = vpop.f32.mrb[0].mxu0
      %v935 = vadd.f32 0.0, %v934
      %v936 = vpop.f32.mrb[0].mxu0
      %937 = vmatprep.mubr.bf16.mxu0 0
      %938 = vmatmul.mubr.bf16.gmra.mrb[0].mxu0 %v869
      %v939 = vpop.f32.mrb[0].mxu0
      %v940 = vadd.f32 0.0, %v939
      %v941 = vpop.f32.mrb[0].mxu0
      %v942 = vpop.f32.mrb[0].mxu0
      %v943 = vadd.f32 0.0, %v942
      %v944 = vpop.f32.mrb[0].mxu0
      %945 = vmatprep.mubr.bf16.mxu0 0
      %946 = vmatmul.mubr.bf16.gmra.mrb[0].mxu0 %v872
      %v947 = vpop.f32.mrb[0].mxu0
      %v948 = vadd.f32 0.0, %v947
      %v949 = vpop.f32.mrb[0].mxu0
      %v950 = vpop.f32.mrb[0].mxu0
      %v951 = vadd.f32 0.0, %v950
      %v952 = vpop.f32.mrb[0].mxu0
      %953 = vmatprep.mubr.bf16.mxu0 0
      %954 = vmatmul.mubr.bf16.gmra.mrb[0].mxu0 %v875
      %v955 = vpop.f32.mrb[0].mxu0
      %v956 = vadd.f32 0.0, %v955
      %v957 = vpop.f32.mrb[0].mxu0
      %v958 = vpop.f32.mrb[0].mxu0
      %v959 = vadd.f32 0.0, %v958
      %v960 = vpop.f32.mrb[0].mxu0
      %961 = vmatprep.mubr.bf16.mxu0 0
      %962 = vmatmul.mubr.bf16.gmra.mrb[0].mxu0 %v878
      %v963 = vpop.f32.mrb[0].mxu0
      %v964 = vadd.f32 0.0, %v963
      %v965 = vpop.f32.mrb[0].mxu0
      %v966 = vpop.f32.mrb[0].mxu0
      %v967 = vadd.f32 0.0, %v966
      %v968 = vpop.f32.mrb[0].mxu0
      %969 = vmatprep.mubr.bf16.mxu0 0
      %970 = vmatmul.mubr.bf16.gmra.mrb[0].mxu0 %v881
      %v971 = vpop.f32.mrb[0].mxu0
      %v972 = vadd.f32 0.0, %v971
      %v973 = vpop.f32.mrb[0].mxu0
      %v974 = vpop.f32.mrb[0].mxu0
      %v975 = vadd.f32 0.0, %v974
      %v976 = vpop.f32.mrb[0].mxu0
      %977 = vmatprep.mubr.bf16.mxu0 0
      %978 = vmatmul.mubr.bf16.gmra.mrb[0].mxu0 %v884
      %v979 = vpop.f32.mrb[0].mxu0
      %v980 = vadd.f32 0.0, %v979
      %v981 = vpop.f32.mrb[0].mxu0
      %v982 = vpop.f32.mrb[0].mxu0
      %v983 = vadd.f32 0.0, %v982
      %v984 = vpop.f32.mrb[0].mxu0
      %985 = vdwg.mxu0
      %v986 = vadd.f32 %v820, %v924
      %v987 = vadd.f32 %v821, %v927
      %v988 = vadd.f32 %v822, %v932
      %v989 = vadd.f32 %v823, %v935
      %v990 = vadd.f32 %v824, %v940
      %v991 = vadd.f32 %v825, %v943
      %v992 = vadd.f32 %v826, %v948
      %v993 = vadd.f32 %v827, %v951
      %v994 = vadd.f32 %v828, %v956
      %v995 = vadd.f32 %v829, %v959
      %v996 = vadd.f32 %v830, %v964
      %v997 = vadd.f32 %v831, %v967
      %v998 = vadd.f32 %v832, %v972
      %v999 = vadd.f32 %v833, %v975
      %v1000 = vadd.f32 %v834, %v980
      %v1001 = vadd.f32 %v835, %v983
      %v1002 = vld [vmem:[%s353 + $0x1] sm:$0xff]
      %v1003 = vld [vmem:[%s353 + $0x11] sm:$0xff]
      %v1004 = vld [vmem:[%s353 + $0x21] sm:$0xff]
      %v1005 = vld [vmem:[%s353 + $0x31] sm:$0xff]
      %v1006 = vld [vmem:[%s353 + $0x41] sm:$0xff]
      %v1007 = vld [vmem:[%s353 + $0x51] sm:$0xff]
      %v1008 = vld [vmem:[%s353 + $0x61] sm:$0xff]
      %v1009 = vld [vmem:[%s353 + $0x71] sm:$0xff]
      %v1010 = vld [vmem:[%s353 + $0x81] sm:$0xff]
      %v1011 = vld [vmem:[%s353 + $0x91] sm:$0xff]
      %v1012 = vld [vmem:[%s353 + $0xa1] sm:$0xff]
      %v1013 = vld [vmem:[%s353 + $0xb1] sm:$0xff]
      %v1014 = vld [vmem:[%s353 + $0xc1] sm:$0xff]
      %v1015 = vld [vmem:[%s353 + $0xd1] sm:$0xff]
      %v1016 = vld [vmem:[%s353 + $0xe1] sm:$0xff]
      %v1017 = vld [vmem:[%s353 + $0xf1] sm:$0xff]
      %v1018 = vpack.c.bf16 %v1003, %v1002
      %v1019 = vpack.c.bf16 %v1005, %v1004
      %v1020 = vpack.c.bf16 %v1007, %v1006
      %v1021 = vpack.c.bf16 %v1009, %v1008
      %v1022 = vpack.c.bf16 %v1011, %v1010
      %v1023 = vpack.c.bf16 %v1013, %v1012
      %v1024 = vpack.c.bf16 %v1015, %v1014
      %v1025 = vpack.c.bf16 %v1017, %v1016
      %s1026 = scalar_lea.vmem %s3, 16
      %v1027 = vld [vmem:[%s1026] sm:$0xf]
      %v1029 = vsel %vm315, %v1018, 0
      %v1032 = vsel %vm315, %v1019, 0
      %v1035 = vsel %vm315, %v1020, 0
      %v1038 = vsel %vm315, %v1021, 0
      %v1041 = vsel %vm315, %v1022, 0
      %v1044 = vsel %vm315, %v1023, 0
      %v1047 = vsel %vm315, %v1024, 0
      %v1050 = vsel %vm315, %v1025, 0
      %v1053 = vsel %vm445, %v1027, 0
      %1055 = vmatprep.subr.bf16.mxu0 0
      %1056 = vmatpush1.bf16.msra.mxu0 %v1053
      %1057 = vmatprep.subr.bf16.mxu0 0
      %1058 = vmatpush1.bf16.msra.mxu0 0
      %1059 = vmatprep.subr.bf16.mxu0 0
      %1060 = vmatpush1.bf16.msra.mxu0 0
      %1061 = vmatprep.subr.bf16.mxu0 0
      %1062 = vmatpush1.bf16.msra.mxu0 0
      %1063 = vmatprep.subr.bf16.mxu0 0
      %1064 = vmatpush1.bf16.msra.mxu0 0
      %1065 = vmatprep.subr.bf16.mxu0 0
      %1066 = vmatpush1.bf16.msra.mxu0 0
      %1067 = vmatprep.subr.bf16.mxu0 0
      %1068 = vmatpush1.bf16.msra.mxu0 0
      %1069 = vmatprep.subr.bf16.mxu0 0
      %1070 = vmatpush1.bf16.msra.mxu0 0
      %1071 = vmatprep.subr.bf16.mxu0 0
      %1072 = vmatpush1.bf16.msra.mxu0 0
      %1073 = vmatprep.subr.bf16.mxu0 0
      %1074 = vmatpush1.bf16.msra.mxu0 0
      %1075 = vmatprep.subr.bf16.mxu0 0
      %1076 = vmatpush1.bf16.msra.mxu0 0
      %1077 = vmatprep.subr.bf16.mxu0 0
      %1078 = vmatpush1.bf16.msra.mxu0 0
      %1079 = vmatprep.subr.bf16.mxu0 0
      %1080 = vmatpush1.bf16.msra.mxu0 0
      %1081 = vmatprep.subr.bf16.mxu0 0
      %1082 = vmatpush1.bf16.msra.mxu0 0
      %1083 = vmatprep.subr.bf16.mxu0 0
      %1084 = vmatpush1.bf16.msra.mxu0 0
      %1085 = vmatprep.subr.bf16.mxu0 0
      %1086 = vmatpush1.bf16.msra.mxu0 0
      %1087 = vmatprep.mubr.bf16.mxu0 0
      %1088 = vmatmul.mubr.bf16.gmra.mrb[0].mxu0 %v1029
      %v1089 = vpop.f32.mrb[0].mxu0
      %v1090 = vadd.f32 0.0, %v1089
      %v1091 = vpop.f32.mrb[0].mxu0
      %v1092 = vpop.f32.mrb[0].mxu0
      %v1093 = vadd.f32 0.0, %v1092
      %v1094 = vpop.f32.mrb[0].mxu0
      %1095 = vmatprep.mubr.bf16.mxu0 0
      %1096 = vmatmul.mubr.bf16.gmra.mrb[0].mxu0 %v1032
      %v1097 = vpop.f32.mrb[0].mxu0
      %v1098 = vadd.f32 0.0, %v1097
      %v1099 = vpop.f32.mrb[0].mxu0
      %v1100 = vpop.f32.mrb[0].mxu0
      %v1101 = vadd.f32 0.0, %v1100
      %v1102 = vpop.f32.mrb[0].mxu0
      %1103 = vmatprep.mubr.bf16.mxu0 0
      %1104 = vmatmul.mubr.bf16.gmra.mrb[0].mxu0 %v1035
      %v1105 = vpop.f32.mrb[0].mxu0
      %v1106 = vadd.f32 0.0, %v1105
      %v1107 = vpop.f32.mrb[0].mxu0
      %v1108 = vpop.f32.mrb[0].mxu0
      %v1109 = vadd.f32 0.0, %v1108
      %v1110 = vpop.f32.mrb[0].mxu0
      %1111 = vmatprep.mubr.bf16.mxu0 0
      %1112 = vmatmul.mubr.bf16.gmra.mrb[0].mxu0 %v1038
      %v1113 = vpop.f32.mrb[0].mxu0
      %v1114 = vadd.f32 0.0, %v1113
      %v1115 = vpop.f32.mrb[0].mxu0
      %v1116 = vpop.f32.mrb[0].mxu0
      %v1117 = vadd.f32 0.0, %v1116
      %v1118 = vpop.f32.mrb[0].mxu0
      %1119 = vmatprep.mubr.bf16.mxu0 0
      %1120 = vmatmul.mubr.bf16.gmra.mrb[0].mxu0 %v1041
      %v1121 = vpop.f32.mrb[0].mxu0
      %v1122 = vadd.f32 0.0, %v1121
      %v1123 = vpop.f32.mrb[0].mxu0
      %v1124 = vpop.f32.mrb[0].mxu0
      %v1125 = vadd.f32 0.0, %v1124
      %v1126 = vpop.f32.mrb[0].mxu0
      %1127 = vmatprep.mubr.bf16.mxu0 0
      %1128 = vmatmul.mubr.bf16.gmra.mrb[0].mxu0 %v1044
      %v1129 = vpop.f32.mrb[0].mxu0
      %v1130 = vadd.f32 0.0, %v1129
      %v1131 = vpop.f32.mrb[0].mxu0
      %v1132 = vpop.f32.mrb[0].mxu0
      %v1133 = vadd.f32 0.0, %v1132
      %v1134 = vpop.f32.mrb[0].mxu0
      %1135 = vmatprep.mubr.bf16.mxu0 0
      %1136 = vmatmul.mubr.bf16.gmra.mrb[0].mxu0 %v1047
      %v1137 = vpop.f32.mrb[0].mxu0
      %v1138 = vadd.f32 0.0, %v1137
      %v1139 = vpop.f32.mrb[0].mxu0
      %v1140 = vpop.f32.mrb[0].mxu0
      %v1141 = vadd.f32 0.0, %v1140
      %v1142 = vpop.f32.mrb[0].mxu0
      %1143 = vmatprep.mubr.bf16.mxu0 0
      %1144 = vmatmul.mubr.bf16.gmra.mrb[0].mxu0 %v1050
      %v1145 = vpop.f32.mrb[0].mxu0
      %v1146 = vadd.f32 0.0, %v1145
      %v1147 = vpop.f32.mrb[0].mxu0
      %v1148 = vpop.f32.mrb[0].mxu0
      %v1149 = vadd.f32 0.0, %v1148
      %v1150 = vpop.f32.mrb[0].mxu0
      %1151 = vdwg.mxu0
      %v1152 = vadd.f32 %v986, %v1090
      %v1153 = vadd.f32 %v987, %v1093
      %v1154 = vadd.f32 %v988, %v1098
      %v1155 = vadd.f32 %v989, %v1101
      %v1156 = vadd.f32 %v990, %v1106
      %v1157 = vadd.f32 %v991, %v1109
      %v1158 = vadd.f32 %v992, %v1114
      %v1159 = vadd.f32 %v993, %v1117
      %v1160 = vadd.f32 %v994, %v1122
      %v1161 = vadd.f32 %v995, %v1125
      %v1162 = vadd.f32 %v996, %v1130
      %v1163 = vadd.f32 %v997, %v1133
      %v1164 = vadd.f32 %v998, %v1138
      %v1165 = vadd.f32 %v999, %v1141
      %v1166 = vadd.f32 %v1000, %v1146
      %v1167 = vadd.f32 %v1001, %v1149
      %v1168 = vld [vmem:[%s353 + $0x2] sm:$0xff]
      %v1169 = vld [vmem:[%s353 + $0x12] sm:$0xff]
      %v1170 = vld [vmem:[%s353 + $0x22] sm:$0xff]
      %v1171 = vld [vmem:[%s353 + $0x32] sm:$0xff]
      %v1172 = vld [vmem:[%s353 + $0x42] sm:$0xff]
      %v1173 = vld [vmem:[%s353 + $0x52] sm:$0xff]
      %v1174 = vld [vmem:[%s353 + $0x62] sm:$0xff]
      %v1175 = vld [vmem:[%s353 + $0x72] sm:$0xff]
      %v1176 = vld [vmem:[%s353 + $0x82] sm:$0xff]
      %v1177 = vld [vmem:[%s353 + $0x92] sm:$0xff]
      %v1178 = vld [vmem:[%s353 + $0xa2] sm:$0xff]
      %v1179 = vld [vmem:[%s353 + $0xb2] sm:$0xff]
      %v1180 = vld [vmem:[%s353 + $0xc2] sm:$0xff]
      %v1181 = vld [vmem:[%s353 + $0xd2] sm:$0xff]
      %v1182 = vld [vmem:[%s353 + $0xe2] sm:$0xff]
      %v1183 = vld [vmem:[%s353 + $0xf2] sm:$0xff]
      %v1184 = vpack.c.bf16 %v1169, %v1168
      %v1185 = vpack.c.bf16 %v1171, %v1170
      %v1186 = vpack.c.bf16 %v1173, %v1172
      %v1187 = vpack.c.bf16 %v1175, %v1174
      %v1188 = vpack.c.bf16 %v1177, %v1176
      %v1189 = vpack.c.bf16 %v1179, %v1178
      %v1190 = vpack.c.bf16 %v1181, %v1180
      %v1191 = vpack.c.bf16 %v1183, %v1182
      %s1192 = scalar_lea.vmem %s3, 20
      %v1193 = vld [vmem:[%s1192] sm:$0xf]
      %v1195 = vsel %vm315, %v1184, 0
      %v1198 = vsel %vm315, %v1185, 0
      %v1201 = vsel %vm315, %v1186, 0
      %v1204 = vsel %vm315, %v1187, 0
      %v1207 = vsel %vm315, %v1188, 0
      %v1210 = vsel %vm315, %v1189, 0
      %v1213 = vsel %vm315, %v1190, 0
      %v1216 = vsel %vm315, %v1191, 0
      %v1219 = vsel %vm445, %v1193, 0
      %1221 = vmatprep.subr.bf16.mxu0 0
      %1222 = vmatpush1.bf16.msra.mxu0 %v1219
      %1223 = vmatprep.subr.bf16.mxu0 0
      %1224 = vmatpush1.bf16.msra.mxu0 0
      %1225 = vmatprep.subr.bf16.mxu0 0
      %1226 = vmatpush1.bf16.msra.mxu0 0
      %1227 = vmatprep.subr.bf16.mxu0 0
      %1228 = vmatpush1.bf16.msra.mxu0 0
      %1229 = vmatprep.subr.bf16.mxu0 0
      %1230 = vmatpush1.bf16.msra.mxu0 0
      %1231 = vmatprep.subr.bf16.mxu0 0
      %1232 = vmatpush1.bf16.msra.mxu0 0
      %1233 = vmatprep.subr.bf16.mxu0 0
      %1234 = vmatpush1.bf16.msra.mxu0 0
      %1235 = vmatprep.subr.bf16.mxu0 0
      %1236 = vmatpush1.bf16.msra.mxu0 0
      %1237 = vmatprep.subr.bf16.mxu0 0
      %1238 = vmatpush1.bf16.msra.mxu0 0
      %1239 = vmatprep.subr.bf16.mxu0 0
      %1240 = vmatpush1.bf16.msra.mxu0 0
      %1241 = vmatprep.subr.bf16.mxu0 0
      %1242 = vmatpush1.bf16.msra.mxu0 0
      %1243 = vmatprep.subr.bf16.mxu0 0
      %1244 = vmatpush1.bf16.msra.mxu0 0
      %1245 = vmatprep.subr.bf16.mxu0 0
      %1246 = vmatpush1.bf16.msra.mxu0 0
      %1247 = vmatprep.subr.bf16.mxu0 0
      %1248 = vmatpush1.bf16.msra.mxu0 0
      %1249 = vmatprep.subr.bf16.mxu0 0
      %1250 = vmatpush1.bf16.msra.mxu0 0
      %1251 = vmatprep.subr.bf16.mxu0 0
      %1252 = vmatpush1.bf16.msra.mxu0 0
      %1253 = vmatprep.mubr.bf16.mxu0 0
      %1254 = vmatmul.mubr.bf16.gmra.mrb[0].mxu0 %v1195
      %v1255 = vpop.f32.mrb[0].mxu0
      %v1256 = vadd.f32 0.0, %v1255
      %v1257 = vpop.f32.mrb[0].mxu0
      %v1258 = vpop.f32.mrb[0].mxu0
      %v1259 = vadd.f32 0.0, %v1258
      %v1260 = vpop.f32.mrb[0].mxu0
      %1261 = vmatprep.mubr.bf16.mxu0 0
      %1262 = vmatmul.mubr.bf16.gmra.mrb[0].mxu0 %v1198
      %v1263 = vpop.f32.mrb[0].mxu0
      %v1264 = vadd.f32 0.0, %v1263
      %v1265 = vpop.f32.mrb[0].mxu0
      %v1266 = vpop.f32.mrb[0].mxu0
      %v1267 = vadd.f32 0.0, %v1266
      %v1268 = vpop.f32.mrb[0].mxu0
      %1269 = vmatprep.mubr.bf16.mxu0 0
      %1270 = vmatmul.mubr.bf16.gmra.mrb[0].mxu0 %v1201
      %v1271 = vpop.f32.mrb[0].mxu0
      %v1272 = vadd.f32 0.0, %v1271
      %v1273 = vpop.f32.mrb[0].mxu0
      %v1274 = vpop.f32.mrb[0].mxu0
      %v1275 = vadd.f32 0.0, %v1274
      %v1276 = vpop.f32.mrb[0].mxu0
      %1277 = vmatprep.mubr.bf16.mxu0 0
      %1278 = vmatmul.mubr.bf16.gmra.mrb[0].mxu0 %v1204
      %v1279 = vpop.f32.mrb[0].mxu0
      %v1280 = vadd.f32 0.0, %v1279
      %v1281 = vpop.f32.mrb[0].mxu0
      %v1282 = vpop.f32.mrb[0].mxu0
      %v1283 = vadd.f32 0.0, %v1282
      %v1284 = vpop.f32.mrb[0].mxu0
      %1285 = vmatprep.mubr.bf16.mxu0 0
      %1286 = vmatmul.mubr.bf16.gmra.mrb[0].mxu0 %v1207
      %v1287 = vpop.f32.mrb[0].mxu0
      %v1288 = vadd.f32 0.0, %v1287
      %v1289 = vpop.f32.mrb[0].mxu0
      %v1290 = vpop.f32.mrb[0].mxu0
      %v1291 = vadd.f32 0.0, %v1290
      %v1292 = vpop.f32.mrb[0].mxu0
      %1293 = vmatprep.mubr.bf16.mxu0 0
      %1294 = vmatmul.mubr.bf16.gmra.mrb[0].mxu0 %v1210
      %v1295 = vpop.f32.mrb[0].mxu0
      %v1296 = vadd.f32 0.0, %v1295
      %v1297 = vpop.f32.mrb[0].mxu0
      %v1298 = vpop.f32.mrb[0].mxu0
      %v1299 = vadd.f32 0.0, %v1298
      %v1300 = vpop.f32.mrb[0].mxu0
      %1301 = vmatprep.mubr.bf16.mxu0 0
      %1302 = vmatmul.mubr.bf16.gmra.mrb[0].mxu0 %v1213
      %v1303 = vpop.f32.mrb[0].mxu0
      %v1304 = vadd.f32 0.0, %v1303
      %v1305 = vpop.f32.mrb[0].mxu0
      %v1306 = vpop.f32.mrb[0].mxu0
      %v1307 = vadd.f32 0.0, %v1306
      %v1308 = vpop.f32.mrb[0].mxu0
      %1309 = vmatprep.mubr.bf16.mxu0 0
      %1310 = vmatmul.mubr.bf16.gmra.mrb[0].mxu0 %v1216
      %v1311 = vpop.f32.mrb[0].mxu0
      %v1312 = vadd.f32 0.0, %v1311
      %v1313 = vpop.f32.mrb[0].mxu0
      %v1314 = vpop.f32.mrb[0].mxu0
      %v1315 = vadd.f32 0.0, %v1314
      %v1316 = vpop.f32.mrb[0].mxu0
      %1317 = vdwg.mxu0
      %v1318 = vadd.f32 %v1152, %v1256
      %v1319 = vadd.f32 %v1153, %v1259
      %v1320 = vadd.f32 %v1154, %v1264
      %v1321 = vadd.f32 %v1155, %v1267
      %v1322 = vadd.f32 %v1156, %v1272
      %v1323 = vadd.f32 %v1157, %v1275
      %v1324 = vadd.f32 %v1158, %v1280
      %v1325 = vadd.f32 %v1159, %v1283
      %v1326 = vadd.f32 %v1160, %v1288
      %v1327 = vadd.f32 %v1161, %v1291
      %v1328 = vadd.f32 %v1162, %v1296
      %v1329 = vadd.f32 %v1163, %v1299
      %v1330 = vadd.f32 %v1164, %v1304
      %v1331 = vadd.f32 %v1165, %v1307
      %v1332 = vadd.f32 %v1166, %v1312
      %v1333 = vadd.f32 %v1167, %v1315
      %s1334 = scalar_lea.vmem [#allocation2], 32
      %v1335 = vld [vmem:[%s1334] sm:$0xff]
      %v1336 = vld [vmem:[%s1334 + $0x10] sm:$0xff]
      %v1337 = vld [vmem:[%s1334 + $0x20] sm:$0xff]
      %v1338 = vld [vmem:[%s1334 + $0x30] sm:$0xff]
      %v1339 = vld [vmem:[%s1334 + $0x40] sm:$0xff]
      %v1340 = vld [vmem:[%s1334 + $0x50] sm:$0xff]
      %v1341 = vld [vmem:[%s1334 + $0x60] sm:$0xff]
      %v1342 = vld [vmem:[%s1334 + $0x70] sm:$0xff]
      %v1343 = vld [vmem:[%s1334 + $0x80] sm:$0xff]
      %v1344 = vld [vmem:[%s1334 + $0x90] sm:$0xff]
      %v1345 = vld [vmem:[%s1334 + $0xa0] sm:$0xff]
      %v1346 = vld [vmem:[%s1334 + $0xb0] sm:$0xff]
      %v1347 = vld [vmem:[%s1334 + $0xc0] sm:$0xff]
      %v1348 = vld [vmem:[%s1334 + $0xd0] sm:$0xff]
      %v1349 = vld [vmem:[%s1334 + $0xe0] sm:$0xff]
      %v1350 = vld [vmem:[%s1334 + $0xf0] sm:$0xff]
      %v1351 = vpack.c.bf16 %v1336, %v1335
      %v1352 = vpack.c.bf16 %v1338, %v1337
      %v1353 = vpack.c.bf16 %v1340, %v1339
      %v1354 = vpack.c.bf16 %v1342, %v1341
      %v1355 = vpack.c.bf16 %v1344, %v1343
      %v1356 = vpack.c.bf16 %v1346, %v1345
      %v1357 = vpack.c.bf16 %v1348, %v1347
      %v1358 = vpack.c.bf16 %v1350, %v1349
      %s1359 = scalar_lea.vmem %s3, 24
      %v1360 = vld [vmem:[%s1359] sm:$0xf]
      %v1362 = vsel %vm315, %v1351, 0
      %v1365 = vsel %vm315, %v1352, 0
      %v1368 = vsel %vm315, %v1353, 0
      %v1371 = vsel %vm315, %v1354, 0
      %v1374 = vsel %vm315, %v1355, 0
      %v1377 = vsel %vm315, %v1356, 0
      %v1380 = vsel %vm315, %v1357, 0
      %v1383 = vsel %vm315, %v1358, 0
      %v1386 = vsel %vm445, %v1360, 0
      %1388 = vmatprep.subr.bf16.mxu0 0
      %1389 = vmatpush1.bf16.msra.mxu0 %v1386
      %1390 = vmatprep.subr.bf16.mxu0 0
      %1391 = vmatpush1.bf16.msra.mxu0 0
      %1392 = vmatprep.subr.bf16.mxu0 0
      %1393 = vmatpush1.bf16.msra.mxu0 0
      %1394 = vmatprep.subr.bf16.mxu0 0
      %1395 = vmatpush1.bf16.msra.mxu0 0
      %1396 = vmatprep.subr.bf16.mxu0 0
      %1397 = vmatpush1.bf16.msra.mxu0 0
      %1398 = vmatprep.subr.bf16.mxu0 0
      %1399 = vmatpush1.bf16.msra.mxu0 0
      %1400 = vmatprep.subr.bf16.mxu0 0
      %1401 = vmatpush1.bf16.msra.mxu0 0
      %1402 = vmatprep.subr.bf16.mxu0 0
      %1403 = vmatpush1.bf16.msra.mxu0 0
      %1404 = vmatprep.subr.bf16.mxu0 0
      %1405 = vmatpush1.bf16.msra.mxu0 0
      %1406 = vmatprep.subr.bf16.mxu0 0
      %1407 = vmatpush1.bf16.msra.mxu0 0
      %1408 = vmatprep.subr.bf16.mxu0 0
      %1409 = vmatpush1.bf16.msra.mxu0 0
      %1410 = vmatprep.subr.bf16.mxu0 0
      %1411 = vmatpush1.bf16.msra.mxu0 0
      %1412 = vmatprep.subr.bf16.mxu0 0
      %1413 = vmatpush1.bf16.msra.mxu0 0
      %1414 = vmatprep.subr.bf16.mxu0 0
      %1415 = vmatpush1.bf16.msra.mxu0 0
      %1416 = vmatprep.subr.bf16.mxu0 0
      %1417 = vmatpush1.bf16.msra.mxu0 0
      %1418 = vmatprep.subr.bf16.mxu0 0
      %1419 = vmatpush1.bf16.msra.mxu0 0
      %1420 = vmatprep.mubr.bf16.mxu0 0
      %1421 = vmatmul.mubr.bf16.gmra.mrb[0].mxu0 %v1362
      %v1422 = vpop.f32.mrb[0].mxu0
      %v1423 = vadd.f32 0.0, %v1422
      %v1424 = vpop.f32.mrb[0].mxu0
      %v1425 = vpop.f32.mrb[0].mxu0
      %v1426 = vadd.f32 0.0, %v1425
      %v1427 = vpop.f32.mrb[0].mxu0
      %1428 = vmatprep.mubr.bf16.mxu0 0
      %1429 = vmatmul.mubr.bf16.gmra.mrb[0].mxu0 %v1365
      %v1430 = vpop.f32.mrb[0].mxu0
      %v1431 = vadd.f32 0.0, %v1430
      %v1432 = vpop.f32.mrb[0].mxu0
      %v1433 = vpop.f32.mrb[0].mxu0
      %v1434 = vadd.f32 0.0, %v1433
      %v1435 = vpop.f32.mrb[0].mxu0
      %1436 = vmatprep.mubr.bf16.mxu0 0
      %1437 = vmatmul.mubr.bf16.gmra.mrb[0].mxu0 %v1368
      %v1438 = vpop.f32.mrb[0].mxu0
      %v1439 = vadd.f32 0.0, %v1438
      %v1440 = vpop.f32.mrb[0].mxu0
      %v1441 = vpop.f32.mrb[0].mxu0
      %v1442 = vadd.f32 0.0, %v1441
      %v1443 = vpop.f32.mrb[0].mxu0
      %1444 = vmatprep.mubr.bf16.mxu0 0
      %1445 = vmatmul.mubr.bf16.gmra.mrb[0].mxu0 %v1371
      %v1446 = vpop.f32.mrb[0].mxu0
      %v1447 = vadd.f32 0.0, %v1446
      %v1448 = vpop.f32.mrb[0].mxu0
      %v1449 = vpop.f32.mrb[0].mxu0
      %v1450 = vadd.f32 0.0, %v1449
      %v1451 = vpop.f32.mrb[0].mxu0
      %1452 = vmatprep.mubr.bf16.mxu0 0
      %1453 = vmatmul.mubr.bf16.gmra.mrb[0].mxu0 %v1374
      %v1454 = vpop.f32.mrb[0].mxu0
      %v1455 = vadd.f32 0.0, %v1454
      %v1456 = vpop.f32.mrb[0].mxu0
      %v1457 = vpop.f32.mrb[0].mxu0
      %v1458 = vadd.f32 0.0, %v1457
      %v1459 = vpop.f32.mrb[0].mxu0
      %1460 = vmatprep.mubr.bf16.mxu0 0
      %1461 = vmatmul.mubr.bf16.gmra.mrb[0].mxu0 %v1377
      %v1462 = vpop.f32.mrb[0].mxu0
      %v1463 = vadd.f32 0.0, %v1462
      %v1464 = vpop.f32.mrb[0].mxu0
      %v1465 = vpop.f32.mrb[0].mxu0
      %v1466 = vadd.f32 0.0, %v1465
      %v1467 = vpop.f32.mrb[0].mxu0
      %1468 = vmatprep.mubr.bf16.mxu0 0
      %1469 = vmatmul.mubr.bf16.gmra.mrb[0].mxu0 %v1380
      %v1470 = vpop.f32.mrb[0].mxu0
      %v1471 = vadd.f32 0.0, %v1470
      %v1472 = vpop.f32.mrb[0].mxu0
      %v1473 = vpop.f32.mrb[0].mxu0
      %v1474 = vadd.f32 0.0, %v1473
      %v1475 = vpop.f32.mrb[0].mxu0
      %1476 = vmatprep.mubr.bf16.mxu0 0
      %1477 = vmatmul.mubr.bf16.gmra.mrb[0].mxu0 %v1383
      %v1478 = vpop.f32.mrb[0].mxu0
      %v1479 = vadd.f32 0.0, %v1478
      %v1480 = vpop.f32.mrb[0].mxu0
      %v1481 = vpop.f32.mrb[0].mxu0
      %v1482 = vadd.f32 0.0, %v1481
      %v1483 = vpop.f32.mrb[0].mxu0
      %1484 = vdwg.mxu0
      %v1485 = vadd.f32 %v1318, %v1423
      %v1486 = vadd.f32 %v1319, %v1426
      %v1487 = vadd.f32 %v1320, %v1431
      %v1488 = vadd.f32 %v1321, %v1434
      %v1489 = vadd.f32 %v1322, %v1439
      %v1490 = vadd.f32 %v1323, %v1442
      %v1491 = vadd.f32 %v1324, %v1447
      %v1492 = vadd.f32 %v1325, %v1450
      %v1493 = vadd.f32 %v1326, %v1455
      %v1494 = vadd.f32 %v1327, %v1458
      %v1495 = vadd.f32 %v1328, %v1463
      %v1496 = vadd.f32 %v1329, %v1466
      %v1497 = vadd.f32 %v1330, %v1471
      %v1498 = vadd.f32 %v1331, %v1474
      %v1499 = vadd.f32 %v1332, %v1479
      %v1500 = vadd.f32 %v1333, %v1482
      %v1501 = vld [vmem:[%s1334 + $0x1] sm:$0xff]
      %v1502 = vld [vmem:[%s1334 + $0x11] sm:$0xff]
      %v1503 = vld [vmem:[%s1334 + $0x21] sm:$0xff]
      %v1504 = vld [vmem:[%s1334 + $0x31] sm:$0xff]
      %v1505 = vld [vmem:[%s1334 + $0x41] sm:$0xff]
      %v1506 = vld [vmem:[%s1334 + $0x51] sm:$0xff]
      %v1507 = vld [vmem:[%s1334 + $0x61] sm:$0xff]
      %v1508 = vld [vmem:[%s1334 + $0x71] sm:$0xff]
      %v1509 = vld [vmem:[%s1334 + $0x81] sm:$0xff]
      %v1510 = vld [vmem:[%s1334 + $0x91] sm:$0xff]
      %v1511 = vld [vmem:[%s1334 + $0xa1] sm:$0xff]
      %v1512 = vld [vmem:[%s1334 + $0xb1] sm:$0xff]
      %v1513 = vld [vmem:[%s1334 + $0xc1] sm:$0xff]
      %v1514 = vld [vmem:[%s1334 + $0xd1] sm:$0xff]
      %v1515 = vld [vmem:[%s1334 + $0xe1] sm:$0xff]
      %v1516 = vld [vmem:[%s1334 + $0xf1] sm:$0xff]
      %v1517 = vpack.c.bf16 %v1502, %v1501
      %v1518 = vpack.c.bf16 %v1504, %v1503
      %v1519 = vpack.c.bf16 %v1506, %v1505
      %v1520 = vpack.c.bf16 %v1508, %v1507
      %v1521 = vpack.c.bf16 %v1510, %v1509
      %v1522 = vpack.c.bf16 %v1512, %v1511
      %v1523 = vpack.c.bf16 %v1514, %v1513
      %v1524 = vpack.c.bf16 %v1516, %v1515
      %s1525 = scalar_lea.vmem %s3, 28
      %v1526 = vld [vmem:[%s1525] sm:$0xf]
      %v1528 = vsel %vm315, %v1517, 0
      %v1531 = vsel %vm315, %v1518, 0
      %v1534 = vsel %vm315, %v1519, 0
      %v1537 = vsel %vm315, %v1520, 0
      %v1540 = vsel %vm315, %v1521, 0
      %v1543 = vsel %vm315, %v1522, 0
      %v1546 = vsel %vm315, %v1523, 0
      %v1549 = vsel %vm315, %v1524, 0
      %v1552 = vsel %vm445, %v1526, 0
      %1554 = vmatprep.subr.bf16.mxu0 0
      %1555 = vmatpush1.bf16.msra.mxu0 %v1552
      %1556 = vmatprep.subr.bf16.mxu0 0
      %1557 = vmatpush1.bf16.msra.mxu0 0
      %1558 = vmatprep.subr.bf16.mxu0 0
      %1559 = vmatpush1.bf16.msra.mxu0 0
      %1560 = vmatprep.subr.bf16.mxu0 0
      %1561 = vmatpush1.bf16.msra.mxu0 0
      %1562 = vmatprep.subr.bf16.mxu0 0
      %1563 = vmatpush1.bf16.msra.mxu0 0
      %1564 = vmatprep.subr.bf16.mxu0 0
      %1565 = vmatpush1.bf16.msra.mxu0 0
      %1566 = vmatprep.subr.bf16.mxu0 0
      %1567 = vmatpush1.bf16.msra.mxu0 0
      %1568 = vmatprep.subr.bf16.mxu0 0
      %1569 = vmatpush1.bf16.msra.mxu0 0
      %1570 = vmatprep.subr.bf16.mxu0 0
      %1571 = vmatpush1.bf16.msra.mxu0 0
      %1572 = vmatprep.subr.bf16.mxu0 0
      %1573 = vmatpush1.bf16.msra.mxu0 0
      %1574 = vmatprep.subr.bf16.mxu0 0
      %1575 = vmatpush1.bf16.msra.mxu0 0
      %1576 = vmatprep.subr.bf16.mxu0 0
      %1577 = vmatpush1.bf16.msra.mxu0 0
      %1578 = vmatprep.subr.bf16.mxu0 0
      %1579 = vmatpush1.bf16.msra.mxu0 0
      %1580 = vmatprep.subr.bf16.mxu0 0
      %1581 = vmatpush1.bf16.msra.mxu0 0
      %1582 = vmatprep.subr.bf16.mxu0 0
      %1583 = vmatpush1.bf16.msra.mxu0 0
      %1584 = vmatprep.subr.bf16.mxu0 0
      %1585 = vmatpush1.bf16.msra.mxu0 0
      %1586 = vmatprep.mubr.bf16.mxu0 0
      %1587 = vmatmul.mubr.bf16.gmra.mrb[0].mxu0 %v1528
      %v1588 = vpop.f32.mrb[0].mxu0
      %v1589 = vadd.f32 0.0, %v1588
      %v1590 = vpop.f32.mrb[0].mxu0
      %v1591 = vpop.f32.mrb[0].mxu0
      %v1592 = vadd.f32 0.0, %v1591
      %v1593 = vpop.f32.mrb[0].mxu0
      %1594 = vmatprep.mubr.bf16.mxu0 0
      %1595 = vmatmul.mubr.bf16.gmra.mrb[0].mxu0 %v1531
      %v1596 = vpop.f32.mrb[0].mxu0
      %v1597 = vadd.f32 0.0, %v1596
      %v1598 = vpop.f32.mrb[0].mxu0
      %v1599 = vpop.f32.mrb[0].mxu0
      %v1600 = vadd.f32 0.0, %v1599
      %v1601 = vpop.f32.mrb[0].mxu0
      %1602 = vmatprep.mubr.bf16.mxu0 0
      %1603 = vmatmul.mubr.bf16.gmra.mrb[0].mxu0 %v1534
      %v1604 = vpop.f32.mrb[0].mxu0
      %v1605 = vadd.f32 0.0, %v1604
      %v1606 = vpop.f32.mrb[0].mxu0
      %v1607 = vpop.f32.mrb[0].mxu0
      %v1608 = vadd.f32 0.0, %v1607
      %v1609 = vpop.f32.mrb[0].mxu0
      %1610 = vmatprep.mubr.bf16.mxu0 0
      %1611 = vmatmul.mubr.bf16.gmra.mrb[0].mxu0 %v1537
      %v1612 = vpop.f32.mrb[0].mxu0
      %v1613 = vadd.f32 0.0, %v1612
      %v1614 = vpop.f32.mrb[0].mxu0
      %v1615 = vpop.f32.mrb[0].mxu0
      %v1616 = vadd.f32 0.0, %v1615
      %v1617 = vpop.f32.mrb[0].mxu0
      %1618 = vmatprep.mubr.bf16.mxu0 0
      %1619 = vmatmul.mubr.bf16.gmra.mrb[0].mxu0 %v1540
      %v1620 = vpop.f32.mrb[0].mxu0
      %v1621 = vadd.f32 0.0, %v1620
      %v1622 = vpop.f32.mrb[0].mxu0
      %v1623 = vpop.f32.mrb[0].mxu0
      %v1624 = vadd.f32 0.0, %v1623
      %v1625 = vpop.f32.mrb[0].mxu0
      %1626 = vmatprep.mubr.bf16.mxu0 0
      %1627 = vmatmul.mubr.bf16.gmra.mrb[0].mxu0 %v1543
      %v1628 = vpop.f32.mrb[0].mxu0
      %v1629 = vadd.f32 0.0, %v1628
      %v1630 = vpop.f32.mrb[0].mxu0
      %v1631 = vpop.f32.mrb[0].mxu0
      %v1632 = vadd.f32 0.0, %v1631
      %v1633 = vpop.f32.mrb[0].mxu0
      %1634 = vmatprep.mubr.bf16.mxu0 0
      %1635 = vmatmul.mubr.bf16.gmra.mrb[0].mxu0 %v1546
      %v1636 = vpop.f32.mrb[0].mxu0
      %v1637 = vadd.f32 0.0, %v1636
      %v1638 = vpop.f32.mrb[0].mxu0
      %v1639 = vpop.f32.mrb[0].mxu0
      %v1640 = vadd.f32 0.0, %v1639
      %v1641 = vpop.f32.mrb[0].mxu0
      %1642 = vmatprep.mubr.bf16.mxu0 0
      %1643 = vmatmul.mubr.bf16.gmra.mrb[0].mxu0 %v1549
      %v1644 = vpop.f32.mrb[0].mxu0
      %v1645 = vadd.f32 0.0, %v1644
      %v1646 = vpop.f32.mrb[0].mxu0
      %v1647 = vpop.f32.mrb[0].mxu0
      %v1648 = vadd.f32 0.0, %v1647
      %v1649 = vpop.f32.mrb[0].mxu0
      %1650 = vdwg.mxu0
      %v1651 = vadd.f32 %v1485, %v1589
      %v1652 = vadd.f32 %v1486, %v1592
      %v1653 = vadd.f32 %v1487, %v1597
      %v1654 = vadd.f32 %v1488, %v1600
      %v1655 = vadd.f32 %v1489, %v1605
      %v1656 = vadd.f32 %v1490, %v1608
      %v1657 = vadd.f32 %v1491, %v1613
      %v1658 = vadd.f32 %v1492, %v1616
      %v1659 = vadd.f32 %v1493, %v1621
      %v1660 = vadd.f32 %v1494, %v1624
      %v1661 = vadd.f32 %v1495, %v1629
      %v1662 = vadd.f32 %v1496, %v1632
      %v1663 = vadd.f32 %v1497, %v1637
      %v1664 = vadd.f32 %v1498, %v1640
      %v1665 = vadd.f32 %v1499, %v1645
      %v1666 = vadd.f32 %v1500, %v1648
      %v1667 = vld [vmem:[%s1334 + $0x2] sm:$0xff]
      %v1668 = vld [vmem:[%s1334 + $0x12] sm:$0xff]
      %v1669 = vld [vmem:[%s1334 + $0x22] sm:$0xff]
      %v1670 = vld [vmem:[%s1334 + $0x32] sm:$0xff]
      %v1671 = vld [vmem:[%s1334 + $0x42] sm:$0xff]
      %v1672 = vld [vmem:[%s1334 + $0x52] sm:$0xff]
      %v1673 = vld [vmem:[%s1334 + $0x62] sm:$0xff]
      %v1674 = vld [vmem:[%s1334 + $0x72] sm:$0xff]
      %v1675 = vld [vmem:[%s1334 + $0x82] sm:$0xff]
      %v1676 = vld [vmem:[%s1334 + $0x92] sm:$0xff]
      %v1677 = vld [vmem:[%s1334 + $0xa2] sm:$0xff]
      %v1678 = vld [vmem:[%s1334 + $0xb2] sm:$0xff]
      %v1679 = vld [vmem:[%s1334 + $0xc2] sm:$0xff]
      %v1680 = vld [vmem:[%s1334 + $0xd2] sm:$0xff]
      %v1681 = vld [vmem:[%s1334 + $0xe2] sm:$0xff]
      %v1682 = vld [vmem:[%s1334 + $0xf2] sm:$0xff]
      %v1683 = vpack.c.bf16 %v1668, %v1667
      %v1684 = vpack.c.bf16 %v1670, %v1669
      %v1685 = vpack.c.bf16 %v1672, %v1671
      %v1686 = vpack.c.bf16 %v1674, %v1673
      %v1687 = vpack.c.bf16 %v1676, %v1675
      %v1688 = vpack.c.bf16 %v1678, %v1677
      %v1689 = vpack.c.bf16 %v1680, %v1679
      %v1690 = vpack.c.bf16 %v1682, %v1681
      %s1691 = scalar_lea.vmem %s3, 32
      %v1692 = vld [vmem:[%s1691] sm:$0xf]
      %v1694 = vsel %vm315, %v1683, 0
      %v1697 = vsel %vm315, %v1684, 0
      %v1700 = vsel %vm315, %v1685, 0
      %v1703 = vsel %vm315, %v1686, 0
      %v1706 = vsel %vm315, %v1687, 0
      %v1709 = vsel %vm315, %v1688, 0
      %v1712 = vsel %vm315, %v1689, 0
      %v1715 = vsel %vm315, %v1690, 0
      %v1718 = vsel %vm445, %v1692, 0
      %1720 = vmatprep.subr.bf16.mxu0 0
      %1721 = vmatpush1.bf16.msra.mxu0 %v1718
      %1722 = vmatprep.subr.bf16.mxu0 0
      %1723 = vmatpush1.bf16.msra.mxu0 0
      %1724 = vmatprep.subr.bf16.mxu0 0
      %1725 = vmatpush1.bf16.msra.mxu0 0
      %1726 = vmatprep.subr.bf16.mxu0 0
      %1727 = vmatpush1.bf16.msra.mxu0 0
      %1728 = vmatprep.subr.bf16.mxu0 0
      %1729 = vmatpush1.bf16.msra.mxu0 0
      %1730 = vmatprep.subr.bf16.mxu0 0
      %1731 = vmatpush1.bf16.msra.mxu0 0
      %1732 = vmatprep.subr.bf16.mxu0 0
      %1733 = vmatpush1.bf16.msra.mxu0 0
      %1734 = vmatprep.subr.bf16.mxu0 0
      %1735 = vmatpush1.bf16.msra.mxu0 0
      %1736 = vmatprep.subr.bf16.mxu0 0
      %1737 = vmatpush1.bf16.msra.mxu0 0
      %1738 = vmatprep.subr.bf16.mxu0 0
      %1739 = vmatpush1.bf16.msra.mxu0 0
      %1740 = vmatprep.subr.bf16.mxu0 0
      %1741 = vmatpush1.bf16.msra.mxu0 0
      %1742 = vmatprep.subr.bf16.mxu0 0
      %1743 = vmatpush1.bf16.msra.mxu0 0
      %1744 = vmatprep.subr.bf16.mxu0 0
      %1745 = vmatpush1.bf16.msra.mxu0 0
      %1746 = vmatprep.subr.bf16.mxu0 0
      %1747 = vmatpush1.bf16.msra.mxu0 0
      %1748 = vmatprep.subr.bf16.mxu0 0
      %1749 = vmatpush1.bf16.msra.mxu0 0
      %1750 = vmatprep.subr.bf16.mxu0 0
      %1751 = vmatpush1.bf16.msra.mxu0 0
      %1752 = vmatprep.mubr.bf16.mxu0 0
      %1753 = vmatmul.mubr.bf16.gmra.mrb[0].mxu0 %v1694
      %v1754 = vpop.f32.mrb[0].mxu0
      %v1755 = vadd.f32 0.0, %v1754
      %v1756 = vpop.f32.mrb[0].mxu0
      %v1757 = vpop.f32.mrb[0].mxu0
      %v1758 = vadd.f32 0.0, %v1757
      %v1759 = vpop.f32.mrb[0].mxu0
      %1760 = vmatprep.mubr.bf16.mxu0 0
      %1761 = vmatmul.mubr.bf16.gmra.mrb[0].mxu0 %v1697
      %v1762 = vpop.f32.mrb[0].mxu0
      %v1763 = vadd.f32 0.0, %v1762
      %v1764 = vpop.f32.mrb[0].mxu0
      %v1765 = vpop.f32.mrb[0].mxu0
      %v1766 = vadd.f32 0.0, %v1765
      %v1767 = vpop.f32.mrb[0].mxu0
      %1768 = vmatprep.mubr.bf16.mxu0 0
      %1769 = vmatmul.mubr.bf16.gmra.mrb[0].mxu0 %v1700
      %v1770 = vpop.f32.mrb[0].mxu0
      %v1771 = vadd.f32 0.0, %v1770
      %v1772 = vpop.f32.mrb[0].mxu0
      %v1773 = vpop.f32.mrb[0].mxu0
      %v1774 = vadd.f32 0.0, %v1773
      %v1775 = vpop.f32.mrb[0].mxu0
      %1776 = vmatprep.mubr.bf16.mxu0 0
      %1777 = vmatmul.mubr.bf16.gmra.mrb[0].mxu0 %v1703
      %v1778 = vpop.f32.mrb[0].mxu0
      %v1779 = vadd.f32 0.0, %v1778
      %v1780 = vpop.f32.mrb[0].mxu0
      %v1781 = vpop.f32.mrb[0].mxu0
      %v1782 = vadd.f32 0.0, %v1781
      %v1783 = vpop.f32.mrb[0].mxu0
      %1784 = vmatprep.mubr.bf16.mxu0 0
      %1785 = vmatmul.mubr.bf16.gmra.mrb[0].mxu0 %v1706
      %v1786 = vpop.f32.mrb[0].mxu0
      %v1787 = vadd.f32 0.0, %v1786
      %v1788 = vpop.f32.mrb[0].mxu0
      %v1789 = vpop.f32.mrb[0].mxu0
      %v1790 = vadd.f32 0.0, %v1789
      %v1791 = vpop.f32.mrb[0].mxu0
      %1792 = vmatprep.mubr.bf16.mxu0 0
      %1793 = vmatmul.mubr.bf16.gmra.mrb[0].mxu0 %v1709
      %v1794 = vpop.f32.mrb[0].mxu0
      %v1795 = vadd.f32 0.0, %v1794
      %v1796 = vpop.f32.mrb[0].mxu0
      %v1797 = vpop.f32.mrb[0].mxu0
      %v1798 = vadd.f32 0.0, %v1797
      %v1799 = vpop.f32.mrb[0].mxu0
      %1800 = vmatprep.mubr.bf16.mxu0 0
      %1801 = vmatmul.mubr.bf16.gmra.mrb[0].mxu0 %v1712
      %v1802 = vpop.f32.mrb[0].mxu0
      %v1803 = vadd.f32 0.0, %v1802
      %v1804 = vpop.f32.mrb[0].mxu0
      %v1805 = vpop.f32.mrb[0].mxu0
      %v1806 = vadd.f32 0.0, %v1805
      %v1807 = vpop.f32.mrb[0].mxu0
      %1808 = vmatprep.mubr.bf16.mxu0 0
      %1809 = vmatmul.mubr.bf16.gmra.mrb[0].mxu0 %v1715
      %v1810 = vpop.f32.mrb[0].mxu0
      %v1811 = vadd.f32 0.0, %v1810
      %v1812 = vpop.f32.mrb[0].mxu0
      %v1813 = vpop.f32.mrb[0].mxu0
      %v1814 = vadd.f32 0.0, %v1813
      %v1815 = vpop.f32.mrb[0].mxu0
      %1816 = vdwg.mxu0
      %v1817 = vadd.f32 %v1651, %v1755
      %v1818 = vadd.f32 %v1652, %v1758
      %v1819 = vadd.f32 %v1653, %v1763
      %v1820 = vadd.f32 %v1654, %v1766
      %v1821 = vadd.f32 %v1655, %v1771
      %v1822 = vadd.f32 %v1656, %v1774
      %v1823 = vadd.f32 %v1657, %v1779
      %v1824 = vadd.f32 %v1658, %v1782
      %v1825 = vadd.f32 %v1659, %v1787
      %v1826 = vadd.f32 %v1660, %v1790
      %v1827 = vadd.f32 %v1661, %v1795
      %v1828 = vadd.f32 %v1662, %v1798
      %v1829 = vadd.f32 %v1663, %v1803
      %v1830 = vadd.f32 %v1664, %v1806
      %v1831 = vadd.f32 %v1665, %v1811
      %v1832 = vadd.f32 %v1666, %v1814
      %1833 = vst.msk [vmem:[%s231] sm:$0xff] %vm315, %v1817
      %1834 = vst.msk [vmem:[%s231 + $0x8] sm:$0xff] %vm315, %v1818
      %1835 = vst.msk [vmem:[%s231 + $0x10] sm:$0xff] %vm315, %v1819
      %1836 = vst.msk [vmem:[%s231 + $0x18] sm:$0xff] %vm315, %v1820
      %1837 = vst.msk [vmem:[%s231 + $0x20] sm:$0xff] %vm315, %v1821
      %1838 = vst.msk [vmem:[%s231 + $0x28] sm:$0xff] %vm315, %v1822
      %1839 = vst.msk [vmem:[%s231 + $0x30] sm:$0xff] %vm315, %v1823
      %1840 = vst.msk [vmem:[%s231 + $0x38] sm:$0xff] %vm315, %v1824
      %1841 = vst.msk [vmem:[%s231 + $0x40] sm:$0xff] %vm315, %v1825
      %1842 = vst.msk [vmem:[%s231 + $0x48] sm:$0xff] %vm315, %v1826
      %1843 = vst.msk [vmem:[%s231 + $0x50] sm:$0xff] %vm315, %v1827
      %1844 = vst.msk [vmem:[%s231 + $0x58] sm:$0xff] %vm315, %v1828
      %1845 = vst.msk [vmem:[%s231 + $0x60] sm:$0xff] %vm315, %v1829
      %1846 = vst.msk [vmem:[%s231 + $0x68] sm:$0xff] %vm315, %v1830
      %1847 = vst.msk [vmem:[%s231 + $0x70] sm:$0xff] %vm315, %v1831
      %1848 = vst.msk [vmem:[%s231 + $0x78] sm:$0xff] %vm315, %v1832
      %v1849 = vsel %vm315, %v1817, 0.0
      %v1850 = vsel %vm315, %v1818, 0.0
      %v1851 = vadd.f32 %v1849, %v1850
      %v1852 = vsel %vm315, %v1819, 0.0
      %v1853 = vadd.f32 %v1851, %v1852
      %v1854 = vsel %vm315, %v1820, 0.0
      %v1855 = vadd.f32 %v1853, %v1854
      %v1856 = vsel %vm315, %v1821, 0.0
      %v1857 = vadd.f32 %v1855, %v1856
      %v1858 = vsel %vm315, %v1822, 0.0
      %v1859 = vadd.f32 %v1857, %v1858
      %v1860 = vsel %vm315, %v1823, 0.0
      %v1861 = vadd.f32 %v1859, %v1860
      %v1862 = vsel %vm315, %v1824, 0.0
      %v1863 = vadd.f32 %v1861, %v1862
      %v1864 = vsel %vm315, %v1825, 0.0
      %v1865 = vadd.f32 %v1863, %v1864
      %v1866 = vsel %vm315, %v1826, 0.0
      %v1867 = vadd.f32 %v1865, %v1866
      %v1868 = vsel %vm315, %v1827, 0.0
      %v1869 = vadd.f32 %v1867, %v1868
      %v1870 = vsel %vm315, %v1828, 0.0
      %v1871 = vadd.f32 %v1869, %v1870
      %v1872 = vsel %vm315, %v1829, 0.0
      %v1873 = vadd.f32 %v1871, %v1872
      %v1874 = vsel %vm315, %v1830, 0.0
      %v1875 = vadd.f32 %v1873, %v1874
      %v1876 = vsel %vm315, %v1831, 0.0
      %v1877 = vadd.f32 %v1875, %v1876
      %v1878 = vsel %vm315, %v1832, 0.0
      %v1879 = vadd.f32 %v1877, %v1878
      %v1880 = vrot.slane %v1879, 4
      %v1881 = vadd.f32 %v1879, %v1880
      %v1882 = vrot.slane %v1881, 2
      %v1883 = vadd.f32 %v1881, %v1882
      %v1884 = vrot.slane %v1883, 1
      %v1885 = vadd.f32 %v1883, %v1884
      %vm1886 = vcmask 57344
      %1887 = vst.msk [vmem:[%s235] sm:$0x1] %vm1886, %v1885
      %v1888 = vmul.f32 %v1817, %v1817
      %v1889 = vmul.f32 %v1818, %v1818
      %v1890 = vmul.f32 %v1819, %v1819
      %v1891 = vmul.f32 %v1820, %v1820
      %v1892 = vmul.f32 %v1821, %v1821
      %v1893 = vmul.f32 %v1822, %v1822
      %v1894 = vmul.f32 %v1823, %v1823
      %v1895 = vmul.f32 %v1824, %v1824
      %v1896 = vmul.f32 %v1825, %v1825
      %v1897 = vmul.f32 %v1826, %v1826
      %v1898 = vmul.f32 %v1827, %v1827
      %v1899 = vmul.f32 %v1828, %v1828
      %v1900 = vmul.f32 %v1829, %v1829
      %v1901 = vmul.f32 %v1830, %v1830
      %v1902 = vmul.f32 %v1831, %v1831
      %v1903 = vmul.f32 %v1832, %v1832
      %v1904 = vsel %vm315, %v1888, 0.0
      %v1905 = vsel %vm315, %v1889, 0.0
      %v1906 = vadd.f32 %v1904, %v1905
      %v1907 = vsel %vm315, %v1890, 0.0
      %v1908 = vadd.f32 %v1906, %v1907
      %v1909 = vsel %vm315, %v1891, 0.0
      %v1910 = vadd.f32 %v1908, %v1909
      %v1911 = vsel %vm315, %v1892, 0.0
      %v1912 = vadd.f32 %v1910, %v1911
      %v1913 = vsel %vm315, %v1893, 0.0
      %v1914 = vadd.f32 %v1912, %v1913
      %v1915 = vsel %vm315, %v1894, 0.0
      %v1916 = vadd.f32 %v1914, %v1915
      %v1917 = vsel %vm315, %v1895, 0.0
      %v1918 = vadd.f32 %v1916, %v1917
      %v1919 = vsel %vm315, %v1896, 0.0
      %v1920 = vadd.f32 %v1918, %v1919
      %v1921 = vsel %vm315, %v1897, 0.0
      %v1922 = vadd.f32 %v1920, %v1921
      %v1923 = vsel %vm315, %v1898, 0.0
      %v1924 = vadd.f32 %v1922, %v1923
      %v1925 = vsel %vm315, %v1899, 0.0
      %v1926 = vadd.f32 %v1924, %v1925
      %v1927 = vsel %vm315, %v1900, 0.0
      %v1928 = vadd.f32 %v1926, %v1927
      %v1929 = vsel %vm315, %v1901, 0.0
      %v1930 = vadd.f32 %v1928, %v1929
      %v1931 = vsel %vm315, %v1902, 0.0
      %v1932 = vadd.f32 %v1930, %v1931
      %v1933 = vsel %vm315, %v1903, 0.0
      %v1934 = vadd.f32 %v1932, %v1933
      %v1935 = vrot.slane %v1934, 4
      %v1936 = vadd.f32 %v1934, %v1935
      %v1937 = vrot.slane %v1936, 2
      %v1938 = vadd.f32 %v1936, %v1937
      %v1939 = vrot.slane %v1938, 1
      %v1940 = vadd.f32 %v1938, %v1939
      %1941 = vst.msk [vmem:[%s235 + $0x1] sm:$0x1] %vm1886, %v1940
      %p1942 = scmp.lt.s32.totalorder %s17, 1
      %s1943 = scalar_select %p1942, %s17, 1
      %s1944 = smul.addr %s1943, 16
      %s1945 = smul.addr %s1944, 8
      %s1946 = scalar_lea.vmem %s4, %s1945
      %p1947 = scmp.lt.s32.totalorder %s17, 1
      %s1948 = scalar_select %p1947, %s17, 1
      %s1949 = smul.addr %s1948, 2
      %s1950 = scalar_lea.vmem %s5, %s1949
      // Predicated region
      $region37: #{basic_block_forward.4} parent=35 // pred_check
        %p1951 = pneg %p124
      $region38: #{basic_block_forward.4} parent=35 // pred_check_branch
        %1953 = sbr.rel (%p1951) target = $region40
      $region39: #{basic_block_forward.4} parent=35 // pred_region
        _
      $region40: #{basic_block_forward.4} parent=35 // pred_fallthru
        _
      // Predicated region
      $region41: #{basic_block_forward.4} parent=35 // pred_check
        %p1954 = pneg %p150
      $region42: #{basic_block_forward.4} parent=35 // pred_check_branch
        %1956 = sbr.rel (%p1954) target = $region44
      $region43: #{basic_block_forward.4} parent=35 // pred_region
        _
      $region44: #{basic_block_forward.4} parent=35 // pred_fallthru
        _
    $region36: #{basic_block_forward.4} parent=5 // pred_fallthru
      _
    %p1957 = scmp.le.s32.totalorder 2, %s12
    // Predicated region
    $region45: #{basic_block_forward.4} parent=5 // pred_check
      %p1958 = pneg %p1957
    $region46: #{basic_block_forward.4} parent=5 // pred_check_branch
      %1960 = sbr.rel (%p1958) target = $region48
    $region47: #{basic_block_forward.4} parent=5 // pred_region
      %s1961 = ssub.s32 %s12, 2
      // Predicated region
      $region49: #{basic_block_forward.4} parent=47 // pred_check
        %p1962 = pneg %p130
      $region50: #{basic_block_forward.4} parent=47 // pred_check_branch
        %1964 = sbr.rel (%p1962) target = $region52
      $region51: #{basic_block_forward.4} parent=47 // pred_region
        %p1965 = scmp.lt.s32.totalorder %s18, 1
        %s1966 = scalar_select %p1965, %s18, 1
        %s1967 = smul.addr %s1966, 16
        %s1968 = smul.addr %s1967, 8
        %s1969 = scalar_lea.vmem %s4, %s1968
      $region52: #{basic_block_forward.4} parent=47 // pred_fallthru
        _
      // Predicated region
      $region53: #{basic_block_forward.4} parent=47 // pred_check
        %p1970 = pneg %p156
      $region54: #{basic_block_forward.4} parent=47 // pred_check_branch
        %1972 = sbr.rel (%p1970) target = $region56
      $region55: #{basic_block_forward.4} parent=47 // pred_region
        %p1973 = scmp.lt.s32.totalorder %s18, 1
        %s1974 = scalar_select %p1973, %s18, 1
        %s1975 = smul.addr %s1974, 2
        %s1976 = scalar_lea.vmem %s5, %s1975
      $region56: #{basic_block_forward.4} parent=47 // pred_fallthru
        _
    $region48: #{basic_block_forward.4} parent=5 // pred_fallthru
      _
  $region6: #{basic_block_forward.4} parent=0 // loop_footer
    %s16 = sadd.s32 1, %s12
  $region7: #{basic_block_forward.4} parent=0 // loop_footer_branch
    %11 = sbr.rel target = $region3
  $region8: #{basic_block_forward.4} parent=0 // loop_exit
    _

</llo_original>
